<compile_context>
chip_gen: v7x
topology: tpu7x:2x2x1
jax: 0.10.0
libtpu: 0.0.40
codegen_flags: <defaults>
</compile_context>

<pallas_src>
import math
import functools

import jax
import jax.numpy as jnp
from jax.experimental import pallas as pl
from jax.experimental.pallas import tpu as pltpu

KSIZE = 7
PAD = 3
BN_EPS = 1e-5


def _round_up(n, m):
    return ((n + m - 1) // m) * m


def _vmem_limit(nbytes):
    # Explicit scoped-VMEM sizing (defaults are 16 MiB on v5e, 32 MiB on v6e/v7x).
    # Capped at 48 MiB so the same number stays safe on v7x's 64 MiB physical VMEM.
    return int(min(max(nbytes, 4 << 20), 48 << 20))


# ----------------------------- in-kernel exact GELU -----------------------------
def _erf(x):
    # Abramowitz & Stegun 7.1.26 erf (|err| < 1.5e-7): VPU polynomial + EUP exp.
    # The divide is an approx reciprocal so it also rides the EUP slot (matters on v5e).
    a1, a2, a3, a4, a5 = 0.254829592, -0.284496736, 1.421413741, -1.453152027, 1.061405429
    p = 0.3275911
    sgn = jnp.where(x >= 0.0, 1.0, -1.0)
    ax = jnp.abs(x)
    t = pl.reciprocal(1.0 + p * ax, approx=True)
    poly = ((((a5 * t + a4) * t + a3) * t + a2) * t + a1) * t
    return sgn * (1.0 - poly * jnp.exp(-ax * ax))


def _gelu_exact(x):
    return 0.5 * x * (1.0 + _erf(x * (1.0 / math.sqrt(2.0))))


# ------------------- fused im2col conv (+GELU) + BN scale/shift -------------------
def _conv_kernel(*refs, taps, c_in, l_out, apply_gelu, has_scale):
    if has_scale:
        w_ref, x_ref, scale_ref, bias_ref, o_ref, patch_ref = refs
    else:
        w_ref, x_ref, bias_ref, o_ref, patch_ref = refs
        scale_ref = None
    # In-VMEM im2col: the 49 taps are contiguous shifted windows of the flat,
    # halo-padded input plane (static slices -> no HBM amplification).
    for t, s in enumerate(taps):
        patch_ref[t * c_in:(t + 1) * c_in, :] = x_ref[:, s:s + l_out]
    # One deep matmul: (Cout, 49*C) @ (49*C, H*Wp) -> f32; pixel dim is the lane axis.
    acc = jnp.dot(w_ref[...], patch_ref[...], preferred_element_type=jnp.float32)
    if apply_gelu:
        acc = _gelu_exact(acc)
    if has_scale:
        acc = acc * scale_ref[...]
    o_ref[...] = (acc + bias_ref[...]).astype(o_ref.dtype)


def _padded_row_width(h, w):
    # Smallest row stride >= W + 2*PAD such that H * Wp is a multiple of 128
    # (lane-dense output planes for any H, W).
    need = w + 2 * PAD
    g = 128 // math.gcd(h, 128)
    return _round_up(need, g)


def fused_conv(x, w2d, bias, scale=None, *, apply_gelu, out_dtype):
    """7x7 / pad-3 conv + optional exact GELU + per-channel scale/shift.

    x: (B, C, H, W); w2d: (Cout, 49*C) bf16 with K ordered (kh, kw, c);
    bias / scale: (Cout, 1) f32.  Returns (B, Cout, H, W) in out_dtype.
    """
    b, c, h, w = x.shape
    cout, k = w2d.shape
    assert k == c * KSIZE * KSIZE

    wp = _padded_row_width(h, w)           # padded row stride (output garbage cols cropped)
    hp = h + 2 * PAD
    lout = h * wp                           # pixels per plane, multiple of 128
    lpad = _round_up(hp * wp + 2 * PAD, 128)

    # Halo padding: PAD rows top/bottom, PAD cols left, (wp-w-PAD) cols right, then
    # flatten and pad the tail so every shifted window stays in bounds.
    xp = jnp.pad(x.astype(jnp.bfloat16),
                 ((0, 0), (0, 0), (PAD, PAD), (PAD, wp - w - PAD)))
    xf = jnp.pad(xp.reshape(b, c, hp * wp), ((0, 0), (0, 0), (0, lpad - hp * wp)))

    taps = tuple(kh * wp + kw for kh in range(KSIZE) for kw in range(KSIZE))
    has_scale = scale is not None
    kernel = functools.partial(_conv_kernel, taps=taps, c_in=c, l_out=lout,
                               apply_gelu=apply_gelu, has_scale=has_scale)

    in_specs = [pl.BlockSpec((cout, k), lambda bi: (0, 0)),
                pl.BlockSpec((None, c, lpad), lambda bi: (bi, 0, 0))]
    args = [w2d, xf]
    if has_scale:
        in_specs.append(pl.BlockSpec((cout, 1), lambda bi: (0, 0)))
        args.append(scale)
    in_specs.append(pl.BlockSpec((cout, 1), lambda bi: (0, 0)))
    args.append(bias)

    out_bpe = jnp.dtype(out_dtype).itemsize
    vmem = _vmem_limit(
        2 * (cout * k * 2 + c * lpad * 2 + 2 * cout * 4 + cout * lout * out_bpe)
        + k * lout * 2 + (2 << 20))

    out = pl.pallas_call(
        kernel,
        out_shape=jax.ShapeDtypeStruct((b, cout, lout), out_dtype),
        grid_spec=pltpu.PrefetchScalarGridSpec(
            num_scalar_prefetch=0,
            grid=(b,),
            in_specs=in_specs,
            out_specs=pl.BlockSpec((None, cout, lout), lambda bi: (bi, 0, 0)),
            scratch_shapes=[pltpu.VMEM((k, lout), jnp.bfloat16)]),
        compiler_params=pltpu.CompilerParams(
            dimension_semantics=("parallel",),
            vmem_limit_bytes=vmem),
    )(*args)
    # Crop the padded-row layout back to (B, Cout, H, W) -- a single small HBM pass,
    # vastly cheaper than the old 49x im2col patch materialization.
    return out.reshape(b, cout, h, wp)[:, :, :, :w]


# --------------------- attention (scores / softmax / scale) kernel ---------------
def _attn_kernel(q_ref, kt_ref, v_ref, o_ref):
    # 1/scale and BN1 are folded into the qkv conv; softmax math stays in f32.
    q = q_ref[...].astype(jnp.float32)
    kt = kt_ref[...].astype(jnp.float32)
    s = q * kt
    s = s - jnp.max(s, axis=-1, keepdims=True)
    e = jnp.exp(s)
    inv_den = pl.reciprocal(jnp.sum(e, axis=-1, keepdims=True), approx=True)  # EUP
    o_ref[...] = (e * inv_den * v_ref[...].astype(jnp.float32)).astype(o_ref.dtype)


def _pick_attn_block(bc, plane_bytes, target_bytes=1 << 20):
    # VMEM-budget-derived block: ~1 MiB per input block, preferring an even number of
    # grid steps so v7x's two TensorCores both get work.
    max_blk = max(1, target_bytes // max(plane_bytes, 1))
    divisors = [d for d in range(1, bc + 1) if bc % d == 0 and d <= max_blk] or [1]
    even = [d for d in divisors if (bc // d) % 2 == 0]
    return max(even) if even else max(divisors)


def attention_elementwise(q, kt, v):
    """q, kt, v: (B*C, H, W) bf16 -> (B*C, H, W) bf16 (feeds the bf16 proj-conv taps)."""
    bc, h, w = q.shape
    blk = _pick_attn_block(bc, h * w * q.dtype.itemsize)
    steps = bc // blk
    in_bytes = blk * h * w * q.dtype.itemsize
    vmem = _vmem_limit(2 * (3 * in_bytes + blk * h * w * 2) + (1 << 20))
    spec = pl.BlockSpec((blk, h, w), lambda i: (i, 0, 0))
    # TODO(synk): lane-sparse when W < 128; pack 128//W rows per lane row for production.
    return pl.pallas_call(
        _attn_kernel,
        out_shape=jax.ShapeDtypeStruct((bc, h, w), jnp.bfloat16),
        grid_spec=pltpu.PrefetchScalarGridSpec(
            num_scalar_prefetch=0,
            grid=(steps,),
            in_specs=[spec, spec, spec],
            out_specs=pl.BlockSpec((blk, h, w), lambda i: (i, 0, 0))),
        compiler_params=pltpu.CompilerParams(
            dimension_semantics=("parallel",),
            vmem_limit_bytes=vmem),
    )(q, kt, v)


# ------------------------------------ glue ---------------------------------------
def multihead_attention_forward(x, w_qkv, bn1_scale, bn1_bias, ff, scale,
                                w_proj, bn2_scale, bn2_bias):
    b, c, h, w = x.shape
    assert h == w, "q * k.transpose(-1,-2) broadcasting requires square spatial dims"
    c3 = w_qkv.shape[0]
    cc = c3 // 3
    cout = w_proj.shape[0]

    # qkv = BatchNorm(Conv2d(x)): BN scale folded into the weight rows (conv is linear,
    # no nonlinearity before BN1) and 1/softmax-scale folded into the q rows, so the
    # kernel epilogue is a single bias add and the attention kernel has no scale mul.
    qmul = jnp.concatenate([jnp.full((cc, 1), 1.0 / scale, jnp.float32),
                            jnp.ones((2 * cc, 1), jnp.float32)], axis=0)
    w1 = (w_qkv.transpose(0, 2, 3, 1).reshape(c3, -1) * bn1_scale * qmul).astype(jnp.bfloat16)
    b1 = bn1_bias * qmul
    qkv = fused_conv(x, w1, b1, apply_gelu=False, out_dtype=jnp.bfloat16)   # (B,3C,H,W) bf16

    q = qkv[:, :cc]
    # TODO(synk): move the k spatial transpose into the attention kernel (idle XLU slot).
    kt = jnp.swapaxes(qkv[:, cc:2 * cc], -1, -2)
    v = qkv[:, 2 * cc:]

    # attention: softmax(q * k^T / scale) * v   (focusing_factor folded into proj conv,
    # dropout(p=0) == Identity).
    z = attention_elementwise(q.reshape(b * cc, h, w),
                              kt.reshape(b * cc, h, w),
                              v.reshape(b * cc, h, w))
    z = z.reshape(b, cc, h, w)

    # proj = BatchNorm(GELU(Conv2d(ff * z))) == BatchNorm(GELU(Conv_{ff*W}(z)))
    w2 = (w_proj.transpose(0, 2, 3, 1).reshape(cout, -1) * ff[0, 0]).astype(jnp.bfloat16)
    return fused_conv(z, w2, bn2_bias, scale=bn2_scale,
                      apply_gelu=True, out_dtype=jnp.float32)


# ------------------------------ pure-JAX reference -------------------------------
def reference_forward(x, w_qkv, bn1_scale, bn1_bias, ff, scale, w_proj, bn2_scale, bn2_bias):
    def conv(xx, wgt):
        return jax.lax.conv_general_dilated(
            xx, wgt, window_strides=(1, 1), padding=[(PAD, PAD), (PAD, PAD)],
            dimension_numbers=("NCHW", "OIHW", "NCHW"),
            precision=jax.lax.Precision.HIGHEST)
    qkv = conv(x, w_qkv) * bn1_scale.reshape(1, -1, 1, 1) + bn1_bias.reshape(1, -1, 1, 1)
    q, k, v = jnp.split(qkv, 3, axis=1)
    s = q * jnp.swapaxes(k, -1, -2) / scale
    attn = jax.nn.softmax(s, axis=-1)
    o = attn * ff[0, 0] * v
    o = conv(o, w_proj)
    o = jax.nn.gelu(o, approximate=False)
    return o * bn2_scale.reshape(1, -1, 1, 1) + bn2_bias.reshape(1, -1, 1, 1)


if __name__ == "__main__":
    # in_channels must equal out_channels for `proj` to consume the attention output.
    B, C, H, W = 2, 16, 16, 16
    num_heads = 8
    head_dim = C // num_heads
    scale = math.sqrt(head_dim)

    key = jax.random.PRNGKey(0)
    kx, kq, kp = jax.random.split(key, 3)
    x = jax.random.normal(kx, (B, C, H, W), dtype=jnp.float32)

    # Conv weights: trunc_normal_(std=0.02) approximated by normal * 0.02 (deterministic).
    w_qkv = 0.02 * jax.random.normal(kq, (3 * C, C, KSIZE, KSIZE), dtype=jnp.float32)
    w_proj = 0.02 * jax.random.normal(kp, (C, C, KSIZE, KSIZE), dtype=jnp.float32)

    # BatchNorm2d (eval mode) with module-default stats: gamma=1, beta=0, mean=0, var=1,
    # folded into per-channel scale/shift laid out (Cout, 1) to broadcast over pixels.
    def bn_fold(channels):
        gamma = jnp.ones((channels,), jnp.float32)
        beta = jnp.zeros((channels,), jnp.float32)
        mean = jnp.zeros((channels,), jnp.float32)
        var = jnp.ones((channels,), jnp.float32)
        s = gamma / jnp.sqrt(var + BN_EPS)
        return s.reshape(-1, 1), (beta - mean * s).reshape(-1, 1)

    bn1_scale, bn1_bias = bn_fold(3 * C)
    bn2_scale, bn2_bias = bn_fold(C)

    # focusing_factor: module __init__ sets it to 0 (making the output trivially zero);
    # use a deterministic nonzero value so the full compute path is exercised.
    ff = jnp.full((1, 1), 0.5, dtype=jnp.float32)

    out = multihead_attention_forward(x, w_qkv, bn1_scale, bn1_bias, ff, scale,
                                      w_proj, bn2_scale, bn2_bias)
    out = jax.block_until_ready(out)

    ref = reference_forward(x, w_qkv, bn1_scale, bn1_bias, ff, scale,
                            w_proj, bn2_scale, bn2_bias)
    assert out.shape == (B, C, H, W), out.shape
    max_err = float(jnp.max(jnp.abs(out - ref)))
    # bf16 MXU operands + bf16 qkv intermediate (f32 accumulation / softmax / epilogue):
    # expected error ~ a few e-4 at these magnitudes.
    assert jnp.allclose(out, ref, atol=2e-3, rtol=2e-2), f"max abs err = {max_err}"
    print("KERNEL_OK")
</pallas_src>

<mosaic_0001>
module attributes {stable_mosaic.version = 11 : i64} {
  func.func @_conv_kernel(%arg0: i32, %arg1: memref<48x784xbf16, #tpu.memory_space<vmem>>, %arg2: memref<1x16x640xbf16, #tpu.memory_space<vmem>>, %arg3: memref<48x1xf32, #tpu.memory_space<vmem>>, %arg4: memref<1x48x384xbf16, #tpu.memory_space<vmem>>, %arg5: memref<784x384xbf16, #tpu.memory_space<vmem>>) attributes {dimension_semantics = [#tpu.dimension_semantics<parallel>], iteration_bounds = array<i64: 2>, scalar_prefetch = 0 : i64, scratch_operands = 1 : i64, tpu.core_type = #tpu.core_type<tc>, window_params = [{pipeline_mode = #tpu.pipeline_mode<synchronous>, transform_indices = @transform_0, window_bounds = array<i64: 48, 784>}, {transform_indices = @transform_1, window_bounds = array<i64: 1, 16, 640>}, {pipeline_mode = #tpu.pipeline_mode<synchronous>, transform_indices = @transform_2, window_bounds = array<i64: 48, 1>}, {transform_indices = @transform_3, window_bounds = array<i64: 1, 48, 384>}]} {
    %c0 = arith.constant 0 : index
    %c0_0 = arith.constant 0 : index
    %c0_1 = arith.constant 0 : index
    %0 = vector.load %arg2[%c0, %c0_0, %c0_1] : memref<1x16x640xbf16, #tpu.memory_space<vmem>>, vector<1x16x384xbf16>
    %1 = vector.shape_cast %0 : vector<1x16x384xbf16> to vector<16x384xbf16>
    %c0_2 = arith.constant 0 : index
    %c0_3 = arith.constant 0 : index
    %2 = vector.load %arg5[%c0_2, %c0_3] : memref<784x384xbf16, #tpu.memory_space<vmem>>, vector<16x384xbf16>
    tpu.vector_store %arg5[%c0_2, %c0_3], %1 {strides = array<i32>} : memref<784x384xbf16, #tpu.memory_space<vmem>>, vector<16x384xbf16>,
    %c0_4 = arith.constant 0 : index
    %c0_5 = arith.constant 0 : index
    %c1 = arith.constant 1 : index
    %3 = vector.load %arg2[%c0_4, %c0_5, %c1] : memref<1x16x640xbf16, #tpu.memory_space<vmem>>, vector<1x16x384xbf16>
    %4 = vector.shape_cast %3 : vector<1x16x384xbf16> to vector<16x384xbf16>
    %c16 = arith.constant 16 : index
    %c0_6 = arith.constant 0 : index
    %5 = vector.load %arg5[%c16, %c0_6] : memref<784x384xbf16, #tpu.memory_space<vmem>>, vector<16x384xbf16>
    tpu.vector_store %arg5[%c16, %c0_6], %4 {strides = array<i32>} : memref<784x384xbf16, #tpu.memory_space<vmem>>, vector<16x384xbf16>,
    %c0_7 = arith.constant 0 : index
    %c0_8 = arith.constant 0 : index
    %c2 = arith.constant 2 : index
    %6 = vector.load %arg2[%c0_7, %c0_8, %c2] : memref<1x16x640xbf16, #tpu.memory_space<vmem>>, vector<1x16x384xbf16>
    %7 = vector.shape_cast %6 : vector<1x16x384xbf16> to vector<16x384xbf16>
    %c32 = arith.constant 32 : index
    %c0_9 = arith.constant 0 : index
    %8 = vector.load %arg5[%c32, %c0_9] : memref<784x384xbf16, #tpu.memory_space<vmem>>, vector<16x384xbf16>
    tpu.vector_store %arg5[%c32, %c0_9], %7 {strides = array<i32>} : memref<784x384xbf16, #tpu.memory_space<vmem>>, vector<16x384xbf16>,
    %c0_10 = arith.constant 0 : index
    %c0_11 = arith.constant 0 : index
    %c3 = arith.constant 3 : index
    %9 = vector.load %arg2[%c0_10, %c0_11, %c3] : memref<1x16x640xbf16, #tpu.memory_space<vmem>>, vector<1x16x384xbf16>
    %10 = vector.shape_cast %9 : vector<1x16x384xbf16> to vector<16x384xbf16>
    %c48 = arith.constant 48 : index
    %c0_12 = arith.constant 0 : index
    %11 = vector.load %arg5[%c48, %c0_12] : memref<784x384xbf16, #tpu.memory_space<vmem>>, vector<16x384xbf16>
    tpu.vector_store %arg5[%c48, %c0_12], %10 {strides = array<i32>} : memref<784x384xbf16, #tpu.memory_space<vmem>>, vector<16x384xbf16>,
    %c0_13 = arith.constant 0 : index
    %c0_14 = arith.constant 0 : index
    %c4 = arith.constant 4 : index
    %12 = vector.load %arg2[%c0_13, %c0_14, %c4] : memref<1x16x640xbf16, #tpu.memory_space<vmem>>, vector<1x16x384xbf16>
    %13 = vector.shape_cast %12 : vector<1x16x384xbf16> to vector<16x384xbf16>
    %c64 = arith.constant 64 : index
    %c0_15 = arith.constant 0 : index
    %14 = vector.load %arg5[%c64, %c0_15] : memref<784x384xbf16, #tpu.memory_space<vmem>>, vector<16x384xbf16>
    tpu.vector_store %arg5[%c64, %c0_15], %13 {strides = array<i32>} : memref<784x384xbf16, #tpu.memory_space<vmem>>, vector<16x384xbf16>,
    %c0_16 = arith.constant 0 : index
    %c0_17 = arith.constant 0 : index
    %c5 = arith.constant 5 : index
    %15 = vector.load %arg2[%c0_16, %c0_17, %c5] : memref<1x16x640xbf16, #tpu.memory_space<vmem>>, vector<1x16x384xbf16>
    %16 = vector.shape_cast %15 : vector<1x16x384xbf16> to vector<16x384xbf16>
    %c80 = arith.constant 80 : index
    %c0_18 = arith.constant 0 : index
    %17 = vector.load %arg5[%c80, %c0_18] : memref<784x384xbf16, #tpu.memory_space<vmem>>, vector<16x384xbf16>
    tpu.vector_store %arg5[%c80, %c0_18], %16 {strides = array<i32>} : memref<784x384xbf16, #tpu.memory_space<vmem>>, vector<16x384xbf16>,
    %c0_19 = arith.constant 0 : index
    %c0_20 = arith.constant 0 : index
    %c6 = arith.constant 6 : index
    %18 = vector.load %arg2[%c0_19, %c0_20, %c6] : memref<1x16x640xbf16, #tpu.memory_space<vmem>>, vector<1x16x384xbf16>
    %19 = vector.shape_cast %18 : vector<1x16x384xbf16> to vector<16x384xbf16>
    %c96 = arith.constant 96 : index
    %c0_21 = arith.constant 0 : index
    %20 = vector.load %arg5[%c96, %c0_21] : memref<784x384xbf16, #tpu.memory_space<vmem>>, vector<16x384xbf16>
    tpu.vector_store %arg5[%c96, %c0_21], %19 {strides = array<i32>} : memref<784x384xbf16, #tpu.memory_space<vmem>>, vector<16x384xbf16>,
    %c0_22 = arith.constant 0 : index
    %c0_23 = arith.constant 0 : index
    %c24 = arith.constant 24 : index
    %21 = vector.load %arg2[%c0_22, %c0_23, %c24] : memref<1x16x640xbf16, #tpu.memory_space<vmem>>, vector<1x16x384xbf16>
    %22 = vector.shape_cast %21 : vector<1x16x384xbf16> to vector<16x384xbf16>
    %c112 = arith.constant 112 : index
    %c0_24 = arith.constant 0 : index
    %23 = vector.load %arg5[%c112, %c0_24] : memref<784x384xbf16, #tpu.memory_space<vmem>>, vector<16x384xbf16>
    tpu.vector_store %arg5[%c112, %c0_24], %22 {strides = array<i32>} : memref<784x384xbf16, #tpu.memory_space<vmem>>, vector<16x384xbf16>,
    %c0_25 = arith.constant 0 : index
    %c0_26 = arith.constant 0 : index
    %c25 = arith.constant 25 : index
    %24 = vector.load %arg2[%c0_25, %c0_26, %c25] : memref<1x16x640xbf16, #tpu.memory_space<vmem>>, vector<1x16x384xbf16>
    %25 = vector.shape_cast %24 : vector<1x16x384xbf16> to vector<16x384xbf16>
    %c128 = arith.constant 128 : index
    %c0_27 = arith.constant 0 : index
    %26 = vector.load %arg5[%c128, %c0_27] : memref<784x384xbf16, #tpu.memory_space<vmem>>, vector<16x384xbf16>
    tpu.vector_store %arg5[%c128, %c0_27], %25 {strides = array<i32>} : memref<784x384xbf16, #tpu.memory_space<vmem>>, vector<16x384xbf16>,
    %c0_28 = arith.constant 0 : index
    %c0_29 = arith.constant 0 : index
    %c26 = arith.constant 26 : index
    %27 = vector.load %arg2[%c0_28, %c0_29, %c26] : memref<1x16x640xbf16, #tpu.memory_space<vmem>>, vector<1x16x384xbf16>
    %28 = vector.shape_cast %27 : vector<1x16x384xbf16> to vector<16x384xbf16>
    %c144 = arith.constant 144 : index
    %c0_30 = arith.constant 0 : index
    %29 = vector.load %arg5[%c144, %c0_30] : memref<784x384xbf16, #tpu.memory_space<vmem>>, vector<16x384xbf16>
    tpu.vector_store %arg5[%c144, %c0_30], %28 {strides = array<i32>} : memref<784x384xbf16, #tpu.memory_space<vmem>>, vector<16x384xbf16>,
    %c0_31 = arith.constant 0 : index
    %c0_32 = arith.constant 0 : index
    %c27 = arith.constant 27 : index
    %30 = vector.load %arg2[%c0_31, %c0_32, %c27] : memref<1x16x640xbf16, #tpu.memory_space<vmem>>, vector<1x16x384xbf16>
    %31 = vector.shape_cast %30 : vector<1x16x384xbf16> to vector<16x384xbf16>
    %c160 = arith.constant 160 : index
    %c0_33 = arith.constant 0 : index
    %32 = vector.load %arg5[%c160, %c0_33] : memref<784x384xbf16, #tpu.memory_space<vmem>>, vector<16x384xbf16>
    tpu.vector_store %arg5[%c160, %c0_33], %31 {strides = array<i32>} : memref<784x384xbf16, #tpu.memory_space<vmem>>, vector<16x384xbf16>,
    %c0_34 = arith.constant 0 : index
    %c0_35 = arith.constant 0 : index
    %c28 = arith.constant 28 : index
    %33 = vector.load %arg2[%c0_34, %c0_35, %c28] : memref<1x16x640xbf16, #tpu.memory_space<vmem>>, vector<1x16x384xbf16>
    %34 = vector.shape_cast %33 : vector<1x16x384xbf16> to vector<16x384xbf16>
    %c176 = arith.constant 176 : index
    %c0_36 = arith.constant 0 : index
    %35 = vector.load %arg5[%c176, %c0_36] : memref<784x384xbf16, #tpu.memory_space<vmem>>, vector<16x384xbf16>
    tpu.vector_store %arg5[%c176, %c0_36], %34 {strides = array<i32>} : memref<784x384xbf16, #tpu.memory_space<vmem>>, vector<16x384xbf16>,
    %c0_37 = arith.constant 0 : index
    %c0_38 = arith.constant 0 : index
    %c29 = arith.constant 29 : index
    %36 = vector.load %arg2[%c0_37, %c0_38, %c29] : memref<1x16x640xbf16, #tpu.memory_space<vmem>>, vector<1x16x384xbf16>
    %37 = vector.shape_cast %36 : vector<1x16x384xbf16> to vector<16x384xbf16>
    %c192 = arith.constant 192 : index
    %c0_39 = arith.constant 0 : index
    %38 = vector.load %arg5[%c192, %c0_39] : memref<784x384xbf16, #tpu.memory_space<vmem>>, vector<16x384xbf16>
    tpu.vector_store %arg5[%c192, %c0_39], %37 {strides = array<i32>} : memref<784x384xbf16, #tpu.memory_space<vmem>>, vector<16x384xbf16>,
    %c0_40 = arith.constant 0 : index
    %c0_41 = arith.constant 0 : index
    %c30 = arith.constant 30 : index
    %39 = vector.load %arg2[%c0_40, %c0_41, %c30] : memref<1x16x640xbf16, #tpu.memory_space<vmem>>, vector<1x16x384xbf16>
    %40 = vector.shape_cast %39 : vector<1x16x384xbf16> to vector<16x384xbf16>
    %c208 = arith.constant 208 : index
    %c0_42 = arith.constant 0 : index
    %41 = vector.load %arg5[%c208, %c0_42] : memref<784x384xbf16, #tpu.memory_space<vmem>>, vector<16x384xbf16>
    tpu.vector_store %arg5[%c208, %c0_42], %40 {strides = array<i32>} : memref<784x384xbf16, #tpu.memory_space<vmem>>, vector<16x384xbf16>,
    %c0_43 = arith.constant 0 : index
    %c0_44 = arith.constant 0 : index
    %c48_45 = arith.constant 48 : index
    %42 = vector.load %arg2[%c0_43, %c0_44, %c48_45] : memref<1x16x640xbf16, #tpu.memory_space<vmem>>, vector<1x16x384xbf16>
    %43 = vector.shape_cast %42 : vector<1x16x384xbf16> to vector<16x384xbf16>
    %c224 = arith.constant 224 : index
    %c0_46 = arith.constant 0 : index
    %44 = vector.load %arg5[%c224, %c0_46] : memref<784x384xbf16, #tpu.memory_space<vmem>>, vector<16x384xbf16>
    tpu.vector_store %arg5[%c224, %c0_46], %43 {strides = array<i32>} : memref<784x384xbf16, #tpu.memory_space<vmem>>, vector<16x384xbf16>,
    %c0_47 = arith.constant 0 : index
    %c0_48 = arith.constant 0 : index
    %c49 = arith.constant 49 : index
    %45 = vector.load %arg2[%c0_47, %c0_48, %c49] : memref<1x16x640xbf16, #tpu.memory_space<vmem>>, vector<1x16x384xbf16>
    %46 = vector.shape_cast %45 : vector<1x16x384xbf16> to vector<16x384xbf16>
    %c240 = arith.constant 240 : index
    %c0_49 = arith.constant 0 : index
    %47 = vector.load %arg5[%c240, %c0_49] : memref<784x384xbf16, #tpu.memory_space<vmem>>, vector<16x384xbf16>
    tpu.vector_store %arg5[%c240, %c0_49], %46 {strides = array<i32>} : memref<784x384xbf16, #tpu.memory_space<vmem>>, vector<16x384xbf16>,
    %c0_50 = arith.constant 0 : index
    %c0_51 = arith.constant 0 : index
    %c50 = arith.constant 50 : index
    %48 = vector.load %arg2[%c0_50, %c0_51, %c50] : memref<1x16x640xbf16, #tpu.memory_space<vmem>>, vector<1x16x384xbf16>
    %49 = vector.shape_cast %48 : vector<1x16x384xbf16> to vector<16x384xbf16>
    %c256 = arith.constant 256 : index
    %c0_52 = arith.constant 0 : index
    %50 = vector.load %arg5[%c256, %c0_52] : memref<784x384xbf16, #tpu.memory_space<vmem>>, vector<16x384xbf16>
    tpu.vector_store %arg5[%c256, %c0_52], %49 {strides = array<i32>} : memref<784x384xbf16, #tpu.memory_space<vmem>>, vector<16x384xbf16>,
    %c0_53 = arith.constant 0 : index
    %c0_54 = arith.constant 0 : index
    %c51 = arith.constant 51 : index
    %51 = vector.load %arg2[%c0_53, %c0_54, %c51] : memref<1x16x640xbf16, #tpu.memory_space<vmem>>, vector<1x16x384xbf16>
    %52 = vector.shape_cast %51 : vector<1x16x384xbf16> to vector<16x384xbf16>
    %c272 = arith.constant 272 : index
    %c0_55 = arith.constant 0 : index
    %53 = vector.load %arg5[%c272, %c0_55] : memref<784x384xbf16, #tpu.memory_space<vmem>>, vector<16x384xbf16>
    tpu.vector_store %arg5[%c272, %c0_55], %52 {strides = array<i32>} : memref<784x384xbf16, #tpu.memory_space<vmem>>, vector<16x384xbf16>,
    %c0_56 = arith.constant 0 : index
    %c0_57 = arith.constant 0 : index
    %c52 = arith.constant 52 : index
    %54 = vector.load %arg2[%c0_56, %c0_57, %c52] : memref<1x16x640xbf16, #tpu.memory_space<vmem>>, vector<1x16x384xbf16>
    %55 = vector.shape_cast %54 : vector<1x16x384xbf16> to vector<16x384xbf16>
    %c288 = arith.constant 288 : index
    %c0_58 = arith.constant 0 : index
    %56 = vector.load %arg5[%c288, %c0_58] : memref<784x384xbf16, #tpu.memory_space<vmem>>, vector<16x384xbf16>
    tpu.vector_store %arg5[%c288, %c0_58], %55 {strides = array<i32>} : memref<784x384xbf16, #tpu.memory_space<vmem>>, vector<16x384xbf16>,
    %c0_59 = arith.constant 0 : index
    %c0_60 = arith.constant 0 : index
    %c53 = arith.constant 53 : index
    %57 = vector.load %arg2[%c0_59, %c0_60, %c53] : memref<1x16x640xbf16, #tpu.memory_space<vmem>>, vector<1x16x384xbf16>
    %58 = vector.shape_cast %57 : vector<1x16x384xbf16> to vector<16x384xbf16>
    %c304 = arith.constant 304 : index
    %c0_61 = arith.constant 0 : index
    %59 = vector.load %arg5[%c304, %c0_61] : memref<784x384xbf16, #tpu.memory_space<vmem>>, vector<16x384xbf16>
    tpu.vector_store %arg5[%c304, %c0_61], %58 {strides = array<i32>} : memref<784x384xbf16, #tpu.memory_space<vmem>>, vector<16x384xbf16>,
    %c0_62 = arith.constant 0 : index
    %c0_63 = arith.constant 0 : index
    %c54 = arith.constant 54 : index
    %60 = vector.load %arg2[%c0_62, %c0_63, %c54] : memref<1x16x640xbf16, #tpu.memory_space<vmem>>, vector<1x16x384xbf16>
    %61 = vector.shape_cast %60 : vector<1x16x384xbf16> to vector<16x384xbf16>
    %c320 = arith.constant 320 : index
    %c0_64 = arith.constant 0 : index
    %62 = vector.load %arg5[%c320, %c0_64] : memref<784x384xbf16, #tpu.memory_space<vmem>>, vector<16x384xbf16>
    tpu.vector_store %arg5[%c320, %c0_64], %61 {strides = array<i32>} : memref<784x384xbf16, #tpu.memory_space<vmem>>, vector<16x384xbf16>,
    %c0_65 = arith.constant 0 : index
    %c0_66 = arith.constant 0 : index
    %c72 = arith.constant 72 : index
    %63 = vector.load %arg2[%c0_65, %c0_66, %c72] : memref<1x16x640xbf16, #tpu.memory_space<vmem>>, vector<1x16x384xbf16>
    %64 = vector.shape_cast %63 : vector<1x16x384xbf16> to vector<16x384xbf16>
    %c336 = arith.constant 336 : index
    %c0_67 = arith.constant 0 : index
    %65 = vector.load %arg5[%c336, %c0_67] : memref<784x384xbf16, #tpu.memory_space<vmem>>, vector<16x384xbf16>
    tpu.vector_store %arg5[%c336, %c0_67], %64 {strides = array<i32>} : memref<784x384xbf16, #tpu.memory_space<vmem>>, vector<16x384xbf16>,
    %c0_68 = arith.constant 0 : index
    %c0_69 = arith.constant 0 : index
    %c73 = arith.constant 73 : index
    %66 = vector.load %arg2[%c0_68, %c0_69, %c73] : memref<1x16x640xbf16, #tpu.memory_space<vmem>>, vector<1x16x384xbf16>
    %67 = vector.shape_cast %66 : vector<1x16x384xbf16> to vector<16x384xbf16>
    %c352 = arith.constant 352 : index
    %c0_70 = arith.constant 0 : index
    %68 = vector.load %arg5[%c352, %c0_70] : memref<784x384xbf16, #tpu.memory_space<vmem>>, vector<16x384xbf16>
    tpu.vector_store %arg5[%c352, %c0_70], %67 {strides = array<i32>} : memref<784x384xbf16, #tpu.memory_space<vmem>>, vector<16x384xbf16>,
    %c0_71 = arith.constant 0 : index
    %c0_72 = arith.constant 0 : index
    %c74 = arith.constant 74 : index
    %69 = vector.load %arg2[%c0_71, %c0_72, %c74] : memref<1x16x640xbf16, #tpu.memory_space<vmem>>, vector<1x16x384xbf16>
    %70 = vector.shape_cast %69 : vector<1x16x384xbf16> to vector<16x384xbf16>
    %c368 = arith.constant 368 : index
    %c0_73 = arith.constant 0 : index
    %71 = vector.load %arg5[%c368, %c0_73] : memref<784x384xbf16, #tpu.memory_space<vmem>>, vector<16x384xbf16>
    tpu.vector_store %arg5[%c368, %c0_73], %70 {strides = array<i32>} : memref<784x384xbf16, #tpu.memory_space<vmem>>, vector<16x384xbf16>,
    %c0_74 = arith.constant 0 : index
    %c0_75 = arith.constant 0 : index
    %c75 = arith.constant 75 : index
    %72 = vector.load %arg2[%c0_74, %c0_75, %c75] : memref<1x16x640xbf16, #tpu.memory_space<vmem>>, vector<1x16x384xbf16>
    %73 = vector.shape_cast %72 : vector<1x16x384xbf16> to vector<16x384xbf16>
    %c384 = arith.constant 384 : index
    %c0_76 = arith.constant 0 : index
    %74 = vector.load %arg5[%c384, %c0_76] : memref<784x384xbf16, #tpu.memory_space<vmem>>, vector<16x384xbf16>
    tpu.vector_store %arg5[%c384, %c0_76], %73 {strides = array<i32>} : memref<784x384xbf16, #tpu.memory_space<vmem>>, vector<16x384xbf16>,
    %c0_77 = arith.constant 0 : index
    %c0_78 = arith.constant 0 : index
    %c76 = arith.constant 76 : index
    %75 = vector.load %arg2[%c0_77, %c0_78, %c76] : memref<1x16x640xbf16, #tpu.memory_space<vmem>>, vector<1x16x384xbf16>
    %76 = vector.shape_cast %75 : vector<1x16x384xbf16> to vector<16x384xbf16>
    %c400 = arith.constant 400 : index
    %c0_79 = arith.constant 0 : index
    %77 = vector.load %arg5[%c400, %c0_79] : memref<784x384xbf16, #tpu.memory_space<vmem>>, vector<16x384xbf16>
    tpu.vector_store %arg5[%c400, %c0_79], %76 {strides = array<i32>} : memref<784x384xbf16, #tpu.memory_space<vmem>>, vector<16x384xbf16>,
    %c0_80 = arith.constant 0 : index
    %c0_81 = arith.constant 0 : index
    %c77 = arith.constant 77 : index
    %78 = vector.load %arg2[%c0_80, %c0_81, %c77] : memref<1x16x640xbf16, #tpu.memory_space<vmem>>, vector<1x16x384xbf16>
    %79 = vector.shape_cast %78 : vector<1x16x384xbf16> to vector<16x384xbf16>
    %c416 = arith.constant 416 : index
    %c0_82 = arith.constant 0 : index
    %80 = vector.load %arg5[%c416, %c0_82] : memref<784x384xbf16, #tpu.memory_space<vmem>>, vector<16x384xbf16>
    tpu.vector_store %arg5[%c416, %c0_82], %79 {strides = array<i32>} : memref<784x384xbf16, #tpu.memory_space<vmem>>, vector<16x384xbf16>,
    %c0_83 = arith.constant 0 : index
    %c0_84 = arith.constant 0 : index
    %c78 = arith.constant 78 : index
    %81 = vector.load %arg2[%c0_83, %c0_84, %c78] : memref<1x16x640xbf16, #tpu.memory_space<vmem>>, vector<1x16x384xbf16>
    %82 = vector.shape_cast %81 : vector<1x16x384xbf16> to vector<16x384xbf16>
    %c432 = arith.constant 432 : index
    %c0_85 = arith.constant 0 : index
    %83 = vector.load %arg5[%c432, %c0_85] : memref<784x384xbf16, #tpu.memory_space<vmem>>, vector<16x384xbf16>
    tpu.vector_store %arg5[%c432, %c0_85], %82 {strides = array<i32>} : memref<784x384xbf16, #tpu.memory_space<vmem>>, vector<16x384xbf16>,
    %c0_86 = arith.constant 0 : index
    %c0_87 = arith.constant 0 : index
    %c96_88 = arith.constant 96 : index
    %84 = vector.load %arg2[%c0_86, %c0_87, %c96_88] : memref<1x16x640xbf16, #tpu.memory_space<vmem>>, vector<1x16x384xbf16>
    %85 = vector.shape_cast %84 : vector<1x16x384xbf16> to vector<16x384xbf16>
    %c448 = arith.constant 448 : index
    %c0_89 = arith.constant 0 : index
    %86 = vector.load %arg5[%c448, %c0_89] : memref<784x384xbf16, #tpu.memory_space<vmem>>, vector<16x384xbf16>
    tpu.vector_store %arg5[%c448, %c0_89], %85 {strides = array<i32>} : memref<784x384xbf16, #tpu.memory_space<vmem>>, vector<16x384xbf16>,
    %c0_90 = arith.constant 0 : index
    %c0_91 = arith.constant 0 : index
    %c97 = arith.constant 97 : index
    %87 = vector.load %arg2[%c0_90, %c0_91, %c97] : memref<1x16x640xbf16, #tpu.memory_space<vmem>>, vector<1x16x384xbf16>
    %88 = vector.shape_cast %87 : vector<1x16x384xbf16> to vector<16x384xbf16>
    %c464 = arith.constant 464 : index
    %c0_92 = arith.constant 0 : index
    %89 = vector.load %arg5[%c464, %c0_92] : memref<784x384xbf16, #tpu.memory_space<vmem>>, vector<16x384xbf16>
    tpu.vector_store %arg5[%c464, %c0_92], %88 {strides = array<i32>} : memref<784x384xbf16, #tpu.memory_space<vmem>>, vector<16x384xbf16>,
    %c0_93 = arith.constant 0 : index
    %c0_94 = arith.constant 0 : index
    %c98 = arith.constant 98 : index
    %90 = vector.load %arg2[%c0_93, %c0_94, %c98] : memref<1x16x640xbf16, #tpu.memory_space<vmem>>, vector<1x16x384xbf16>
    %91 = vector.shape_cast %90 : vector<1x16x384xbf16> to vector<16x384xbf16>
    %c480 = arith.constant 480 : index
    %c0_95 = arith.constant 0 : index
    %92 = vector.load %arg5[%c480, %c0_95] : memref<784x384xbf16, #tpu.memory_space<vmem>>, vector<16x384xbf16>
    tpu.vector_store %arg5[%c480, %c0_95], %91 {strides = array<i32>} : memref<784x384xbf16, #tpu.memory_space<vmem>>, vector<16x384xbf16>,
    %c0_96 = arith.constant 0 : index
    %c0_97 = arith.constant 0 : index
    %c99 = arith.constant 99 : index
    %93 = vector.load %arg2[%c0_96, %c0_97, %c99] : memref<1x16x640xbf16, #tpu.memory_space<vmem>>, vector<1x16x384xbf16>
    %94 = vector.shape_cast %93 : vector<1x16x384xbf16> to vector<16x384xbf16>
    %c496 = arith.constant 496 : index
    %c0_98 = arith.constant 0 : index
    %95 = vector.load %arg5[%c496, %c0_98] : memref<784x384xbf16, #tpu.memory_space<vmem>>, vector<16x384xbf16>
    tpu.vector_store %arg5[%c496, %c0_98], %94 {strides = array<i32>} : memref<784x384xbf16, #tpu.memory_space<vmem>>, vector<16x384xbf16>,
    %c0_99 = arith.constant 0 : index
    %c0_100 = arith.constant 0 : index
    %c100 = arith.constant 100 : index
    %96 = vector.load %arg2[%c0_99, %c0_100, %c100] : memref<1x16x640xbf16, #tpu.memory_space<vmem>>, vector<1x16x384xbf16>
    %97 = vector.shape_cast %96 : vector<1x16x384xbf16> to vector<16x384xbf16>
    %c512 = arith.constant 512 : index
    %c0_101 = arith.constant 0 : index
    %98 = vector.load %arg5[%c512, %c0_101] : memref<784x384xbf16, #tpu.memory_space<vmem>>, vector<16x384xbf16>
    tpu.vector_store %arg5[%c512, %c0_101], %97 {strides = array<i32>} : memref<784x384xbf16, #tpu.memory_space<vmem>>, vector<16x384xbf16>,
    %c0_102 = arith.constant 0 : index
    %c0_103 = arith.constant 0 : index
    %c101 = arith.constant 101 : index
    %99 = vector.load %arg2[%c0_102, %c0_103, %c101] : memref<1x16x640xbf16, #tpu.memory_space<vmem>>, vector<1x16x384xbf16>
    %100 = vector.shape_cast %99 : vector<1x16x384xbf16> to vector<16x384xbf16>
    %c528 = arith.constant 528 : index
    %c0_104 = arith.constant 0 : index
    %101 = vector.load %arg5[%c528, %c0_104] : memref<784x384xbf16, #tpu.memory_space<vmem>>, vector<16x384xbf16>
    tpu.vector_store %arg5[%c528, %c0_104], %100 {strides = array<i32>} : memref<784x384xbf16, #tpu.memory_space<vmem>>, vector<16x384xbf16>,
    %c0_105 = arith.constant 0 : index
    %c0_106 = arith.constant 0 : index
    %c102 = arith.constant 102 : index
    %102 = vector.load %arg2[%c0_105, %c0_106, %c102] : memref<1x16x640xbf16, #tpu.memory_space<vmem>>, vector<1x16x384xbf16>
    %103 = vector.shape_cast %102 : vector<1x16x384xbf16> to vector<16x384xbf16>
    %c544 = arith.constant 544 : index
    %c0_107 = arith.constant 0 : index
    %104 = vector.load %arg5[%c544, %c0_107] : memref<784x384xbf16, #tpu.memory_space<vmem>>, vector<16x384xbf16>
    tpu.vector_store %arg5[%c544, %c0_107], %103 {strides = array<i32>} : memref<784x384xbf16, #tpu.memory_space<vmem>>, vector<16x384xbf16>,
    %c0_108 = arith.constant 0 : index
    %c0_109 = arith.constant 0 : index
    %c120 = arith.constant 120 : index
    %105 = vector.load %arg2[%c0_108, %c0_109, %c120] : memref<1x16x640xbf16, #tpu.memory_space<vmem>>, vector<1x16x384xbf16>
    %106 = vector.shape_cast %105 : vector<1x16x384xbf16> to vector<16x384xbf16>
    %c560 = arith.constant 560 : index
    %c0_110 = arith.constant 0 : index
    %107 = vector.load %arg5[%c560, %c0_110] : memref<784x384xbf16, #tpu.memory_space<vmem>>, vector<16x384xbf16>
    tpu.vector_store %arg5[%c560, %c0_110], %106 {strides = array<i32>} : memref<784x384xbf16, #tpu.memory_space<vmem>>, vector<16x384xbf16>,
    %c0_111 = arith.constant 0 : index
    %c0_112 = arith.constant 0 : index
    %c121 = arith.constant 121 : index
    %108 = vector.load %arg2[%c0_111, %c0_112, %c121] : memref<1x16x640xbf16, #tpu.memory_space<vmem>>, vector<1x16x384xbf16>
    %109 = vector.shape_cast %108 : vector<1x16x384xbf16> to vector<16x384xbf16>
    %c576 = arith.constant 576 : index
    %c0_113 = arith.constant 0 : index
    %110 = vector.load %arg5[%c576, %c0_113] : memref<784x384xbf16, #tpu.memory_space<vmem>>, vector<16x384xbf16>
    tpu.vector_store %arg5[%c576, %c0_113], %109 {strides = array<i32>} : memref<784x384xbf16, #tpu.memory_space<vmem>>, vector<16x384xbf16>,
    %c0_114 = arith.constant 0 : index
    %c0_115 = arith.constant 0 : index
    %c122 = arith.constant 122 : index
    %111 = vector.load %arg2[%c0_114, %c0_115, %c122] : memref<1x16x640xbf16, #tpu.memory_space<vmem>>, vector<1x16x384xbf16>
    %112 = vector.shape_cast %111 : vector<1x16x384xbf16> to vector<16x384xbf16>
    %c592 = arith.constant 592 : index
    %c0_116 = arith.constant 0 : index
    %113 = vector.load %arg5[%c592, %c0_116] : memref<784x384xbf16, #tpu.memory_space<vmem>>, vector<16x384xbf16>
    tpu.vector_store %arg5[%c592, %c0_116], %112 {strides = array<i32>} : memref<784x384xbf16, #tpu.memory_space<vmem>>, vector<16x384xbf16>,
    %c0_117 = arith.constant 0 : index
    %c0_118 = arith.constant 0 : index
    %c123 = arith.constant 123 : index
    %114 = vector.load %arg2[%c0_117, %c0_118, %c123] : memref<1x16x640xbf16, #tpu.memory_space<vmem>>, vector<1x16x384xbf16>
    %115 = vector.shape_cast %114 : vector<1x16x384xbf16> to vector<16x384xbf16>
    %c608 = arith.constant 608 : index
    %c0_119 = arith.constant 0 : index
    %116 = vector.load %arg5[%c608, %c0_119] : memref<784x384xbf16, #tpu.memory_space<vmem>>, vector<16x384xbf16>
    tpu.vector_store %arg5[%c608, %c0_119], %115 {strides = array<i32>} : memref<784x384xbf16, #tpu.memory_space<vmem>>, vector<16x384xbf16>,
    %c0_120 = arith.constant 0 : index
    %c0_121 = arith.constant 0 : index
    %c124 = arith.constant 124 : index
    %117 = vector.load %arg2[%c0_120, %c0_121, %c124] : memref<1x16x640xbf16, #tpu.memory_space<vmem>>, vector<1x16x384xbf16>
    %118 = vector.shape_cast %117 : vector<1x16x384xbf16> to vector<16x384xbf16>
    %c624 = arith.constant 624 : index
    %c0_122 = arith.constant 0 : index
    %119 = vector.load %arg5[%c624, %c0_122] : memref<784x384xbf16, #tpu.memory_space<vmem>>, vector<16x384xbf16>
    tpu.vector_store %arg5[%c624, %c0_122], %118 {strides = array<i32>} : memref<784x384xbf16, #tpu.memory_space<vmem>>, vector<16x384xbf16>,
    %c0_123 = arith.constant 0 : index
    %c0_124 = arith.constant 0 : index
    %c125 = arith.constant 125 : index
    %120 = vector.load %arg2[%c0_123, %c0_124, %c125] : memref<1x16x640xbf16, #tpu.memory_space<vmem>>, vector<1x16x384xbf16>
    %121 = vector.shape_cast %120 : vector<1x16x384xbf16> to vector<16x384xbf16>
    %c640 = arith.constant 640 : index
    %c0_125 = arith.constant 0 : index
    %122 = vector.load %arg5[%c640, %c0_125] : memref<784x384xbf16, #tpu.memory_space<vmem>>, vector<16x384xbf16>
    tpu.vector_store %arg5[%c640, %c0_125], %121 {strides = array<i32>} : memref<784x384xbf16, #tpu.memory_space<vmem>>, vector<16x384xbf16>,
    %c0_126 = arith.constant 0 : index
    %c0_127 = arith.constant 0 : index
    %c126 = arith.constant 126 : index
    %123 = vector.load %arg2[%c0_126, %c0_127, %c126] : memref<1x16x640xbf16, #tpu.memory_space<vmem>>, vector<1x16x384xbf16>
    %124 = vector.shape_cast %123 : vector<1x16x384xbf16> to vector<16x384xbf16>
    %c656 = arith.constant 656 : index
    %c0_128 = arith.constant 0 : index
    %125 = vector.load %arg5[%c656, %c0_128] : memref<784x384xbf16, #tpu.memory_space<vmem>>, vector<16x384xbf16>
    tpu.vector_store %arg5[%c656, %c0_128], %124 {strides = array<i32>} : memref<784x384xbf16, #tpu.memory_space<vmem>>, vector<16x384xbf16>,
    %c0_129 = arith.constant 0 : index
    %c0_130 = arith.constant 0 : index
    %c144_131 = arith.constant 144 : index
    %126 = vector.load %arg2[%c0_129, %c0_130, %c144_131] : memref<1x16x640xbf16, #tpu.memory_space<vmem>>, vector<1x16x384xbf16>
    %127 = vector.shape_cast %126 : vector<1x16x384xbf16> to vector<16x384xbf16>
    %c672 = arith.constant 672 : index
    %c0_132 = arith.constant 0 : index
    %128 = vector.load %arg5[%c672, %c0_132] : memref<784x384xbf16, #tpu.memory_space<vmem>>, vector<16x384xbf16>
    tpu.vector_store %arg5[%c672, %c0_132], %127 {strides = array<i32>} : memref<784x384xbf16, #tpu.memory_space<vmem>>, vector<16x384xbf16>,
    %c0_133 = arith.constant 0 : index
    %c0_134 = arith.constant 0 : index
    %c145 = arith.constant 145 : index
    %129 = vector.load %arg2[%c0_133, %c0_134, %c145] : memref<1x16x640xbf16, #tpu.memory_space<vmem>>, vector<1x16x384xbf16>
    %130 = vector.shape_cast %129 : vector<1x16x384xbf16> to vector<16x384xbf16>
    %c688 = arith.constant 688 : index
    %c0_135 = arith.constant 0 : index
    %131 = vector.load %arg5[%c688, %c0_135] : memref<784x384xbf16, #tpu.memory_space<vmem>>, vector<16x384xbf16>
    tpu.vector_store %arg5[%c688, %c0_135], %130 {strides = array<i32>} : memref<784x384xbf16, #tpu.memory_space<vmem>>, vector<16x384xbf16>,
    %c0_136 = arith.constant 0 : index
    %c0_137 = arith.constant 0 : index
    %c146 = arith.constant 146 : index
    %132 = vector.load %arg2[%c0_136, %c0_137, %c146] : memref<1x16x640xbf16, #tpu.memory_space<vmem>>, vector<1x16x384xbf16>
    %133 = vector.shape_cast %132 : vector<1x16x384xbf16> to vector<16x384xbf16>
    %c704 = arith.constant 704 : index
    %c0_138 = arith.constant 0 : index
    %134 = vector.load %arg5[%c704, %c0_138] : memref<784x384xbf16, #tpu.memory_space<vmem>>, vector<16x384xbf16>
    tpu.vector_store %arg5[%c704, %c0_138], %133 {strides = array<i32>} : memref<784x384xbf16, #tpu.memory_space<vmem>>, vector<16x384xbf16>,
    %c0_139 = arith.constant 0 : index
    %c0_140 = arith.constant 0 : index
    %c147 = arith.constant 147 : index
    %135 = vector.load %arg2[%c0_139, %c0_140, %c147] : memref<1x16x640xbf16, #tpu.memory_space<vmem>>, vector<1x16x384xbf16>
    %136 = vector.shape_cast %135 : vector<1x16x384xbf16> to vector<16x384xbf16>
    %c720 = arith.constant 720 : index
    %c0_141 = arith.constant 0 : index
    %137 = vector.load %arg5[%c720, %c0_141] : memref<784x384xbf16, #tpu.memory_space<vmem>>, vector<16x384xbf16>
    tpu.vector_store %arg5[%c720, %c0_141], %136 {strides = array<i32>} : memref<784x384xbf16, #tpu.memory_space<vmem>>, vector<16x384xbf16>,
    %c0_142 = arith.constant 0 : index
    %c0_143 = arith.constant 0 : index
    %c148 = arith.constant 148 : index
    %138 = vector.load %arg2[%c0_142, %c0_143, %c148] : memref<1x16x640xbf16, #tpu.memory_space<vmem>>, vector<1x16x384xbf16>
    %139 = vector.shape_cast %138 : vector<1x16x384xbf16> to vector<16x384xbf16>
    %c736 = arith.constant 736 : index
    %c0_144 = arith.constant 0 : index
    %140 = vector.load %arg5[%c736, %c0_144] : memref<784x384xbf16, #tpu.memory_space<vmem>>, vector<16x384xbf16>
    tpu.vector_store %arg5[%c736, %c0_144], %139 {strides = array<i32>} : memref<784x384xbf16, #tpu.memory_space<vmem>>, vector<16x384xbf16>,
    %c0_145 = arith.constant 0 : index
    %c0_146 = arith.constant 0 : index
    %c149 = arith.constant 149 : index
    %141 = vector.load %arg2[%c0_145, %c0_146, %c149] : memref<1x16x640xbf16, #tpu.memory_space<vmem>>, vector<1x16x384xbf16>
    %142 = vector.shape_cast %141 : vector<1x16x384xbf16> to vector<16x384xbf16>
    %c752 = arith.constant 752 : index
    %c0_147 = arith.constant 0 : index
    %143 = vector.load %arg5[%c752, %c0_147] : memref<784x384xbf16, #tpu.memory_space<vmem>>, vector<16x384xbf16>
    tpu.vector_store %arg5[%c752, %c0_147], %142 {strides = array<i32>} : memref<784x384xbf16, #tpu.memory_space<vmem>>, vector<16x384xbf16>,
    %c0_148 = arith.constant 0 : index
    %c0_149 = arith.constant 0 : index
    %c150 = arith.constant 150 : index
    %144 = vector.load %arg2[%c0_148, %c0_149, %c150] : memref<1x16x640xbf16, #tpu.memory_space<vmem>>, vector<1x16x384xbf16>
    %145 = vector.shape_cast %144 : vector<1x16x384xbf16> to vector<16x384xbf16>
    %c768 = arith.constant 768 : index
    %c0_150 = arith.constant 0 : index
    %146 = vector.load %arg5[%c768, %c0_150] : memref<784x384xbf16, #tpu.memory_space<vmem>>, vector<16x384xbf16>
    tpu.vector_store %arg5[%c768, %c0_150], %145 {strides = array<i32>} : memref<784x384xbf16, #tpu.memory_space<vmem>>, vector<16x384xbf16>,
    %c0_151 = arith.constant 0 : index
    %c0_152 = arith.constant 0 : index
    %147 = vector.load %arg1[%c0_151, %c0_152] : memref<48x784xbf16, #tpu.memory_space<vmem>>, vector<48x784xbf16>
    %c0_153 = arith.constant 0 : index
    %c0_154 = arith.constant 0 : index
    %148 = vector.load %arg5[%c0_153, %c0_154] : memref<784x384xbf16, #tpu.memory_space<vmem>>, vector<784x384xbf16>
    %cst = arith.constant dense<0.000000e+00> : vector<48x384xf32>
    %149 = tpu.matmul %147, %148, %cst {dimension_numbers = #tpu.dot_dimension_numbers<[1], [0], [0], [1], [0, 0, 1, 1], [], []>} : vector<48x784xbf16>, vector<784x384xbf16>, vector<48x384xf32> -> vector<48x384xf32>
    %c0_155 = arith.constant 0 : index
    %c0_156 = arith.constant 0 : index
    %150 = vector.load %arg3[%c0_155, %c0_156] : memref<48x1xf32, #tpu.memory_space<vmem>>, vector<48x1xf32>
    %151 = vector.broadcast %150 : vector<48x1xf32> to vector<48x384xf32>
    %152 = arith.addf %149, %151 : vector<48x384xf32>
    %153 = arith.truncf %152 : vector<48x384xf32> to vector<48x384xbf16>
    %c0_157 = arith.constant 0 : index
    %c0_158 = arith.constant 0 : index
    %c0_159 = arith.constant 0 : index
    %154 = vector.load %arg4[%c0_157, %c0_158, %c0_159] : memref<1x48x384xbf16, #tpu.memory_space<vmem>>, vector<1x48x384xbf16>
    %155 = vector.shape_cast %154 : vector<1x48x384xbf16> to vector<48x384xbf16>
    %156 = vector.shape_cast %153 : vector<48x384xbf16> to vector<1x48x384xbf16>
    tpu.vector_store %arg4[%c0_157, %c0_158, %c0_159], %156 {strides = array<i32>} : memref<1x48x384xbf16, #tpu.memory_space<vmem>>, vector<1x48x384xbf16>,
    return
  }
  func.func @transform_0(%arg0: i32) -> (i32, i32) {
    %c0_i32 = arith.constant 0 : i32
    %c0_i32_0 = arith.constant 0 : i32
    %c0_i32_1 = arith.constant 0 : i32
    return %c0_i32, %c0_i32_0 : i32, i32
  }
  func.func @transform_1(%arg0: i32) -> (i32, i32, i32) {
    %c0_i32 = arith.constant 0 : i32
    %c0_i32_0 = arith.constant 0 : i32
    %c0_i32_1 = arith.constant 0 : i32
    return %arg0, %c0_i32, %c0_i32_0 : i32, i32, i32
  }
  func.func @transform_2(%arg0: i32) -> (i32, i32) {
    %c0_i32 = arith.constant 0 : i32
    %c0_i32_0 = arith.constant 0 : i32
    %c0_i32_1 = arith.constant 0 : i32
    return %c0_i32, %c0_i32_0 : i32, i32
  }
  func.func @transform_3(%arg0: i32) -> (i32, i32, i32) {
    %c0_i32 = arith.constant 0 : i32
    %c0_i32_0 = arith.constant 0 : i32
    %c0_i32_1 = arith.constant 0 : i32
    return %arg0, %c0_i32, %c0_i32_0 : i32, i32, i32
  }
}

</mosaic_0001>

<llo_original>
// kernel: tpu_custom_call.1
$region0: #{tpu_custom_call.1}
  #allocation0 [shape = 'u32[]', space=smem, size = 0x4, offset = 0x4, fixed_abs, tag = 'smem constant byte address 0x4 - core index']
  #allocation1 [shape = 'u32[144,128]{1,0:T(1,128)}', space=vmem, size = 0x12000, scoped, tag = 'internal scratch']
  #allocation2 [shape = 'bf16[784,384]{1,0:T(16,128)(2,1)}', space=vmem, size = 0x93000, scoped, tag = 'scratch operand']
  %s0 = inlined_call_operand.hbm [shape: bf16[48,784], index: 0, kind: input, shape index: {}]
  %s1 = inlined_call_operand.hbm [shape: bf16[2,16,640], index: 1, kind: input, shape index: {}]
  %s2 = inlined_call_operand.vmem [shape: f32[48,1], index: 2, kind: input, shape index: {}]
  %s3 = inlined_call_operand.hbm [shape: bf16[2,48,384], index: 3, kind: output, shape index: {}]
  %s4 = sld [smem:[#allocation0]]
  $region53: #{tpu_custom_call.1} parent=0
    _
  %s6 = ssub.s32 1, %s4
  %s7 = scalar_select 0, %s6, %s4
  $region1: #{tpu_custom_call.1} parent=0
    #allocation3 [shape = 'u8[86016]{0}', space=vmem, size = 0x15000, scoped, tag = 'input window, operand 0, single buffered']
    #allocation4 [shape = 's32[2]{0}', space=sflag, size = 0x8, scoped, tag = 'scoped memory for tpu_custom_call.1']
    #allocation5 [shape = 's32[2]{0}', space=sflag, size = 0x8, scoped, tag = 'scoped memory for tpu_custom_call.1']
    #allocation6 [shape = 'u8[40960]{0}', space=vmem, size = 0xa000, scoped, tag = 'input window, operand 1']
    #allocation7 [shape = 's32[2]{0}', space=sflag, size = 0x8, scoped, tag = 'scoped memory for tpu_custom_call.1']
    #allocation8 [shape = 'u8[73728]{0}', space=vmem, size = 0x12000, scoped, tag = 'output window, operand 0']
    %8 = vsyncpa [#allocation4], 0
    %9 = vsyncpa [#allocation7], 0
    %s10 = scalar_lea.sflag [#allocation7], 1
    %11 = vsyncpa %s10, 0
    %12 = vsyncpa [#allocation5], 0
    %s13 = scalar_lea.sflag [#allocation5], 1
    %14 = vsyncpa %s13, 0
    loop: start=0, step=1, limit=4
    $region2: #{tpu_custom_call.1} parent=1 // loop_pre_header
      _
    $region3: #{tpu_custom_call.1} parent=1 // loop_header
      %s16 = sphi 0, %s20
      %p17 = scmp.ge.s32.totalorder %s16, 4
      %s24 = sphi 0, %s24
      %s26 = sphi 0, %s24
      %s27 = sphi 0, %s26
      %s41 = sphi 0, %s27
      %s47 = sphi 0, %s49
      %s50 = sphi 0, %s47
      %s51 = sphi 0, %s50
      %s67 = sphi 0, %s51
      %s71 = sphi 0, %s71
      %s73 = sphi 0, %s71
      %s74 = sphi 0, %s73
      %s88 = sphi 0, %s74
      %s94 = sphi 0, %s96
      %s97 = sphi 0, %s94
      %s98 = sphi 0, %s97
      %s114 = sphi 0, %s98
    $region4: #{tpu_custom_call.1} parent=1 // loop_header_branch
      %19 = sbr.rel (%p17) target = $region8
    $region5: #{tpu_custom_call.1} parent=1 // loop_body
      %s21 = ssub.s32 %s16, 1
      %s22 = ssub.s32 %s16, 2
      %s23 = sadd.s32 %s16, 1
      %s25 = sadd.s32 %s24, 1
      %p28 = scmp.eq.s32.totalorder %s16, 1
      %p29 = scmp.ne.s32.totalorder %s24, %s26
      %p30 = scmp.eq.s32.totalorder %s16, 0
      %p31 = por %p29, %p30
      %p32 = scmp.ne.s32.totalorder %s24, %s26
      %p33 = scmp.eq.s32.totalorder %s21, 1
      %p34 = por %p32, %p33
      %p35 = scmp.ne.s32.totalorder %s26, %s27
      %p36 = scmp.eq.s32.totalorder %s21, 0
      %p37 = por %p35, %p36
      %p38 = scmp.ne.s32.totalorder %s26, %s27
      %p39 = scmp.eq.s32.totalorder %s22, 1
      %p40 = por %p38, %p39
      %p42 = scmp.ne.s32.totalorder %s27, %s41
      %p43 = scmp.eq.s32.totalorder %s22, 0
      %p44 = por %p42, %p43
      %s45 = ssub.s32 %s16, %s23
      %p46 = scmp.eq.s32.totalorder %s45, 0
      %s48 = sadd.s32 %s47, 1
      %s49 = scalar_select %p46, %s47, %s48
      %p52 = pneg %p46
      %p53 = scmp.eq.s32.totalorder %s16, 1
      %p54 = por %p52, %p53
      %p55 = scmp.ne.s32.totalorder %s47, %s50
      %p56 = scmp.eq.s32.totalorder %s16, 0
      %p57 = por %p55, %p56
      %p58 = scmp.ne.s32.totalorder %s47, %s50
      %p59 = scmp.eq.s32.totalorder %s21, 1
      %p60 = por %p58, %p59
      %p61 = scmp.ne.s32.totalorder %s50, %s51
      %p62 = scmp.eq.s32.totalorder %s21, 0
      %p63 = por %p61, %p62
      %p64 = scmp.ne.s32.totalorder %s50, %s51
      %p65 = scmp.eq.s32.totalorder %s22, 1
      %p66 = por %p64, %p65
      %p68 = scmp.ne.s32.totalorder %s51, %s67
      %p69 = scmp.eq.s32.totalorder %s22, 0
      %p70 = por %p68, %p69
      %s72 = sadd.s32 %s71, 1
      %p75 = scmp.eq.s32.totalorder %s16, 1
      %p76 = scmp.ne.s32.totalorder %s71, %s73
      %p77 = scmp.eq.s32.totalorder %s16, 0
      %p78 = por %p76, %p77
      %p79 = scmp.ne.s32.totalorder %s71, %s73
      %p80 = scmp.eq.s32.totalorder %s21, 1
      %p81 = por %p79, %p80
      %p82 = scmp.ne.s32.totalorder %s73, %s74
      %p83 = scmp.eq.s32.totalorder %s21, 0
      %p84 = por %p82, %p83
      %p85 = scmp.ne.s32.totalorder %s73, %s74
      %p86 = scmp.eq.s32.totalorder %s22, 1
      %p87 = por %p85, %p86
      %p89 = scmp.ne.s32.totalorder %s74, %s88
      %p90 = scmp.eq.s32.totalorder %s22, 0
      %p91 = por %p89, %p90
      %s92 = ssub.s32 %s16, %s23
      %p93 = scmp.eq.s32.totalorder %s92, 0
      %s95 = sadd.s32 %s94, 1
      %s96 = scalar_select %p93, %s94, %s95
      %p99 = pneg %p93
      %p100 = scmp.eq.s32.totalorder %s16, 1
      %p101 = por %p99, %p100
      %p102 = scmp.ne.s32.totalorder %s94, %s97
      %p103 = scmp.eq.s32.totalorder %s16, 0
      %p104 = por %p102, %p103
      %p105 = scmp.ne.s32.totalorder %s94, %s97
      %p106 = scmp.eq.s32.totalorder %s21, 1
      %p107 = por %p105, %p106
      %p108 = scmp.ne.s32.totalorder %s97, %s98
      %p109 = scmp.eq.s32.totalorder %s21, 0
      %p110 = por %p108, %p109
      %p111 = scmp.ne.s32.totalorder %s97, %s98
      %p112 = scmp.eq.s32.totalorder %s22, 1
      %p113 = por %p111, %p112
      %p115 = scmp.ne.s32.totalorder %s98, %s114
      %p116 = scmp.eq.s32.totalorder %s22, 0
      %p117 = por %p115, %p116
      %p118 = scmp.le.s32.totalorder 1, %s16
      %p119 = scmp.lt.s32.totalorder %s16, 3
      %p120 = pnand %p118, %p119
      %p121 = pneg %p120
      // Predicated region
      $region9: #{tpu_custom_call.1} parent=5 // pred_check
        _
      $region10: #{tpu_custom_call.1} parent=5 // pred_check_branch
        %123 = sbr.rel (%p120) target = $region12
      $region11: #{tpu_custom_call.1} parent=5 // pred_region
        %s124 = ssub.s32 %s16, 1
        // Predicated region
        $region13: #{tpu_custom_call.1} parent=11 // pred_check
          %p125 = pneg %p37
        $region14: #{tpu_custom_call.1} parent=11 // pred_check_branch
          %127 = sbr.rel (%p125) target = $region16
        $region15: #{tpu_custom_call.1} parent=11 // pred_region
          %s129 = ssub.s32 2688, 2688
          %130 = vsyncadd [#allocation4], %s129
          %s131 = sshll.u32 [#allocation3], 4
          %s132 = int_to_ptr.vmem [resolvable:$true] %s131
          %137 = dma.hbm_to_vmem [thread:$0]  %s0, 2688, %s132, [#allocation4], 448, 448, 28
        $region16: #{tpu_custom_call.1} parent=11 // pred_fallthru
          _
        // Predicated region
        $region17: #{tpu_custom_call.1} parent=11 // pred_check
          %p138 = pneg %p84
        $region18: #{tpu_custom_call.1} parent=11 // pred_check_branch
          %140 = sbr.rel (%p138) target = $region20
        $region19: #{tpu_custom_call.1} parent=11 // pred_region
          _
        $region20: #{tpu_custom_call.1} parent=11 // pred_fallthru
          _
      $region12: #{tpu_custom_call.1} parent=5 // pred_fallthru
        _
      %p141 = scmp.lt.s32.totalorder %s16, 2
      // Predicated region
      $region21: #{tpu_custom_call.1} parent=5 // pred_check
        %p142 = pneg %p141
      $region22: #{tpu_custom_call.1} parent=5 // pred_check_branch
        %144 = sbr.rel (%p142) target = $region24
      $region23: #{tpu_custom_call.1} parent=5 // pred_region
        // Predicated region
        $region25: #{tpu_custom_call.1} parent=23 // pred_check
          %p145 = pneg %p57
        $region26: #{tpu_custom_call.1} parent=23 // pred_check_branch
          %147 = sbr.rel (%p145) target = $region28
        $region27: #{tpu_custom_call.1} parent=23 // pred_region
          %s148 = sand.u32 %s47, 1
          %s149 = scalar_lea.sflag [#allocation7], %s148
          %s150 = sand.u32 %s47, 1
          %s151 = smul.addr %s150, 40
          %s152 = scalar_lea.vmem [#allocation6], %s151
          %s154 = ssub.s32 640, 640
          %155 = vsyncadd %s149, %s154
          %s156 = smul.addr %s16, 10
          %s157 = smul.addr %s156, 64
          %s158 = scalar_lea.hbm %s1, %s157
          %s159 = sshll.u32 %s152, 4
          %s160 = int_to_ptr.vmem [resolvable:$true] %s159
          %165 = dma.hbm_to_vmem [thread:$0]  %s158, 640, %s160, %s149, 320, 320, 20
        $region28: #{tpu_custom_call.1} parent=23 // pred_fallthru
          _
      $region24: #{tpu_custom_call.1} parent=5 // pred_fallthru
        _
      %p166 = scmp.le.s32.totalorder 1, %s16
      %p167 = scmp.lt.s32.totalorder %s16, 3
      %p168 = pnand %p166, %p167
      %p169 = pneg %p168
      // Predicated region
      $region29: #{tpu_custom_call.1} parent=5 // pred_check
        _
      $region30: #{tpu_custom_call.1} parent=5 // pred_check_branch
        %171 = sbr.rel (%p168) target = $region32
      $region31: #{tpu_custom_call.1} parent=5 // pred_region
        %s172 = ssub.s32 %s16, 1
        // Predicated region
        $region33: #{tpu_custom_call.1} parent=31 // pred_check
          %p173 = pneg %p37
        $region34: #{tpu_custom_call.1} parent=31 // pred_check_branch
          %175 = sbr.rel (%p173) target = $region36
        $region35: #{tpu_custom_call.1} parent=31 // pred_region
          %176 = dma.done [#allocation4], 2688
        $region36: #{tpu_custom_call.1} parent=31 // pred_fallthru
          _
        %s177 = sand.u32 %s50, 1
        %s178 = scalar_lea.sflag [#allocation7], %s177
        %s179 = sand.u32 %s50, 1
        %s180 = smul.addr %s179, 40
        %s181 = scalar_lea.vmem [#allocation6], %s180
        // Predicated region
        $region37: #{tpu_custom_call.1} parent=31 // pred_check
          %p182 = pneg %p63
        $region38: #{tpu_custom_call.1} parent=31 // pred_check_branch
          %184 = sbr.rel (%p182) target = $region40
        $region39: #{tpu_custom_call.1} parent=31 // pred_region
          %185 = dma.done %s178, 640
        $region40: #{tpu_custom_call.1} parent=31 // pred_fallthru
          _
        %p186 = pneg %p37
        %p187 = pneg %p34
        %s188 = sand.u32 %s50, 1
        %s189 = scalar_lea.sflag [#allocation7], %s188
        %s190 = sand.u32 %s50, 1
        %s191 = smul.addr %s190, 40
        %s192 = scalar_lea.vmem [#allocation6], %s191
        %p193 = pneg %p63
        %p194 = pneg %p60
        %p195 = pneg %p84
        %p196 = pneg %p81
        %p197 = pneg %p110
        %p198 = pneg %p107
        %s199 = sand.u32 %s97, 1
        %s200 = scalar_lea.sflag [#allocation5], %s199
        %s201 = sand.u32 %s97, 1
        %s202 = smul.addr %s201, 72
        %s203 = scalar_lea.vmem [#allocation8], %s202
        %v205 = vld [vmem:[%s181] sm:$0xff]
        %v206 = vld [vmem:[%s181 + $0x8] sm:$0xf]
        %v207 = vld [vmem:[%s181 + $0x14] sm:$0xff]
        %v208 = vld [vmem:[%s181 + $0x1c] sm:$0xf]
        %v213 = vunpack.c.l.b16 %v205
        %v214 = vunpack.c.h.b16 %v205
        %v215 = vunpack.c.l.b16 %v206
        %v216 = vunpack.c.l.b16 %v207
        %v217 = vunpack.c.h.b16 %v207
        %v218 = vunpack.c.l.b16 %v208
        %v219 = vpack.c.b16 %v216, %v213
        %v220 = vpack.c.b16 %v217, %v214
        %v221 = vpack.c.b16 %v218, %v215
        %225 = vst [vmem:[#allocation2] sm:$0xff] %v219
        %226 = vst [vmem:[#allocation2 + $0x8] sm:$0xff] %v220
        %227 = vst [vmem:[#allocation2 + $0x10] sm:$0xff] %v221
        %v228 = vld [vmem:[%s181] sm:$0xff]
        %v229 = vld [vmem:[%s181 + $0x8] sm:$0xff]
        %v230 = vld [vmem:[%s181 + $0x14] sm:$0xff]
        %v231 = vld [vmem:[%s181 + $0x1c] sm:$0xff]
        %v236 = vunpack.c.l.b16 %v228
        %v237 = vunpack.c.h.b16 %v228
        %v238 = vunpack.c.l.b16 %v229
        %v239 = vunpack.c.h.b16 %v229
        %v240 = vunpack.c.l.b16 %v230
        %v241 = vunpack.c.h.b16 %v230
        %v242 = vunpack.c.l.b16 %v231
        %v243 = vunpack.c.h.b16 %v231
        %v244 = vpack.c.b16 %v240, %v236
        %v245 = vpack.c.b16 %v241, %v237
        %v246 = vpack.c.b16 %v242, %v238
        %v247 = vpack.c.b16 %v243, %v239
        %248 = vrot.lane.b32.xlu0 %v244, 127
        %v249 = vpop.permute.xlu0 %248
        %250 = vrot.lane.b32.xlu0 %v245, 127
        %v251 = vpop.permute.xlu0 %250
        %252 = vrot.lane.b32.xlu0 %v246, 127
        %v253 = vpop.permute.xlu0 %252
        %254 = vrot.lane.b32.xlu0 %v247, 127
        %v255 = vpop.permute.xlu0 %254
        %vm256 = vcmask 1039360
        %v257 = vsel %vm256, %v249, %v251
        %v258 = vsel %vm256, %v251, %v253
        %v259 = vsel %vm256, %v253, %v255
        %263 = vst [vmem:[#allocation2 + $0x18] sm:$0xff] %v257
        %264 = vst [vmem:[#allocation2 + $0x20] sm:$0xff] %v258
        %265 = vst [vmem:[#allocation2 + $0x28] sm:$0xff] %v259
        %v266 = vld [vmem:[%s181] sm:$0xff]
        %v267 = vld [vmem:[%s181 + $0x8] sm:$0xff]
        %v268 = vld [vmem:[%s181 + $0x14] sm:$0xff]
        %v269 = vld [vmem:[%s181 + $0x1c] sm:$0xff]
        %v274 = vunpack.c.l.b16 %v266
        %v275 = vunpack.c.h.b16 %v266
        %v276 = vunpack.c.l.b16 %v267
        %v277 = vunpack.c.h.b16 %v267
        %v278 = vunpack.c.l.b16 %v268
        %v279 = vunpack.c.h.b16 %v268
        %v280 = vunpack.c.l.b16 %v269
        %v281 = vunpack.c.h.b16 %v269
        %v282 = vpack.c.b16 %v278, %v274
        %v283 = vpack.c.b16 %v279, %v275
        %v284 = vpack.c.b16 %v280, %v276
        %v285 = vpack.c.b16 %v281, %v277
        %286 = vrot.lane.b32.xlu0 %v282, 126
        %v287 = vpop.permute.xlu0 %286
        %288 = vrot.lane.b32.xlu0 %v283, 126
        %v289 = vpop.permute.xlu0 %288
        %290 = vrot.lane.b32.xlu0 %v284, 126
        %v291 = vpop.permute.xlu0 %290
        %292 = vrot.lane.b32.xlu0 %v285, 126
        %v293 = vpop.permute.xlu0 %292
        %vm294 = vcmask 1031168
        %v295 = vsel %vm294, %v287, %v289
        %v296 = vsel %vm294, %v289, %v291
        %v297 = vsel %vm294, %v291, %v293
        %301 = vst [vmem:[#allocation2 + $0x30] sm:$0xff] %v295
        %302 = vst [vmem:[#allocation2 + $0x38] sm:$0xff] %v296
        %303 = vst [vmem:[#allocation2 + $0x40] sm:$0xff] %v297
        %v304 = vld [vmem:[%s181] sm:$0xff]
        %v305 = vld [vmem:[%s181 + $0x8] sm:$0xff]
        %v306 = vld [vmem:[%s181 + $0x14] sm:$0xff]
        %v307 = vld [vmem:[%s181 + $0x1c] sm:$0xff]
        %v312 = vunpack.c.l.b16 %v304
        %v313 = vunpack.c.h.b16 %v304
        %v314 = vunpack.c.l.b16 %v305
        %v315 = vunpack.c.h.b16 %v305
        %v316 = vunpack.c.l.b16 %v306
        %v317 = vunpack.c.h.b16 %v306
        %v318 = vunpack.c.l.b16 %v307
        %v319 = vunpack.c.h.b16 %v307
        %v320 = vpack.c.b16 %v316, %v312
        %v321 = vpack.c.b16 %v317, %v313
        %v322 = vpack.c.b16 %v318, %v314
        %v323 = vpack.c.b16 %v319, %v315
        %324 = vrot.lane.b32.xlu0 %v320, 125
        %v325 = vpop.permute.xlu0 %324
        %326 = vrot.lane.b32.xlu0 %v321, 125
        %v327 = vpop.permute.xlu0 %326
        %328 = vrot.lane.b32.xlu0 %v322, 125
        %v329 = vpop.permute.xlu0 %328
        %330 = vrot.lane.b32.xlu0 %v323, 125
        %v331 = vpop.permute.xlu0 %330
        %vm332 = vcmask 1022976
        %v333 = vsel %vm332, %v325, %v327
        %v334 = vsel %vm332, %v327, %v329
        %v335 = vsel %vm332, %v329, %v331
        %339 = vst [vmem:[#allocation2 + $0x48] sm:$0xff] %v333
        %340 = vst [vmem:[#allocation2 + $0x50] sm:$0xff] %v334
        %341 = vst [vmem:[#allocation2 + $0x58] sm:$0xff] %v335
        %v342 = vld [vmem:[%s181] sm:$0xff]
        %v343 = vld [vmem:[%s181 + $0x8] sm:$0xff]
        %v344 = vld [vmem:[%s181 + $0x14] sm:$0xff]
        %v345 = vld [vmem:[%s181 + $0x1c] sm:$0xff]
        %v350 = vunpack.c.l.b16 %v342
        %v351 = vunpack.c.h.b16 %v342
        %v352 = vunpack.c.l.b16 %v343
        %v353 = vunpack.c.h.b16 %v343
        %v354 = vunpack.c.l.b16 %v344
        %v355 = vunpack.c.h.b16 %v344
        %v356 = vunpack.c.l.b16 %v345
        %v357 = vunpack.c.h.b16 %v345
        %v358 = vpack.c.b16 %v354, %v350
        %v359 = vpack.c.b16 %v355, %v351
        %v360 = vpack.c.b16 %v356, %v352
        %v361 = vpack.c.b16 %v357, %v353
        %362 = vrot.lane.b32.xlu0 %v358, 124
        %v363 = vpop.permute.xlu0 %362
        %364 = vrot.lane.b32.xlu0 %v359, 124
        %v365 = vpop.permute.xlu0 %364
        %366 = vrot.lane.b32.xlu0 %v360, 124
        %v367 = vpop.permute.xlu0 %366
        %368 = vrot.lane.b32.xlu0 %v361, 124
        %v369 = vpop.permute.xlu0 %368
        %vm370 = vcmask 1014784
        %v371 = vsel %vm370, %v363, %v365
        %v372 = vsel %vm370, %v365, %v367
        %v373 = vsel %vm370, %v367, %v369
        %377 = vst [vmem:[#allocation2 + $0x60] sm:$0xff] %v371
        %378 = vst [vmem:[#allocation2 + $0x68] sm:$0xff] %v372
        %379 = vst [vmem:[#allocation2 + $0x70] sm:$0xff] %v373
        %v380 = vld [vmem:[%s181] sm:$0xff]
        %v381 = vld [vmem:[%s181 + $0x8] sm:$0xff]
        %v382 = vld [vmem:[%s181 + $0x14] sm:$0xff]
        %v383 = vld [vmem:[%s181 + $0x1c] sm:$0xff]
        %v388 = vunpack.c.l.b16 %v380
        %v389 = vunpack.c.h.b16 %v380
        %v390 = vunpack.c.l.b16 %v381
        %v391 = vunpack.c.h.b16 %v381
        %v392 = vunpack.c.l.b16 %v382
        %v393 = vunpack.c.h.b16 %v382
        %v394 = vunpack.c.l.b16 %v383
        %v395 = vunpack.c.h.b16 %v383
        %v396 = vpack.c.b16 %v392, %v388
        %v397 = vpack.c.b16 %v393, %v389
        %v398 = vpack.c.b16 %v394, %v390
        %v399 = vpack.c.b16 %v395, %v391
        %400 = vrot.lane.b32.xlu0 %v396, 123
        %v401 = vpop.permute.xlu0 %400
        %402 = vrot.lane.b32.xlu0 %v397, 123
        %v403 = vpop.permute.xlu0 %402
        %404 = vrot.lane.b32.xlu0 %v398, 123
        %v405 = vpop.permute.xlu0 %404
        %406 = vrot.lane.b32.xlu0 %v399, 123
        %v407 = vpop.permute.xlu0 %406
        %vm408 = vcmask 1006592
        %v409 = vsel %vm408, %v401, %v403
        %v410 = vsel %vm408, %v403, %v405
        %v411 = vsel %vm408, %v405, %v407
        %415 = vst [vmem:[#allocation2 + $0x78] sm:$0xff] %v409
        %416 = vst [vmem:[#allocation2 + $0x80] sm:$0xff] %v410
        %417 = vst [vmem:[#allocation2 + $0x88] sm:$0xff] %v411
        %v418 = vld [vmem:[%s181] sm:$0xff]
        %v419 = vld [vmem:[%s181 + $0x8] sm:$0xff]
        %v420 = vld [vmem:[%s181 + $0x14] sm:$0xff]
        %v421 = vld [vmem:[%s181 + $0x1c] sm:$0xff]
        %v426 = vunpack.c.l.b16 %v418
        %v427 = vunpack.c.h.b16 %v418
        %v428 = vunpack.c.l.b16 %v419
        %v429 = vunpack.c.h.b16 %v419
        %v430 = vunpack.c.l.b16 %v420
        %v431 = vunpack.c.h.b16 %v420
        %v432 = vunpack.c.l.b16 %v421
        %v433 = vunpack.c.h.b16 %v421
        %v434 = vpack.c.b16 %v430, %v426
        %v435 = vpack.c.b16 %v431, %v427
        %v436 = vpack.c.b16 %v432, %v428
        %v437 = vpack.c.b16 %v433, %v429
        %438 = vrot.lane.b32.xlu0 %v434, 122
        %v439 = vpop.permute.xlu0 %438
        %440 = vrot.lane.b32.xlu0 %v435, 122
        %v441 = vpop.permute.xlu0 %440
        %442 = vrot.lane.b32.xlu0 %v436, 122
        %v443 = vpop.permute.xlu0 %442
        %444 = vrot.lane.b32.xlu0 %v437, 122
        %v445 = vpop.permute.xlu0 %444
        %vm446 = vcmask 998400
        %v447 = vsel %vm446, %v439, %v441
        %v448 = vsel %vm446, %v441, %v443
        %v449 = vsel %vm446, %v443, %v445
        %453 = vst [vmem:[#allocation2 + $0x90] sm:$0xff] %v447
        %454 = vst [vmem:[#allocation2 + $0x98] sm:$0xff] %v448
        %455 = vst [vmem:[#allocation2 + $0xa0] sm:$0xff] %v449
        %v456 = vld [vmem:[%s181] sm:$0xff]
        %v457 = vld [vmem:[%s181 + $0x8] sm:$0xff]
        %v458 = vld [vmem:[%s181 + $0x14] sm:$0xff]
        %v459 = vld [vmem:[%s181 + $0x1c] sm:$0xff]
        %v464 = vunpack.c.l.b16 %v456
        %v465 = vunpack.c.h.b16 %v456
        %v466 = vunpack.c.l.b16 %v457
        %v467 = vunpack.c.h.b16 %v457
        %v468 = vunpack.c.l.b16 %v458
        %v469 = vunpack.c.h.b16 %v458
        %v470 = vunpack.c.l.b16 %v459
        %v471 = vunpack.c.h.b16 %v459
        %v472 = vpack.c.b16 %v468, %v464
        %v473 = vpack.c.b16 %v469, %v465
        %v474 = vpack.c.b16 %v470, %v466
        %v475 = vpack.c.b16 %v471, %v467
        %476 = vrot.lane.b32.xlu0 %v472, 104
        %v477 = vpop.permute.xlu0 %476
        %478 = vrot.lane.b32.xlu0 %v473, 104
        %v479 = vpop.permute.xlu0 %478
        %480 = vrot.lane.b32.xlu0 %v474, 104
        %v481 = vpop.permute.xlu0 %480
        %482 = vrot.lane.b32.xlu0 %v475, 104
        %v483 = vpop.permute.xlu0 %482
        %vm484 = vcmask 850944
        %v485 = vsel %vm484, %v477, %v479
        %v486 = vsel %vm484, %v479, %v481
        %v487 = vsel %vm484, %v481, %v483
        %491 = vst [vmem:[#allocation2 + $0xa8] sm:$0xff] %v485
        %492 = vst [vmem:[#allocation2 + $0xb0] sm:$0xff] %v486
        %493 = vst [vmem:[#allocation2 + $0xb8] sm:$0xff] %v487
        %v494 = vld [vmem:[%s181] sm:$0xff]
        %v495 = vld [vmem:[%s181 + $0x8] sm:$0xff]
        %v496 = vld [vmem:[%s181 + $0x14] sm:$0xff]
        %v497 = vld [vmem:[%s181 + $0x1c] sm:$0xff]
        %v502 = vunpack.c.l.b16 %v494
        %v503 = vunpack.c.h.b16 %v494
        %v504 = vunpack.c.l.b16 %v495
        %v505 = vunpack.c.h.b16 %v495
        %v506 = vunpack.c.l.b16 %v496
        %v507 = vunpack.c.h.b16 %v496
        %v508 = vunpack.c.l.b16 %v497
        %v509 = vunpack.c.h.b16 %v497
        %v510 = vpack.c.b16 %v506, %v502
        %v511 = vpack.c.b16 %v507, %v503
        %v512 = vpack.c.b16 %v508, %v504
        %v513 = vpack.c.b16 %v509, %v505
        %514 = vrot.lane.b32.xlu0 %v510, 103
        %v515 = vpop.permute.xlu0 %514
        %516 = vrot.lane.b32.xlu0 %v511, 103
        %v517 = vpop.permute.xlu0 %516
        %518 = vrot.lane.b32.xlu0 %v512, 103
        %v519 = vpop.permute.xlu0 %518
        %520 = vrot.lane.b32.xlu0 %v513, 103
        %v521 = vpop.permute.xlu0 %520
        %vm522 = vcmask 842752
        %v523 = vsel %vm522, %v515, %v517
        %v524 = vsel %vm522, %v517, %v519
        %v525 = vsel %vm522, %v519, %v521
        %529 = vst [vmem:[#allocation2 + $0xc0] sm:$0xff] %v523
        %530 = vst [vmem:[#allocation2 + $0xc8] sm:$0xff] %v524
        %531 = vst [vmem:[#allocation2 + $0xd0] sm:$0xff] %v525
        %v532 = vld [vmem:[%s181] sm:$0xff]
        %v533 = vld [vmem:[%s181 + $0x8] sm:$0xff]
        %v534 = vld [vmem:[%s181 + $0x14] sm:$0xff]
        %v535 = vld [vmem:[%s181 + $0x1c] sm:$0xff]
        %v540 = vunpack.c.l.b16 %v532
        %v541 = vunpack.c.h.b16 %v532
        %v542 = vunpack.c.l.b16 %v533
        %v543 = vunpack.c.h.b16 %v533
        %v544 = vunpack.c.l.b16 %v534
        %v545 = vunpack.c.h.b16 %v534
        %v546 = vunpack.c.l.b16 %v535
        %v547 = vunpack.c.h.b16 %v535
        %v548 = vpack.c.b16 %v544, %v540
        %v549 = vpack.c.b16 %v545, %v541
        %v550 = vpack.c.b16 %v546, %v542
        %v551 = vpack.c.b16 %v547, %v543
        %552 = vrot.lane.b32.xlu0 %v548, 102
        %v553 = vpop.permute.xlu0 %552
        %554 = vrot.lane.b32.xlu0 %v549, 102
        %v555 = vpop.permute.xlu0 %554
        %556 = vrot.lane.b32.xlu0 %v550, 102
        %v557 = vpop.permute.xlu0 %556
        %558 = vrot.lane.b32.xlu0 %v551, 102
        %v559 = vpop.permute.xlu0 %558
        %vm560 = vcmask 834560
        %v561 = vsel %vm560, %v553, %v555
        %v562 = vsel %vm560, %v555, %v557
        %v563 = vsel %vm560, %v557, %v559
        %567 = vst [vmem:[#allocation2 + $0xd8] sm:$0xff] %v561
        %568 = vst [vmem:[#allocation2 + $0xe0] sm:$0xff] %v562
        %569 = vst [vmem:[#allocation2 + $0xe8] sm:$0xff] %v563
        %v570 = vld [vmem:[%s181] sm:$0xff]
        %v571 = vld [vmem:[%s181 + $0x8] sm:$0xff]
        %v572 = vld [vmem:[%s181 + $0x14] sm:$0xff]
        %v573 = vld [vmem:[%s181 + $0x1c] sm:$0xff]
        %v578 = vunpack.c.l.b16 %v570
        %v579 = vunpack.c.h.b16 %v570
        %v580 = vunpack.c.l.b16 %v571
        %v581 = vunpack.c.h.b16 %v571
        %v582 = vunpack.c.l.b16 %v572
        %v583 = vunpack.c.h.b16 %v572
        %v584 = vunpack.c.l.b16 %v573
        %v585 = vunpack.c.h.b16 %v573
        %v586 = vpack.c.b16 %v582, %v578
        %v587 = vpack.c.b16 %v583, %v579
        %v588 = vpack.c.b16 %v584, %v580
        %v589 = vpack.c.b16 %v585, %v581
        %590 = vrot.lane.b32.xlu0 %v586, 101
        %v591 = vpop.permute.xlu0 %590
        %592 = vrot.lane.b32.xlu0 %v587, 101
        %v593 = vpop.permute.xlu0 %592
        %594 = vrot.lane.b32.xlu0 %v588, 101
        %v595 = vpop.permute.xlu0 %594
        %596 = vrot.lane.b32.xlu0 %v589, 101
        %v597 = vpop.permute.xlu0 %596
        %vm598 = vcmask 826368
        %v599 = vsel %vm598, %v591, %v593
        %v600 = vsel %vm598, %v593, %v595
        %v601 = vsel %vm598, %v595, %v597
        %605 = vst [vmem:[#allocation2 + $0xf0] sm:$0xff] %v599
        %606 = vst [vmem:[#allocation2 + $0xf8] sm:$0xff] %v600
        %607 = vst [vmem:[#allocation2 + $0x100] sm:$0xff] %v601
        %v608 = vld [vmem:[%s181] sm:$0xff]
        %v609 = vld [vmem:[%s181 + $0x8] sm:$0xff]
        %v610 = vld [vmem:[%s181 + $0x14] sm:$0xff]
        %v611 = vld [vmem:[%s181 + $0x1c] sm:$0xff]
        %v616 = vunpack.c.l.b16 %v608
        %v617 = vunpack.c.h.b16 %v608
        %v618 = vunpack.c.l.b16 %v609
        %v619 = vunpack.c.h.b16 %v609
        %v620 = vunpack.c.l.b16 %v610
        %v621 = vunpack.c.h.b16 %v610
        %v622 = vunpack.c.l.b16 %v611
        %v623 = vunpack.c.h.b16 %v611
        %v624 = vpack.c.b16 %v620, %v616
        %v625 = vpack.c.b16 %v621, %v617
        %v626 = vpack.c.b16 %v622, %v618
        %v627 = vpack.c.b16 %v623, %v619
        %628 = vrot.lane.b32.xlu0 %v624, 100
        %v629 = vpop.permute.xlu0 %628
        %630 = vrot.lane.b32.xlu0 %v625, 100
        %v631 = vpop.permute.xlu0 %630
        %632 = vrot.lane.b32.xlu0 %v626, 100
        %v633 = vpop.permute.xlu0 %632
        %634 = vrot.lane.b32.xlu0 %v627, 100
        %v635 = vpop.permute.xlu0 %634
        %vm636 = vcmask 818176
        %v637 = vsel %vm636, %v629, %v631
        %v638 = vsel %vm636, %v631, %v633
        %v639 = vsel %vm636, %v633, %v635
        %643 = vst [vmem:[#allocation2 + $0x108] sm:$0xff] %v637
        %644 = vst [vmem:[#allocation2 + $0x110] sm:$0xff] %v638
        %645 = vst [vmem:[#allocation2 + $0x118] sm:$0xff] %v639
        %v646 = vld [vmem:[%s181] sm:$0xff]
        %v647 = vld [vmem:[%s181 + $0x8] sm:$0xff]
        %v648 = vld [vmem:[%s181 + $0x14] sm:$0xff]
        %v649 = vld [vmem:[%s181 + $0x1c] sm:$0xff]
        %v654 = vunpack.c.l.b16 %v646
        %v655 = vunpack.c.h.b16 %v646
        %v656 = vunpack.c.l.b16 %v647
        %v657 = vunpack.c.h.b16 %v647
        %v658 = vunpack.c.l.b16 %v648
        %v659 = vunpack.c.h.b16 %v648
        %v660 = vunpack.c.l.b16 %v649
        %v661 = vunpack.c.h.b16 %v649
        %v662 = vpack.c.b16 %v658, %v654
        %v663 = vpack.c.b16 %v659, %v655
        %v664 = vpack.c.b16 %v660, %v656
        %v665 = vpack.c.b16 %v661, %v657
        %666 = vrot.lane.b32.xlu0 %v662, 99
        %v667 = vpop.permute.xlu0 %666
        %668 = vrot.lane.b32.xlu0 %v663, 99
        %v669 = vpop.permute.xlu0 %668
        %670 = vrot.lane.b32.xlu0 %v664, 99
        %v671 = vpop.permute.xlu0 %670
        %672 = vrot.lane.b32.xlu0 %v665, 99
        %v673 = vpop.permute.xlu0 %672
        %vm674 = vcmask 809984
        %v675 = vsel %vm674, %v667, %v669
        %v676 = vsel %vm674, %v669, %v671
        %v677 = vsel %vm674, %v671, %v673
        %681 = vst [vmem:[#allocation2 + $0x120] sm:$0xff] %v675
        %682 = vst [vmem:[#allocation2 + $0x128] sm:$0xff] %v676
        %683 = vst [vmem:[#allocation2 + $0x130] sm:$0xff] %v677
        %v684 = vld [vmem:[%s181] sm:$0xff]
        %v685 = vld [vmem:[%s181 + $0x8] sm:$0xff]
        %v686 = vld [vmem:[%s181 + $0x14] sm:$0xff]
        %v687 = vld [vmem:[%s181 + $0x1c] sm:$0xff]
        %v692 = vunpack.c.l.b16 %v684
        %v693 = vunpack.c.h.b16 %v684
        %v694 = vunpack.c.l.b16 %v685
        %v695 = vunpack.c.h.b16 %v685
        %v696 = vunpack.c.l.b16 %v686
        %v697 = vunpack.c.h.b16 %v686
        %v698 = vunpack.c.l.b16 %v687
        %v699 = vunpack.c.h.b16 %v687
        %v700 = vpack.c.b16 %v696, %v692
        %v701 = vpack.c.b16 %v697, %v693
        %v702 = vpack.c.b16 %v698, %v694
        %v703 = vpack.c.b16 %v699, %v695
        %704 = vrot.lane.b32.xlu0 %v700, 98
        %v705 = vpop.permute.xlu0 %704
        %706 = vrot.lane.b32.xlu0 %v701, 98
        %v707 = vpop.permute.xlu0 %706
        %708 = vrot.lane.b32.xlu0 %v702, 98
        %v709 = vpop.permute.xlu0 %708
        %710 = vrot.lane.b32.xlu0 %v703, 98
        %v711 = vpop.permute.xlu0 %710
        %vm712 = vcmask 801792
        %v713 = vsel %vm712, %v705, %v707
        %v714 = vsel %vm712, %v707, %v709
        %v715 = vsel %vm712, %v709, %v711
        %719 = vst [vmem:[#allocation2 + $0x138] sm:$0xff] %v713
        %720 = vst [vmem:[#allocation2 + $0x140] sm:$0xff] %v714
        %721 = vst [vmem:[#allocation2 + $0x148] sm:$0xff] %v715
        %v722 = vld [vmem:[%s181] sm:$0xff]
        %v723 = vld [vmem:[%s181 + $0x8] sm:$0xff]
        %v724 = vld [vmem:[%s181 + $0x14] sm:$0xff]
        %v725 = vld [vmem:[%s181 + $0x1c] sm:$0xff]
        %v730 = vunpack.c.l.b16 %v722
        %v731 = vunpack.c.h.b16 %v722
        %v732 = vunpack.c.l.b16 %v723
        %v733 = vunpack.c.h.b16 %v723
        %v734 = vunpack.c.l.b16 %v724
        %v735 = vunpack.c.h.b16 %v724
        %v736 = vunpack.c.l.b16 %v725
        %v737 = vunpack.c.h.b16 %v725
        %v738 = vpack.c.b16 %v734, %v730
        %v739 = vpack.c.b16 %v735, %v731
        %v740 = vpack.c.b16 %v736, %v732
        %v741 = vpack.c.b16 %v737, %v733
        %742 = vrot.lane.b32.xlu0 %v738, 80
        %v743 = vpop.permute.xlu0 %742
        %744 = vrot.lane.b32.xlu0 %v739, 80
        %v745 = vpop.permute.xlu0 %744
        %746 = vrot.lane.b32.xlu0 %v740, 80
        %v747 = vpop.permute.xlu0 %746
        %748 = vrot.lane.b32.xlu0 %v741, 80
        %v749 = vpop.permute.xlu0 %748
        %vm750 = vcmask 654336
        %v751 = vsel %vm750, %v743, %v745
        %v752 = vsel %vm750, %v745, %v747
        %v753 = vsel %vm750, %v747, %v749
        %757 = vst [vmem:[#allocation2 + $0x150] sm:$0xff] %v751
        %758 = vst [vmem:[#allocation2 + $0x158] sm:$0xff] %v752
        %759 = vst [vmem:[#allocation2 + $0x160] sm:$0xff] %v753
        %v760 = vld [vmem:[%s181] sm:$0xff]
        %v761 = vld [vmem:[%s181 + $0x8] sm:$0xff]
        %v762 = vld [vmem:[%s181 + $0x14] sm:$0xff]
        %v763 = vld [vmem:[%s181 + $0x1c] sm:$0xff]
        %v768 = vunpack.c.l.b16 %v760
        %v769 = vunpack.c.h.b16 %v760
        %v770 = vunpack.c.l.b16 %v761
        %v771 = vunpack.c.h.b16 %v761
        %v772 = vunpack.c.l.b16 %v762
        %v773 = vunpack.c.h.b16 %v762
        %v774 = vunpack.c.l.b16 %v763
        %v775 = vunpack.c.h.b16 %v763
        %v776 = vpack.c.b16 %v772, %v768
        %v777 = vpack.c.b16 %v773, %v769
        %v778 = vpack.c.b16 %v774, %v770
        %v779 = vpack.c.b16 %v775, %v771
        %780 = vrot.lane.b32.xlu0 %v776, 79
        %v781 = vpop.permute.xlu0 %780
        %782 = vrot.lane.b32.xlu0 %v777, 79
        %v783 = vpop.permute.xlu0 %782
        %784 = vrot.lane.b32.xlu0 %v778, 79
        %v785 = vpop.permute.xlu0 %784
        %786 = vrot.lane.b32.xlu0 %v779, 79
        %v787 = vpop.permute.xlu0 %786
        %vm788 = vcmask 646144
        %v789 = vsel %vm788, %v781, %v783
        %v790 = vsel %vm788, %v783, %v785
        %v791 = vsel %vm788, %v785, %v787
        %795 = vst [vmem:[#allocation2 + $0x168] sm:$0xff] %v789
        %796 = vst [vmem:[#allocation2 + $0x170] sm:$0xff] %v790
        %797 = vst [vmem:[#allocation2 + $0x178] sm:$0xff] %v791
        %v798 = vld [vmem:[%s181] sm:$0xff]
        %v799 = vld [vmem:[%s181 + $0x8] sm:$0xff]
        %v800 = vld [vmem:[%s181 + $0x14] sm:$0xff]
        %v801 = vld [vmem:[%s181 + $0x1c] sm:$0xff]
        %v806 = vunpack.c.l.b16 %v798
        %v807 = vunpack.c.h.b16 %v798
        %v808 = vunpack.c.l.b16 %v799
        %v809 = vunpack.c.h.b16 %v799
        %v810 = vunpack.c.l.b16 %v800
        %v811 = vunpack.c.h.b16 %v800
        %v812 = vunpack.c.l.b16 %v801
        %v813 = vunpack.c.h.b16 %v801
        %v814 = vpack.c.b16 %v810, %v806
        %v815 = vpack.c.b16 %v811, %v807
        %v816 = vpack.c.b16 %v812, %v808
        %v817 = vpack.c.b16 %v813, %v809
        %818 = vrot.lane.b32.xlu0 %v814, 78
        %v819 = vpop.permute.xlu0 %818
        %820 = vrot.lane.b32.xlu0 %v815, 78
        %v821 = vpop.permute.xlu0 %820
        %822 = vrot.lane.b32.xlu0 %v816, 78
        %v823 = vpop.permute.xlu0 %822
        %824 = vrot.lane.b32.xlu0 %v817, 78
        %v825 = vpop.permute.xlu0 %824
        %vm826 = vcmask 637952
        %v827 = vsel %vm826, %v819, %v821
        %v828 = vsel %vm826, %v821, %v823
        %v829 = vsel %vm826, %v823, %v825
        %833 = vst [vmem:[#allocation2 + $0x180] sm:$0xff] %v827
        %834 = vst [vmem:[#allocation2 + $0x188] sm:$0xff] %v828
        %835 = vst [vmem:[#allocation2 + $0x190] sm:$0xff] %v829
        %v836 = vld [vmem:[%s181] sm:$0xff]
        %v837 = vld [vmem:[%s181 + $0x8] sm:$0xff]
        %v838 = vld [vmem:[%s181 + $0x14] sm:$0xff]
        %v839 = vld [vmem:[%s181 + $0x1c] sm:$0xff]
        %v844 = vunpack.c.l.b16 %v836
        %v845 = vunpack.c.h.b16 %v836
        %v846 = vunpack.c.l.b16 %v837
        %v847 = vunpack.c.h.b16 %v837
        %v848 = vunpack.c.l.b16 %v838
        %v849 = vunpack.c.h.b16 %v838
        %v850 = vunpack.c.l.b16 %v839
        %v851 = vunpack.c.h.b16 %v839
        %v852 = vpack.c.b16 %v848, %v844
        %v853 = vpack.c.b16 %v849, %v845
        %v854 = vpack.c.b16 %v850, %v846
        %v855 = vpack.c.b16 %v851, %v847
        %856 = vrot.lane.b32.xlu0 %v852, 77
        %v857 = vpop.permute.xlu0 %856
        %858 = vrot.lane.b32.xlu0 %v853, 77
        %v859 = vpop.permute.xlu0 %858
        %860 = vrot.lane.b32.xlu0 %v854, 77
        %v861 = vpop.permute.xlu0 %860
        %862 = vrot.lane.b32.xlu0 %v855, 77
        %v863 = vpop.permute.xlu0 %862
        %vm864 = vcmask 629760
        %v865 = vsel %vm864, %v857, %v859
        %v866 = vsel %vm864, %v859, %v861
        %v867 = vsel %vm864, %v861, %v863
        %871 = vst [vmem:[#allocation2 + $0x198] sm:$0xff] %v865
        %872 = vst [vmem:[#allocation2 + $0x1a0] sm:$0xff] %v866
        %873 = vst [vmem:[#allocation2 + $0x1a8] sm:$0xff] %v867
        %v874 = vld [vmem:[%s181] sm:$0xff]
        %v875 = vld [vmem:[%s181 + $0x8] sm:$0xff]
        %v876 = vld [vmem:[%s181 + $0x14] sm:$0xff]
        %v877 = vld [vmem:[%s181 + $0x1c] sm:$0xff]
        %v882 = vunpack.c.l.b16 %v874
        %v883 = vunpack.c.h.b16 %v874
        %v884 = vunpack.c.l.b16 %v875
        %v885 = vunpack.c.h.b16 %v875
        %v886 = vunpack.c.l.b16 %v876
        %v887 = vunpack.c.h.b16 %v876
        %v888 = vunpack.c.l.b16 %v877
        %v889 = vunpack.c.h.b16 %v877
        %v890 = vpack.c.b16 %v886, %v882
        %v891 = vpack.c.b16 %v887, %v883
        %v892 = vpack.c.b16 %v888, %v884
        %v893 = vpack.c.b16 %v889, %v885
        %894 = vrot.lane.b32.xlu0 %v890, 76
        %v895 = vpop.permute.xlu0 %894
        %896 = vrot.lane.b32.xlu0 %v891, 76
        %v897 = vpop.permute.xlu0 %896
        %898 = vrot.lane.b32.xlu0 %v892, 76
        %v899 = vpop.permute.xlu0 %898
        %900 = vrot.lane.b32.xlu0 %v893, 76
        %v901 = vpop.permute.xlu0 %900
        %vm902 = vcmask 621568
        %v903 = vsel %vm902, %v895, %v897
        %v904 = vsel %vm902, %v897, %v899
        %v905 = vsel %vm902, %v899, %v901
        %909 = vst [vmem:[#allocation2 + $0x1b0] sm:$0xff] %v903
        %910 = vst [vmem:[#allocation2 + $0x1b8] sm:$0xff] %v904
        %911 = vst [vmem:[#allocation2 + $0x1c0] sm:$0xff] %v905
        %v912 = vld [vmem:[%s181] sm:$0xff]
        %v913 = vld [vmem:[%s181 + $0x8] sm:$0xff]
        %v914 = vld [vmem:[%s181 + $0x14] sm:$0xff]
        %v915 = vld [vmem:[%s181 + $0x1c] sm:$0xff]
        %v920 = vunpack.c.l.b16 %v912
        %v921 = vunpack.c.h.b16 %v912
        %v922 = vunpack.c.l.b16 %v913
        %v923 = vunpack.c.h.b16 %v913
        %v924 = vunpack.c.l.b16 %v914
        %v925 = vunpack.c.h.b16 %v914
        %v926 = vunpack.c.l.b16 %v915
        %v927 = vunpack.c.h.b16 %v915
        %v928 = vpack.c.b16 %v924, %v920
        %v929 = vpack.c.b16 %v925, %v921
        %v930 = vpack.c.b16 %v926, %v922
        %v931 = vpack.c.b16 %v927, %v923
        %932 = vrot.lane.b32.xlu0 %v928, 75
        %v933 = vpop.permute.xlu0 %932
        %934 = vrot.lane.b32.xlu0 %v929, 75
        %v935 = vpop.permute.xlu0 %934
        %936 = vrot.lane.b32.xlu0 %v930, 75
        %v937 = vpop.permute.xlu0 %936
        %938 = vrot.lane.b32.xlu0 %v931, 75
        %v939 = vpop.permute.xlu0 %938
        %vm940 = vcmask 613376
        %v941 = vsel %vm940, %v933, %v935
        %v942 = vsel %vm940, %v935, %v937
        %v943 = vsel %vm940, %v937, %v939
        %947 = vst [vmem:[#allocation2 + $0x1c8] sm:$0xff] %v941
        %948 = vst [vmem:[#allocation2 + $0x1d0] sm:$0xff] %v942
        %949 = vst [vmem:[#allocation2 + $0x1d8] sm:$0xff] %v943
        %v950 = vld [vmem:[%s181] sm:$0xff]
        %v951 = vld [vmem:[%s181 + $0x8] sm:$0xff]
        %v952 = vld [vmem:[%s181 + $0x14] sm:$0xff]
        %v953 = vld [vmem:[%s181 + $0x1c] sm:$0xff]
        %v958 = vunpack.c.l.b16 %v950
        %v959 = vunpack.c.h.b16 %v950
        %v960 = vunpack.c.l.b16 %v951
        %v961 = vunpack.c.h.b16 %v951
        %v962 = vunpack.c.l.b16 %v952
        %v963 = vunpack.c.h.b16 %v952
        %v964 = vunpack.c.l.b16 %v953
        %v965 = vunpack.c.h.b16 %v953
        %v966 = vpack.c.b16 %v962, %v958
        %v967 = vpack.c.b16 %v963, %v959
        %v968 = vpack.c.b16 %v964, %v960
        %v969 = vpack.c.b16 %v965, %v961
        %970 = vrot.lane.b32.xlu0 %v966, 74
        %v971 = vpop.permute.xlu0 %970
        %972 = vrot.lane.b32.xlu0 %v967, 74
        %v973 = vpop.permute.xlu0 %972
        %974 = vrot.lane.b32.xlu0 %v968, 74
        %v975 = vpop.permute.xlu0 %974
        %976 = vrot.lane.b32.xlu0 %v969, 74
        %v977 = vpop.permute.xlu0 %976
        %vm978 = vcmask 605184
        %v979 = vsel %vm978, %v971, %v973
        %v980 = vsel %vm978, %v973, %v975
        %v981 = vsel %vm978, %v975, %v977
        %985 = vst [vmem:[#allocation2 + $0x1e0] sm:$0xff] %v979
        %986 = vst [vmem:[#allocation2 + $0x1e8] sm:$0xff] %v980
        %987 = vst [vmem:[#allocation2 + $0x1f0] sm:$0xff] %v981
        %v988 = vld [vmem:[%s181] sm:$0xff]
        %v989 = vld [vmem:[%s181 + $0x8] sm:$0xff]
        %v990 = vld [vmem:[%s181 + $0x14] sm:$0xff]
        %v991 = vld [vmem:[%s181 + $0x1c] sm:$0xff]
        %v996 = vunpack.c.l.b16 %v988
        %v997 = vunpack.c.h.b16 %v988
        %v998 = vunpack.c.l.b16 %v989
        %v999 = vunpack.c.h.b16 %v989
        %v1000 = vunpack.c.l.b16 %v990
        %v1001 = vunpack.c.h.b16 %v990
        %v1002 = vunpack.c.l.b16 %v991
        %v1003 = vunpack.c.h.b16 %v991
        %v1004 = vpack.c.b16 %v1000, %v996
        %v1005 = vpack.c.b16 %v1001, %v997
        %v1006 = vpack.c.b16 %v1002, %v998
        %v1007 = vpack.c.b16 %v1003, %v999
        %1008 = vrot.lane.b32.xlu0 %v1004, 56
        %v1009 = vpop.permute.xlu0 %1008
        %1010 = vrot.lane.b32.xlu0 %v1005, 56
        %v1011 = vpop.permute.xlu0 %1010
        %1012 = vrot.lane.b32.xlu0 %v1006, 56
        %v1013 = vpop.permute.xlu0 %1012
        %1014 = vrot.lane.b32.xlu0 %v1007, 56
        %v1015 = vpop.permute.xlu0 %1014
        %vm1016 = vcmask 457728
        %v1017 = vsel %vm1016, %v1009, %v1011
        %v1018 = vsel %vm1016, %v1011, %v1013
        %v1019 = vsel %vm1016, %v1013, %v1015
        %1023 = vst [vmem:[#allocation2 + $0x1f8] sm:$0xff] %v1017
        %1024 = vst [vmem:[#allocation2 + $0x200] sm:$0xff] %v1018
        %1025 = vst [vmem:[#allocation2 + $0x208] sm:$0xff] %v1019
        %v1026 = vld [vmem:[%s181] sm:$0xff]
        %v1027 = vld [vmem:[%s181 + $0x8] sm:$0xff]
        %v1028 = vld [vmem:[%s181 + $0x14] sm:$0xff]
        %v1029 = vld [vmem:[%s181 + $0x1c] sm:$0xff]
        %v1034 = vunpack.c.l.b16 %v1026
        %v1035 = vunpack.c.h.b16 %v1026
        %v1036 = vunpack.c.l.b16 %v1027
        %v1037 = vunpack.c.h.b16 %v1027
        %v1038 = vunpack.c.l.b16 %v1028
        %v1039 = vunpack.c.h.b16 %v1028
        %v1040 = vunpack.c.l.b16 %v1029
        %v1041 = vunpack.c.h.b16 %v1029
        %v1042 = vpack.c.b16 %v1038, %v1034
        %v1043 = vpack.c.b16 %v1039, %v1035
        %v1044 = vpack.c.b16 %v1040, %v1036
        %v1045 = vpack.c.b16 %v1041, %v1037
        %1046 = vrot.lane.b32.xlu0 %v1042, 55
        %v1047 = vpop.permute.xlu0 %1046
        %1048 = vrot.lane.b32.xlu0 %v1043, 55
        %v1049 = vpop.permute.xlu0 %1048
        %1050 = vrot.lane.b32.xlu0 %v1044, 55
        %v1051 = vpop.permute.xlu0 %1050
        %1052 = vrot.lane.b32.xlu0 %v1045, 55
        %v1053 = vpop.permute.xlu0 %1052
        %vm1054 = vcmask 449536
        %v1055 = vsel %vm1054, %v1047, %v1049
        %v1056 = vsel %vm1054, %v1049, %v1051
        %v1057 = vsel %vm1054, %v1051, %v1053
        %1061 = vst [vmem:[#allocation2 + $0x210] sm:$0xff] %v1055
        %1062 = vst [vmem:[#allocation2 + $0x218] sm:$0xff] %v1056
        %1063 = vst [vmem:[#allocation2 + $0x220] sm:$0xff] %v1057
        %v1064 = vld [vmem:[%s181] sm:$0xff]
        %v1065 = vld [vmem:[%s181 + $0x8] sm:$0xff]
        %v1066 = vld [vmem:[%s181 + $0x14] sm:$0xff]
        %v1067 = vld [vmem:[%s181 + $0x1c] sm:$0xff]
        %v1072 = vunpack.c.l.b16 %v1064
        %v1073 = vunpack.c.h.b16 %v1064
        %v1074 = vunpack.c.l.b16 %v1065
        %v1075 = vunpack.c.h.b16 %v1065
        %v1076 = vunpack.c.l.b16 %v1066
        %v1077 = vunpack.c.h.b16 %v1066
        %v1078 = vunpack.c.l.b16 %v1067
        %v1079 = vunpack.c.h.b16 %v1067
        %v1080 = vpack.c.b16 %v1076, %v1072
        %v1081 = vpack.c.b16 %v1077, %v1073
        %v1082 = vpack.c.b16 %v1078, %v1074
        %v1083 = vpack.c.b16 %v1079, %v1075
        %1084 = vrot.lane.b32.xlu0 %v1080, 54
        %v1085 = vpop.permute.xlu0 %1084
        %1086 = vrot.lane.b32.xlu0 %v1081, 54
        %v1087 = vpop.permute.xlu0 %1086
        %1088 = vrot.lane.b32.xlu0 %v1082, 54
        %v1089 = vpop.permute.xlu0 %1088
        %1090 = vrot.lane.b32.xlu0 %v1083, 54
        %v1091 = vpop.permute.xlu0 %1090
        %vm1092 = vcmask 441344
        %v1093 = vsel %vm1092, %v1085, %v1087
        %v1094 = vsel %vm1092, %v1087, %v1089
        %v1095 = vsel %vm1092, %v1089, %v1091
        %1099 = vst [vmem:[#allocation2 + $0x228] sm:$0xff] %v1093
        %1100 = vst [vmem:[#allocation2 + $0x230] sm:$0xff] %v1094
        %1101 = vst [vmem:[#allocation2 + $0x238] sm:$0xff] %v1095
        %v1102 = vld [vmem:[%s181] sm:$0xff]
        %v1103 = vld [vmem:[%s181 + $0x8] sm:$0xff]
        %v1104 = vld [vmem:[%s181 + $0x14] sm:$0xff]
        %v1105 = vld [vmem:[%s181 + $0x1c] sm:$0xff]
        %v1110 = vunpack.c.l.b16 %v1102
        %v1111 = vunpack.c.h.b16 %v1102
        %v1112 = vunpack.c.l.b16 %v1103
        %v1113 = vunpack.c.h.b16 %v1103
        %v1114 = vunpack.c.l.b16 %v1104
        %v1115 = vunpack.c.h.b16 %v1104
        %v1116 = vunpack.c.l.b16 %v1105
        %v1117 = vunpack.c.h.b16 %v1105
        %v1118 = vpack.c.b16 %v1114, %v1110
        %v1119 = vpack.c.b16 %v1115, %v1111
        %v1120 = vpack.c.b16 %v1116, %v1112
        %v1121 = vpack.c.b16 %v1117, %v1113
        %1122 = vrot.lane.b32.xlu0 %v1118, 53
        %v1123 = vpop.permute.xlu0 %1122
        %1124 = vrot.lane.b32.xlu0 %v1119, 53
        %v1125 = vpop.permute.xlu0 %1124
        %1126 = vrot.lane.b32.xlu0 %v1120, 53
        %v1127 = vpop.permute.xlu0 %1126
        %1128 = vrot.lane.b32.xlu0 %v1121, 53
        %v1129 = vpop.permute.xlu0 %1128
        %vm1130 = vcmask 433152
        %v1131 = vsel %vm1130, %v1123, %v1125
        %v1132 = vsel %vm1130, %v1125, %v1127
        %v1133 = vsel %vm1130, %v1127, %v1129
        %1137 = vst [vmem:[#allocation2 + $0x240] sm:$0xff] %v1131
        %1138 = vst [vmem:[#allocation2 + $0x248] sm:$0xff] %v1132
        %1139 = vst [vmem:[#allocation2 + $0x250] sm:$0xff] %v1133
        %v1140 = vld [vmem:[%s181] sm:$0xff]
        %v1141 = vld [vmem:[%s181 + $0x8] sm:$0xff]
        %v1142 = vld [vmem:[%s181 + $0x14] sm:$0xff]
        %v1143 = vld [vmem:[%s181 + $0x1c] sm:$0xff]
        %v1148 = vunpack.c.l.b16 %v1140
        %v1149 = vunpack.c.h.b16 %v1140
        %v1150 = vunpack.c.l.b16 %v1141
        %v1151 = vunpack.c.h.b16 %v1141
        %v1152 = vunpack.c.l.b16 %v1142
        %v1153 = vunpack.c.h.b16 %v1142
        %v1154 = vunpack.c.l.b16 %v1143
        %v1155 = vunpack.c.h.b16 %v1143
        %v1156 = vpack.c.b16 %v1152, %v1148
        %v1157 = vpack.c.b16 %v1153, %v1149
        %v1158 = vpack.c.b16 %v1154, %v1150
        %v1159 = vpack.c.b16 %v1155, %v1151
        %1160 = vrot.lane.b32.xlu0 %v1156, 52
        %v1161 = vpop.permute.xlu0 %1160
        %1162 = vrot.lane.b32.xlu0 %v1157, 52
        %v1163 = vpop.permute.xlu0 %1162
        %1164 = vrot.lane.b32.xlu0 %v1158, 52
        %v1165 = vpop.permute.xlu0 %1164
        %1166 = vrot.lane.b32.xlu0 %v1159, 52
        %v1167 = vpop.permute.xlu0 %1166
        %vm1168 = vcmask 424960
        %v1169 = vsel %vm1168, %v1161, %v1163
        %v1170 = vsel %vm1168, %v1163, %v1165
        %v1171 = vsel %vm1168, %v1165, %v1167
        %1175 = vst [vmem:[#allocation2 + $0x258] sm:$0xff] %v1169
        %1176 = vst [vmem:[#allocation2 + $0x260] sm:$0xff] %v1170
        %1177 = vst [vmem:[#allocation2 + $0x268] sm:$0xff] %v1171
        %v1178 = vld [vmem:[%s181] sm:$0xff]
        %v1179 = vld [vmem:[%s181 + $0x8] sm:$0xff]
        %v1180 = vld [vmem:[%s181 + $0x14] sm:$0xff]
        %v1181 = vld [vmem:[%s181 + $0x1c] sm:$0xff]
        %v1186 = vunpack.c.l.b16 %v1178
        %v1187 = vunpack.c.h.b16 %v1178
        %v1188 = vunpack.c.l.b16 %v1179
        %v1189 = vunpack.c.h.b16 %v1179
        %v1190 = vunpack.c.l.b16 %v1180
        %v1191 = vunpack.c.h.b16 %v1180
        %v1192 = vunpack.c.l.b16 %v1181
        %v1193 = vunpack.c.h.b16 %v1181
        %v1194 = vpack.c.b16 %v1190, %v1186
        %v1195 = vpack.c.b16 %v1191, %v1187
        %v1196 = vpack.c.b16 %v1192, %v1188
        %v1197 = vpack.c.b16 %v1193, %v1189
        %1198 = vrot.lane.b32.xlu0 %v1194, 51
        %v1199 = vpop.permute.xlu0 %1198
        %1200 = vrot.lane.b32.xlu0 %v1195, 51
        %v1201 = vpop.permute.xlu0 %1200
        %1202 = vrot.lane.b32.xlu0 %v1196, 51
        %v1203 = vpop.permute.xlu0 %1202
        %1204 = vrot.lane.b32.xlu0 %v1197, 51
        %v1205 = vpop.permute.xlu0 %1204
        %vm1206 = vcmask 416768
        %v1207 = vsel %vm1206, %v1199, %v1201
        %v1208 = vsel %vm1206, %v1201, %v1203
        %v1209 = vsel %vm1206, %v1203, %v1205
        %1213 = vst [vmem:[#allocation2 + $0x270] sm:$0xff] %v1207
        %1214 = vst [vmem:[#allocation2 + $0x278] sm:$0xff] %v1208
        %1215 = vst [vmem:[#allocation2 + $0x280] sm:$0xff] %v1209
        %v1216 = vld [vmem:[%s181] sm:$0xff]
        %v1217 = vld [vmem:[%s181 + $0x8] sm:$0xff]
        %v1218 = vld [vmem:[%s181 + $0x14] sm:$0xff]
        %v1219 = vld [vmem:[%s181 + $0x1c] sm:$0xff]
        %v1224 = vunpack.c.l.b16 %v1216
        %v1225 = vunpack.c.h.b16 %v1216
        %v1226 = vunpack.c.l.b16 %v1217
        %v1227 = vunpack.c.h.b16 %v1217
        %v1228 = vunpack.c.l.b16 %v1218
        %v1229 = vunpack.c.h.b16 %v1218
        %v1230 = vunpack.c.l.b16 %v1219
        %v1231 = vunpack.c.h.b16 %v1219
        %v1232 = vpack.c.b16 %v1228, %v1224
        %v1233 = vpack.c.b16 %v1229, %v1225
        %v1234 = vpack.c.b16 %v1230, %v1226
        %v1235 = vpack.c.b16 %v1231, %v1227
        %1236 = vrot.lane.b32.xlu0 %v1232, 50
        %v1237 = vpop.permute.xlu0 %1236
        %1238 = vrot.lane.b32.xlu0 %v1233, 50
        %v1239 = vpop.permute.xlu0 %1238
        %1240 = vrot.lane.b32.xlu0 %v1234, 50
        %v1241 = vpop.permute.xlu0 %1240
        %1242 = vrot.lane.b32.xlu0 %v1235, 50
        %v1243 = vpop.permute.xlu0 %1242
        %vm1244 = vcmask 408576
        %v1245 = vsel %vm1244, %v1237, %v1239
        %v1246 = vsel %vm1244, %v1239, %v1241
        %v1247 = vsel %vm1244, %v1241, %v1243
        %1251 = vst [vmem:[#allocation2 + $0x288] sm:$0xff] %v1245
        %1252 = vst [vmem:[#allocation2 + $0x290] sm:$0xff] %v1246
        %1253 = vst [vmem:[#allocation2 + $0x298] sm:$0xff] %v1247
        %v1254 = vld [vmem:[%s181] sm:$0xff]
        %v1255 = vld [vmem:[%s181 + $0x8] sm:$0xff]
        %v1256 = vld [vmem:[%s181 + $0x14] sm:$0xff]
        %v1257 = vld [vmem:[%s181 + $0x1c] sm:$0xff]
        %v1262 = vunpack.c.l.b16 %v1254
        %v1263 = vunpack.c.h.b16 %v1254
        %v1264 = vunpack.c.l.b16 %v1255
        %v1265 = vunpack.c.h.b16 %v1255
        %v1266 = vunpack.c.l.b16 %v1256
        %v1267 = vunpack.c.h.b16 %v1256
        %v1268 = vunpack.c.l.b16 %v1257
        %v1269 = vunpack.c.h.b16 %v1257
        %v1270 = vpack.c.b16 %v1266, %v1262
        %v1271 = vpack.c.b16 %v1267, %v1263
        %v1272 = vpack.c.b16 %v1268, %v1264
        %v1273 = vpack.c.b16 %v1269, %v1265
        %1274 = vrot.lane.b32.xlu0 %v1270, 32
        %v1275 = vpop.permute.xlu0 %1274
        %1276 = vrot.lane.b32.xlu0 %v1271, 32
        %v1277 = vpop.permute.xlu0 %1276
        %1278 = vrot.lane.b32.xlu0 %v1272, 32
        %v1279 = vpop.permute.xlu0 %1278
        %1280 = vrot.lane.b32.xlu0 %v1273, 32
        %v1281 = vpop.permute.xlu0 %1280
        %vm1282 = vcmask 261120
        %v1283 = vsel %vm1282, %v1275, %v1277
        %v1284 = vsel %vm1282, %v1277, %v1279
        %v1285 = vsel %vm1282, %v1279, %v1281
        %1289 = vst [vmem:[#allocation2 + $0x2a0] sm:$0xff] %v1283
        %1290 = vst [vmem:[#allocation2 + $0x2a8] sm:$0xff] %v1284
        %1291 = vst [vmem:[#allocation2 + $0x2b0] sm:$0xff] %v1285
        %v1292 = vld [vmem:[%s181] sm:$0xff]
        %v1293 = vld [vmem:[%s181 + $0x8] sm:$0xff]
        %v1294 = vld [vmem:[%s181 + $0x14] sm:$0xff]
        %v1295 = vld [vmem:[%s181 + $0x1c] sm:$0xff]
        %v1300 = vunpack.c.l.b16 %v1292
        %v1301 = vunpack.c.h.b16 %v1292
        %v1302 = vunpack.c.l.b16 %v1293
        %v1303 = vunpack.c.h.b16 %v1293
        %v1304 = vunpack.c.l.b16 %v1294
        %v1305 = vunpack.c.h.b16 %v1294
        %v1306 = vunpack.c.l.b16 %v1295
        %v1307 = vunpack.c.h.b16 %v1295
        %v1308 = vpack.c.b16 %v1304, %v1300
        %v1309 = vpack.c.b16 %v1305, %v1301
        %v1310 = vpack.c.b16 %v1306, %v1302
        %v1311 = vpack.c.b16 %v1307, %v1303
        %1312 = vrot.lane.b32.xlu0 %v1308, 31
        %v1313 = vpop.permute.xlu0 %1312
        %1314 = vrot.lane.b32.xlu0 %v1309, 31
        %v1315 = vpop.permute.xlu0 %1314
        %1316 = vrot.lane.b32.xlu0 %v1310, 31
        %v1317 = vpop.permute.xlu0 %1316
        %1318 = vrot.lane.b32.xlu0 %v1311, 31
        %v1319 = vpop.permute.xlu0 %1318
        %vm1320 = vcmask 252928
        %v1321 = vsel %vm1320, %v1313, %v1315
        %v1322 = vsel %vm1320, %v1315, %v1317
        %v1323 = vsel %vm1320, %v1317, %v1319
        %1327 = vst [vmem:[#allocation2 + $0x2b8] sm:$0xff] %v1321
        %1328 = vst [vmem:[#allocation2 + $0x2c0] sm:$0xff] %v1322
        %1329 = vst [vmem:[#allocation2 + $0x2c8] sm:$0xff] %v1323
        %v1330 = vld [vmem:[%s181] sm:$0xff]
        %v1331 = vld [vmem:[%s181 + $0x8] sm:$0xff]
        %v1332 = vld [vmem:[%s181 + $0x14] sm:$0xff]
        %v1333 = vld [vmem:[%s181 + $0x1c] sm:$0xff]
        %v1338 = vunpack.c.l.b16 %v1330
        %v1339 = vunpack.c.h.b16 %v1330
        %v1340 = vunpack.c.l.b16 %v1331
        %v1341 = vunpack.c.h.b16 %v1331
        %v1342 = vunpack.c.l.b16 %v1332
        %v1343 = vunpack.c.h.b16 %v1332
        %v1344 = vunpack.c.l.b16 %v1333
        %v1345 = vunpack.c.h.b16 %v1333
        %v1346 = vpack.c.b16 %v1342, %v1338
        %v1347 = vpack.c.b16 %v1343, %v1339
        %v1348 = vpack.c.b16 %v1344, %v1340
        %v1349 = vpack.c.b16 %v1345, %v1341
        %1350 = vrot.lane.b32.xlu0 %v1346, 30
        %v1351 = vpop.permute.xlu0 %1350
        %1352 = vrot.lane.b32.xlu0 %v1347, 30
        %v1353 = vpop.permute.xlu0 %1352
        %1354 = vrot.lane.b32.xlu0 %v1348, 30
        %v1355 = vpop.permute.xlu0 %1354
        %1356 = vrot.lane.b32.xlu0 %v1349, 30
        %v1357 = vpop.permute.xlu0 %1356
        %vm1358 = vcmask 244736
        %v1359 = vsel %vm1358, %v1351, %v1353
        %v1360 = vsel %vm1358, %v1353, %v1355
        %v1361 = vsel %vm1358, %v1355, %v1357
        %1365 = vst [vmem:[#allocation2 + $0x2d0] sm:$0xff] %v1359
        %1366 = vst [vmem:[#allocation2 + $0x2d8] sm:$0xff] %v1360
        %1367 = vst [vmem:[#allocation2 + $0x2e0] sm:$0xff] %v1361
        %v1368 = vld [vmem:[%s181] sm:$0xff]
        %v1369 = vld [vmem:[%s181 + $0x8] sm:$0xff]
        %v1370 = vld [vmem:[%s181 + $0x14] sm:$0xff]
        %v1371 = vld [vmem:[%s181 + $0x1c] sm:$0xff]
        %v1376 = vunpack.c.l.b16 %v1368
        %v1377 = vunpack.c.h.b16 %v1368
        %v1378 = vunpack.c.l.b16 %v1369
        %v1379 = vunpack.c.h.b16 %v1369
        %v1380 = vunpack.c.l.b16 %v1370
        %v1381 = vunpack.c.h.b16 %v1370
        %v1382 = vunpack.c.l.b16 %v1371
        %v1383 = vunpack.c.h.b16 %v1371
        %v1384 = vpack.c.b16 %v1380, %v1376
        %v1385 = vpack.c.b16 %v1381, %v1377
        %v1386 = vpack.c.b16 %v1382, %v1378
        %v1387 = vpack.c.b16 %v1383, %v1379
        %1388 = vrot.lane.b32.xlu0 %v1384, 29
        %v1389 = vpop.permute.xlu0 %1388
        %1390 = vrot.lane.b32.xlu0 %v1385, 29
        %v1391 = vpop.permute.xlu0 %1390
        %1392 = vrot.lane.b32.xlu0 %v1386, 29
        %v1393 = vpop.permute.xlu0 %1392
        %1394 = vrot.lane.b32.xlu0 %v1387, 29
        %v1395 = vpop.permute.xlu0 %1394
        %vm1396 = vcmask 236544
        %v1397 = vsel %vm1396, %v1389, %v1391
        %v1398 = vsel %vm1396, %v1391, %v1393
        %v1399 = vsel %vm1396, %v1393, %v1395
        %1403 = vst [vmem:[#allocation2 + $0x2e8] sm:$0xff] %v1397
        %1404 = vst [vmem:[#allocation2 + $0x2f0] sm:$0xff] %v1398
        %1405 = vst [vmem:[#allocation2 + $0x2f8] sm:$0xff] %v1399
        %v1406 = vld [vmem:[%s181] sm:$0xff]
        %v1407 = vld [vmem:[%s181 + $0x8] sm:$0xff]
        %v1408 = vld [vmem:[%s181 + $0x14] sm:$0xff]
        %v1409 = vld [vmem:[%s181 + $0x1c] sm:$0xff]
        %v1414 = vunpack.c.l.b16 %v1406
        %v1415 = vunpack.c.h.b16 %v1406
        %v1416 = vunpack.c.l.b16 %v1407
        %v1417 = vunpack.c.h.b16 %v1407
        %v1418 = vunpack.c.l.b16 %v1408
        %v1419 = vunpack.c.h.b16 %v1408
        %v1420 = vunpack.c.l.b16 %v1409
        %v1421 = vunpack.c.h.b16 %v1409
        %v1422 = vpack.c.b16 %v1418, %v1414
        %v1423 = vpack.c.b16 %v1419, %v1415
        %v1424 = vpack.c.b16 %v1420, %v1416
        %v1425 = vpack.c.b16 %v1421, %v1417
        %1426 = vrot.lane.b32.xlu0 %v1422, 28
        %v1427 = vpop.permute.xlu0 %1426
        %1428 = vrot.lane.b32.xlu0 %v1423, 28
        %v1429 = vpop.permute.xlu0 %1428
        %1430 = vrot.lane.b32.xlu0 %v1424, 28
        %v1431 = vpop.permute.xlu0 %1430
        %1432 = vrot.lane.b32.xlu0 %v1425, 28
        %v1433 = vpop.permute.xlu0 %1432
        %vm1434 = vcmask 228352
        %v1435 = vsel %vm1434, %v1427, %v1429
        %v1436 = vsel %vm1434, %v1429, %v1431
        %v1437 = vsel %vm1434, %v1431, %v1433
        %1441 = vst [vmem:[#allocation2 + $0x300] sm:$0xff] %v1435
        %1442 = vst [vmem:[#allocation2 + $0x308] sm:$0xff] %v1436
        %1443 = vst [vmem:[#allocation2 + $0x310] sm:$0xff] %v1437
        %v1444 = vld [vmem:[%s181] sm:$0xff]
        %v1445 = vld [vmem:[%s181 + $0x8] sm:$0xff]
        %v1446 = vld [vmem:[%s181 + $0x14] sm:$0xff]
        %v1447 = vld [vmem:[%s181 + $0x1c] sm:$0xff]
        %v1452 = vunpack.c.l.b16 %v1444
        %v1453 = vunpack.c.h.b16 %v1444
        %v1454 = vunpack.c.l.b16 %v1445
        %v1455 = vunpack.c.h.b16 %v1445
        %v1456 = vunpack.c.l.b16 %v1446
        %v1457 = vunpack.c.h.b16 %v1446
        %v1458 = vunpack.c.l.b16 %v1447
        %v1459 = vunpack.c.h.b16 %v1447
        %v1460 = vpack.c.b16 %v1456, %v1452
        %v1461 = vpack.c.b16 %v1457, %v1453
        %v1462 = vpack.c.b16 %v1458, %v1454
        %v1463 = vpack.c.b16 %v1459, %v1455
        %1464 = vrot.lane.b32.xlu0 %v1460, 27
        %v1465 = vpop.permute.xlu0 %1464
        %1466 = vrot.lane.b32.xlu0 %v1461, 27
        %v1467 = vpop.permute.xlu0 %1466
        %1468 = vrot.lane.b32.xlu0 %v1462, 27
        %v1469 = vpop.permute.xlu0 %1468
        %1470 = vrot.lane.b32.xlu0 %v1463, 27
        %v1471 = vpop.permute.xlu0 %1470
        %vm1472 = vcmask 220160
        %v1473 = vsel %vm1472, %v1465, %v1467
        %v1474 = vsel %vm1472, %v1467, %v1469
        %v1475 = vsel %vm1472, %v1469, %v1471
        %1479 = vst [vmem:[#allocation2 + $0x318] sm:$0xff] %v1473
        %1480 = vst [vmem:[#allocation2 + $0x320] sm:$0xff] %v1474
        %1481 = vst [vmem:[#allocation2 + $0x328] sm:$0xff] %v1475
        %v1482 = vld [vmem:[%s181] sm:$0xff]
        %v1483 = vld [vmem:[%s181 + $0x8] sm:$0xff]
        %v1484 = vld [vmem:[%s181 + $0x14] sm:$0xff]
        %v1485 = vld [vmem:[%s181 + $0x1c] sm:$0xff]
        %v1490 = vunpack.c.l.b16 %v1482
        %v1491 = vunpack.c.h.b16 %v1482
        %v1492 = vunpack.c.l.b16 %v1483
        %v1493 = vunpack.c.h.b16 %v1483
        %v1494 = vunpack.c.l.b16 %v1484
        %v1495 = vunpack.c.h.b16 %v1484
        %v1496 = vunpack.c.l.b16 %v1485
        %v1497 = vunpack.c.h.b16 %v1485
        %v1498 = vpack.c.b16 %v1494, %v1490
        %v1499 = vpack.c.b16 %v1495, %v1491
        %v1500 = vpack.c.b16 %v1496, %v1492
        %v1501 = vpack.c.b16 %v1497, %v1493
        %1502 = vrot.lane.b32.xlu0 %v1498, 26
        %v1503 = vpop.permute.xlu0 %1502
        %1504 = vrot.lane.b32.xlu0 %v1499, 26
        %v1505 = vpop.permute.xlu0 %1504
        %1506 = vrot.lane.b32.xlu0 %v1500, 26
        %v1507 = vpop.permute.xlu0 %1506
        %1508 = vrot.lane.b32.xlu0 %v1501, 26
        %v1509 = vpop.permute.xlu0 %1508
        %vm1510 = vcmask 211968
        %v1511 = vsel %vm1510, %v1503, %v1505
        %v1512 = vsel %vm1510, %v1505, %v1507
        %v1513 = vsel %vm1510, %v1507, %v1509
        %1517 = vst [vmem:[#allocation2 + $0x330] sm:$0xff] %v1511
        %1518 = vst [vmem:[#allocation2 + $0x338] sm:$0xff] %v1512
        %1519 = vst [vmem:[#allocation2 + $0x340] sm:$0xff] %v1513
        %v1520 = vld [vmem:[%s181] sm:$0xff]
        %v1521 = vld [vmem:[%s181 + $0x8] sm:$0xff]
        %v1522 = vld [vmem:[%s181 + $0x14] sm:$0xff]
        %v1523 = vld [vmem:[%s181 + $0x1c] sm:$0xff]
        %v1528 = vunpack.c.l.b16 %v1520
        %v1529 = vunpack.c.h.b16 %v1520
        %v1530 = vunpack.c.l.b16 %v1521
        %v1531 = vunpack.c.h.b16 %v1521
        %v1532 = vunpack.c.l.b16 %v1522
        %v1533 = vunpack.c.h.b16 %v1522
        %v1534 = vunpack.c.l.b16 %v1523
        %v1535 = vunpack.c.h.b16 %v1523
        %v1536 = vpack.c.b16 %v1532, %v1528
        %v1537 = vpack.c.b16 %v1533, %v1529
        %v1538 = vpack.c.b16 %v1534, %v1530
        %v1539 = vpack.c.b16 %v1535, %v1531
        %1540 = vrot.lane.b32.xlu0 %v1536, 8
        %v1541 = vpop.permute.xlu0 %1540
        %1542 = vrot.lane.b32.xlu0 %v1537, 8
        %v1543 = vpop.permute.xlu0 %1542
        %1544 = vrot.lane.b32.xlu0 %v1538, 8
        %v1545 = vpop.permute.xlu0 %1544
        %1546 = vrot.lane.b32.xlu0 %v1539, 8
        %v1547 = vpop.permute.xlu0 %1546
        %vm1548 = vcmask 64512
        %v1549 = vsel %vm1548, %v1541, %v1543
        %v1550 = vsel %vm1548, %v1543, %v1545
        %v1551 = vsel %vm1548, %v1545, %v1547
        %1555 = vst [vmem:[#allocation2 + $0x348] sm:$0xff] %v1549
        %1556 = vst [vmem:[#allocation2 + $0x350] sm:$0xff] %v1550
        %1557 = vst [vmem:[#allocation2 + $0x358] sm:$0xff] %v1551
        %v1558 = vld [vmem:[%s181] sm:$0xff]
        %v1559 = vld [vmem:[%s181 + $0x8] sm:$0xff]
        %v1560 = vld [vmem:[%s181 + $0x14] sm:$0xff]
        %v1561 = vld [vmem:[%s181 + $0x1c] sm:$0xff]
        %v1566 = vunpack.c.l.b16 %v1558
        %v1567 = vunpack.c.h.b16 %v1558
        %v1568 = vunpack.c.l.b16 %v1559
        %v1569 = vunpack.c.h.b16 %v1559
        %v1570 = vunpack.c.l.b16 %v1560
        %v1571 = vunpack.c.h.b16 %v1560
        %v1572 = vunpack.c.l.b16 %v1561
        %v1573 = vunpack.c.h.b16 %v1561
        %v1574 = vpack.c.b16 %v1570, %v1566
        %v1575 = vpack.c.b16 %v1571, %v1567
        %v1576 = vpack.c.b16 %v1572, %v1568
        %v1577 = vpack.c.b16 %v1573, %v1569
        %1578 = vrot.lane.b32.xlu0 %v1574, 7
        %v1579 = vpop.permute.xlu0 %1578
        %1580 = vrot.lane.b32.xlu0 %v1575, 7
        %v1581 = vpop.permute.xlu0 %1580
        %1582 = vrot.lane.b32.xlu0 %v1576, 7
        %v1583 = vpop.permute.xlu0 %1582
        %1584 = vrot.lane.b32.xlu0 %v1577, 7
        %v1585 = vpop.permute.xlu0 %1584
        %vm1586 = vcmask 56320
        %v1587 = vsel %vm1586, %v1579, %v1581
        %v1588 = vsel %vm1586, %v1581, %v1583
        %v1589 = vsel %vm1586, %v1583, %v1585
        %1593 = vst [vmem:[#allocation2 + $0x360] sm:$0xff] %v1587
        %1594 = vst [vmem:[#allocation2 + $0x368] sm:$0xff] %v1588
        %1595 = vst [vmem:[#allocation2 + $0x370] sm:$0xff] %v1589
        %v1596 = vld [vmem:[%s181] sm:$0xff]
        %v1597 = vld [vmem:[%s181 + $0x8] sm:$0xff]
        %v1598 = vld [vmem:[%s181 + $0x14] sm:$0xff]
        %v1599 = vld [vmem:[%s181 + $0x1c] sm:$0xff]
        %v1604 = vunpack.c.l.b16 %v1596
        %v1605 = vunpack.c.h.b16 %v1596
        %v1606 = vunpack.c.l.b16 %v1597
        %v1607 = vunpack.c.h.b16 %v1597
        %v1608 = vunpack.c.l.b16 %v1598
        %v1609 = vunpack.c.h.b16 %v1598
        %v1610 = vunpack.c.l.b16 %v1599
        %v1611 = vunpack.c.h.b16 %v1599
        %v1612 = vpack.c.b16 %v1608, %v1604
        %v1613 = vpack.c.b16 %v1609, %v1605
        %v1614 = vpack.c.b16 %v1610, %v1606
        %v1615 = vpack.c.b16 %v1611, %v1607
        %1616 = vrot.lane.b32.xlu0 %v1612, 6
        %v1617 = vpop.permute.xlu0 %1616
        %1618 = vrot.lane.b32.xlu0 %v1613, 6
        %v1619 = vpop.permute.xlu0 %1618
        %1620 = vrot.lane.b32.xlu0 %v1614, 6
        %v1621 = vpop.permute.xlu0 %1620
        %1622 = vrot.lane.b32.xlu0 %v1615, 6
        %v1623 = vpop.permute.xlu0 %1622
        %vm1624 = vcmask 48128
        %v1625 = vsel %vm1624, %v1617, %v1619
        %v1626 = vsel %vm1624, %v1619, %v1621
        %v1627 = vsel %vm1624, %v1621, %v1623
        %1631 = vst [vmem:[#allocation2 + $0x378] sm:$0xff] %v1625
        %1632 = vst [vmem:[#allocation2 + $0x380] sm:$0xff] %v1626
        %1633 = vst [vmem:[#allocation2 + $0x388] sm:$0xff] %v1627
        %v1634 = vld [vmem:[%s181] sm:$0xff]
        %v1635 = vld [vmem:[%s181 + $0x8] sm:$0xff]
        %v1636 = vld [vmem:[%s181 + $0x14] sm:$0xff]
        %v1637 = vld [vmem:[%s181 + $0x1c] sm:$0xff]
        %v1642 = vunpack.c.l.b16 %v1634
        %v1643 = vunpack.c.h.b16 %v1634
        %v1644 = vunpack.c.l.b16 %v1635
        %v1645 = vunpack.c.h.b16 %v1635
        %v1646 = vunpack.c.l.b16 %v1636
        %v1647 = vunpack.c.h.b16 %v1636
        %v1648 = vunpack.c.l.b16 %v1637
        %v1649 = vunpack.c.h.b16 %v1637
        %v1650 = vpack.c.b16 %v1646, %v1642
        %v1651 = vpack.c.b16 %v1647, %v1643
        %v1652 = vpack.c.b16 %v1648, %v1644
        %v1653 = vpack.c.b16 %v1649, %v1645
        %1654 = vrot.lane.b32.xlu0 %v1650, 5
        %v1655 = vpop.permute.xlu0 %1654
        %1656 = vrot.lane.b32.xlu0 %v1651, 5
        %v1657 = vpop.permute.xlu0 %1656
        %1658 = vrot.lane.b32.xlu0 %v1652, 5
        %v1659 = vpop.permute.xlu0 %1658
        %1660 = vrot.lane.b32.xlu0 %v1653, 5
        %v1661 = vpop.permute.xlu0 %1660
        %vm1662 = vcmask 39936
        %v1663 = vsel %vm1662, %v1655, %v1657
        %v1664 = vsel %vm1662, %v1657, %v1659
        %v1665 = vsel %vm1662, %v1659, %v1661
        %1669 = vst [vmem:[#allocation2 + $0x390] sm:$0xff] %v1663
        %1670 = vst [vmem:[#allocation2 + $0x398] sm:$0xff] %v1664
        %1671 = vst [vmem:[#allocation2 + $0x3a0] sm:$0xff] %v1665
        %v1672 = vld [vmem:[%s181] sm:$0xff]
        %v1673 = vld [vmem:[%s181 + $0x8] sm:$0xff]
        %v1674 = vld [vmem:[%s181 + $0x14] sm:$0xff]
        %v1675 = vld [vmem:[%s181 + $0x1c] sm:$0xff]
        %v1680 = vunpack.c.l.b16 %v1672
        %v1681 = vunpack.c.h.b16 %v1672
        %v1682 = vunpack.c.l.b16 %v1673
        %v1683 = vunpack.c.h.b16 %v1673
        %v1684 = vunpack.c.l.b16 %v1674
        %v1685 = vunpack.c.h.b16 %v1674
        %v1686 = vunpack.c.l.b16 %v1675
        %v1687 = vunpack.c.h.b16 %v1675
        %v1688 = vpack.c.b16 %v1684, %v1680
        %v1689 = vpack.c.b16 %v1685, %v1681
        %v1690 = vpack.c.b16 %v1686, %v1682
        %v1691 = vpack.c.b16 %v1687, %v1683
        %1692 = vrot.lane.b32.xlu0 %v1688, 4
        %v1693 = vpop.permute.xlu0 %1692
        %1694 = vrot.lane.b32.xlu0 %v1689, 4
        %v1695 = vpop.permute.xlu0 %1694
        %1696 = vrot.lane.b32.xlu0 %v1690, 4
        %v1697 = vpop.permute.xlu0 %1696
        %1698 = vrot.lane.b32.xlu0 %v1691, 4
        %v1699 = vpop.permute.xlu0 %1698
        %vm1700 = vcmask 31744
        %v1701 = vsel %vm1700, %v1693, %v1695
        %v1702 = vsel %vm1700, %v1695, %v1697
        %v1703 = vsel %vm1700, %v1697, %v1699
        %1707 = vst [vmem:[#allocation2 + $0x3a8] sm:$0xff] %v1701
        %1708 = vst [vmem:[#allocation2 + $0x3b0] sm:$0xff] %v1702
        %1709 = vst [vmem:[#allocation2 + $0x3b8] sm:$0xff] %v1703
        %v1710 = vld [vmem:[%s181] sm:$0xff]
        %v1711 = vld [vmem:[%s181 + $0x8] sm:$0xff]
        %v1712 = vld [vmem:[%s181 + $0x14] sm:$0xff]
        %v1713 = vld [vmem:[%s181 + $0x1c] sm:$0xff]
        %v1718 = vunpack.c.l.b16 %v1710
        %v1719 = vunpack.c.h.b16 %v1710
        %v1720 = vunpack.c.l.b16 %v1711
        %v1721 = vunpack.c.h.b16 %v1711
        %v1722 = vunpack.c.l.b16 %v1712
        %v1723 = vunpack.c.h.b16 %v1712
        %v1724 = vunpack.c.l.b16 %v1713
        %v1725 = vunpack.c.h.b16 %v1713
        %v1726 = vpack.c.b16 %v1722, %v1718
        %v1727 = vpack.c.b16 %v1723, %v1719
        %v1728 = vpack.c.b16 %v1724, %v1720
        %v1729 = vpack.c.b16 %v1725, %v1721
        %1730 = vrot.lane.b32.xlu0 %v1726, 3
        %v1731 = vpop.permute.xlu0 %1730
        %1732 = vrot.lane.b32.xlu0 %v1727, 3
        %v1733 = vpop.permute.xlu0 %1732
        %1734 = vrot.lane.b32.xlu0 %v1728, 3
        %v1735 = vpop.permute.xlu0 %1734
        %1736 = vrot.lane.b32.xlu0 %v1729, 3
        %v1737 = vpop.permute.xlu0 %1736
        %vm1738 = vcmask 23552
        %v1739 = vsel %vm1738, %v1731, %v1733
        %v1740 = vsel %vm1738, %v1733, %v1735
        %v1741 = vsel %vm1738, %v1735, %v1737
        %1745 = vst [vmem:[#allocation2 + $0x3c0] sm:$0xff] %v1739
        %1746 = vst [vmem:[#allocation2 + $0x3c8] sm:$0xff] %v1740
        %1747 = vst [vmem:[#allocation2 + $0x3d0] sm:$0xff] %v1741
        %v1748 = vld [vmem:[%s181] sm:$0xff]
        %v1749 = vld [vmem:[%s181 + $0x8] sm:$0xff]
        %v1750 = vld [vmem:[%s181 + $0x14] sm:$0xff]
        %v1751 = vld [vmem:[%s181 + $0x1c] sm:$0xff]
        %v1756 = vunpack.c.l.b16 %v1748
        %v1757 = vunpack.c.h.b16 %v1748
        %v1758 = vunpack.c.l.b16 %v1749
        %v1759 = vunpack.c.h.b16 %v1749
        %v1760 = vunpack.c.l.b16 %v1750
        %v1761 = vunpack.c.h.b16 %v1750
        %v1762 = vunpack.c.l.b16 %v1751
        %v1763 = vunpack.c.h.b16 %v1751
        %v1764 = vpack.c.b16 %v1760, %v1756
        %v1765 = vpack.c.b16 %v1761, %v1757
        %v1766 = vpack.c.b16 %v1762, %v1758
        %v1767 = vpack.c.b16 %v1763, %v1759
        %1768 = vrot.lane.b32.xlu0 %v1764, 2
        %v1769 = vpop.permute.xlu0 %1768
        %1770 = vrot.lane.b32.xlu0 %v1765, 2
        %v1771 = vpop.permute.xlu0 %1770
        %1772 = vrot.lane.b32.xlu0 %v1766, 2
        %v1773 = vpop.permute.xlu0 %1772
        %1774 = vrot.lane.b32.xlu0 %v1767, 2
        %v1775 = vpop.permute.xlu0 %1774
        %vm1776 = vcmask 15360
        %v1777 = vsel %vm1776, %v1769, %v1771
        %v1778 = vsel %vm1776, %v1771, %v1773
        %v1779 = vsel %vm1776, %v1773, %v1775
        %1783 = vst [vmem:[#allocation2 + $0x3d8] sm:$0xff] %v1777
        %1784 = vst [vmem:[#allocation2 + $0x3e0] sm:$0xff] %v1778
        %1785 = vst [vmem:[#allocation2 + $0x3e8] sm:$0xff] %v1779
        %v1786 = vld [vmem:[%s181 + $0x4] sm:$0xff]
        %v1787 = vld [vmem:[%s181 + $0xc] sm:$0xff]
        %v1788 = vld [vmem:[%s181 + $0x18] sm:$0xff]
        %v1789 = vld [vmem:[%s181 + $0x20] sm:$0xff]
        %v1794 = vunpack.c.l.b16 %v1786
        %v1795 = vunpack.c.h.b16 %v1786
        %v1796 = vunpack.c.l.b16 %v1787
        %v1797 = vunpack.c.h.b16 %v1787
        %v1798 = vunpack.c.l.b16 %v1788
        %v1799 = vunpack.c.h.b16 %v1788
        %v1800 = vunpack.c.l.b16 %v1789
        %v1801 = vunpack.c.h.b16 %v1789
        %v1802 = vpack.c.b16 %v1798, %v1794
        %v1803 = vpack.c.b16 %v1799, %v1795
        %v1804 = vpack.c.b16 %v1800, %v1796
        %v1805 = vpack.c.b16 %v1801, %v1797
        %1806 = vrot.lane.b32.xlu0 %v1802, 112
        %v1807 = vpop.permute.xlu0 %1806
        %1808 = vrot.lane.b32.xlu0 %v1803, 112
        %v1809 = vpop.permute.xlu0 %1808
        %1810 = vrot.lane.b32.xlu0 %v1804, 112
        %v1811 = vpop.permute.xlu0 %1810
        %1812 = vrot.lane.b32.xlu0 %v1805, 112
        %v1813 = vpop.permute.xlu0 %1812
        %vm1814 = vcmask 916480
        %v1815 = vsel %vm1814, %v1807, %v1809
        %v1816 = vsel %vm1814, %v1809, %v1811
        %v1817 = vsel %vm1814, %v1811, %v1813
        %1821 = vst [vmem:[#allocation2 + $0x3f0] sm:$0xff] %v1815
        %1822 = vst [vmem:[#allocation2 + $0x3f8] sm:$0xff] %v1816
        %1823 = vst [vmem:[#allocation2 + $0x400] sm:$0xff] %v1817
        %v1824 = vld [vmem:[%s181 + $0x4] sm:$0xff]
        %v1825 = vld [vmem:[%s181 + $0xc] sm:$0xff]
        %v1826 = vld [vmem:[%s181 + $0x18] sm:$0xff]
        %v1827 = vld [vmem:[%s181 + $0x20] sm:$0xff]
        %v1832 = vunpack.c.l.b16 %v1824
        %v1833 = vunpack.c.h.b16 %v1824
        %v1834 = vunpack.c.l.b16 %v1825
        %v1835 = vunpack.c.h.b16 %v1825
        %v1836 = vunpack.c.l.b16 %v1826
        %v1837 = vunpack.c.h.b16 %v1826
        %v1838 = vunpack.c.l.b16 %v1827
        %v1839 = vunpack.c.h.b16 %v1827
        %v1840 = vpack.c.b16 %v1836, %v1832
        %v1841 = vpack.c.b16 %v1837, %v1833
        %v1842 = vpack.c.b16 %v1838, %v1834
        %v1843 = vpack.c.b16 %v1839, %v1835
        %1844 = vrot.lane.b32.xlu0 %v1840, 111
        %v1845 = vpop.permute.xlu0 %1844
        %1846 = vrot.lane.b32.xlu0 %v1841, 111
        %v1847 = vpop.permute.xlu0 %1846
        %1848 = vrot.lane.b32.xlu0 %v1842, 111
        %v1849 = vpop.permute.xlu0 %1848
        %1850 = vrot.lane.b32.xlu0 %v1843, 111
        %v1851 = vpop.permute.xlu0 %1850
        %vm1852 = vcmask 908288
        %v1853 = vsel %vm1852, %v1845, %v1847
        %v1854 = vsel %vm1852, %v1847, %v1849
        %v1855 = vsel %vm1852, %v1849, %v1851
        %1859 = vst [vmem:[#allocation2 + $0x408] sm:$0xff] %v1853
        %1860 = vst [vmem:[#allocation2 + $0x410] sm:$0xff] %v1854
        %1861 = vst [vmem:[#allocation2 + $0x418] sm:$0xff] %v1855
        %v1862 = vld [vmem:[%s181 + $0x4] sm:$0xff]
        %v1863 = vld [vmem:[%s181 + $0xc] sm:$0xff]
        %v1864 = vld [vmem:[%s181 + $0x18] sm:$0xff]
        %v1865 = vld [vmem:[%s181 + $0x20] sm:$0xff]
        %v1870 = vunpack.c.l.b16 %v1862
        %v1871 = vunpack.c.h.b16 %v1862
        %v1872 = vunpack.c.l.b16 %v1863
        %v1873 = vunpack.c.h.b16 %v1863
        %v1874 = vunpack.c.l.b16 %v1864
        %v1875 = vunpack.c.h.b16 %v1864
        %v1876 = vunpack.c.l.b16 %v1865
        %v1877 = vunpack.c.h.b16 %v1865
        %v1878 = vpack.c.b16 %v1874, %v1870
        %v1879 = vpack.c.b16 %v1875, %v1871
        %v1880 = vpack.c.b16 %v1876, %v1872
        %v1881 = vpack.c.b16 %v1877, %v1873
        %1882 = vrot.lane.b32.xlu0 %v1878, 110
        %v1883 = vpop.permute.xlu0 %1882
        %1884 = vrot.lane.b32.xlu0 %v1879, 110
        %v1885 = vpop.permute.xlu0 %1884
        %1886 = vrot.lane.b32.xlu0 %v1880, 110
        %v1887 = vpop.permute.xlu0 %1886
        %1888 = vrot.lane.b32.xlu0 %v1881, 110
        %v1889 = vpop.permute.xlu0 %1888
        %vm1890 = vcmask 900096
        %v1891 = vsel %vm1890, %v1883, %v1885
        %v1892 = vsel %vm1890, %v1885, %v1887
        %v1893 = vsel %vm1890, %v1887, %v1889
        %1897 = vst [vmem:[#allocation2 + $0x420] sm:$0xff] %v1891
        %1898 = vst [vmem:[#allocation2 + $0x428] sm:$0xff] %v1892
        %1899 = vst [vmem:[#allocation2 + $0x430] sm:$0xff] %v1893
        %v1900 = vld [vmem:[%s181 + $0x4] sm:$0xff]
        %v1901 = vld [vmem:[%s181 + $0xc] sm:$0xff]
        %v1902 = vld [vmem:[%s181 + $0x18] sm:$0xff]
        %v1903 = vld [vmem:[%s181 + $0x20] sm:$0xff]
        %v1908 = vunpack.c.l.b16 %v1900
        %v1909 = vunpack.c.h.b16 %v1900
        %v1910 = vunpack.c.l.b16 %v1901
        %v1911 = vunpack.c.h.b16 %v1901
        %v1912 = vunpack.c.l.b16 %v1902
        %v1913 = vunpack.c.h.b16 %v1902
        %v1914 = vunpack.c.l.b16 %v1903
        %v1915 = vunpack.c.h.b16 %v1903
        %v1916 = vpack.c.b16 %v1912, %v1908
        %v1917 = vpack.c.b16 %v1913, %v1909
        %v1918 = vpack.c.b16 %v1914, %v1910
        %v1919 = vpack.c.b16 %v1915, %v1911
        %1920 = vrot.lane.b32.xlu0 %v1916, 109
        %v1921 = vpop.permute.xlu0 %1920
        %1922 = vrot.lane.b32.xlu0 %v1917, 109
        %v1923 = vpop.permute.xlu0 %1922
        %1924 = vrot.lane.b32.xlu0 %v1918, 109
        %v1925 = vpop.permute.xlu0 %1924
        %1926 = vrot.lane.b32.xlu0 %v1919, 109
        %v1927 = vpop.permute.xlu0 %1926
        %vm1928 = vcmask 891904
        %v1929 = vsel %vm1928, %v1921, %v1923
        %v1930 = vsel %vm1928, %v1923, %v1925
        %v1931 = vsel %vm1928, %v1925, %v1927
        %1935 = vst [vmem:[#allocation2 + $0x438] sm:$0xff] %v1929
        %1936 = vst [vmem:[#allocation2 + $0x440] sm:$0xff] %v1930
        %1937 = vst [vmem:[#allocation2 + $0x448] sm:$0xff] %v1931
        %v1938 = vld [vmem:[%s181 + $0x4] sm:$0xff]
        %v1939 = vld [vmem:[%s181 + $0xc] sm:$0xff]
        %v1940 = vld [vmem:[%s181 + $0x18] sm:$0xff]
        %v1941 = vld [vmem:[%s181 + $0x20] sm:$0xff]
        %v1946 = vunpack.c.l.b16 %v1938
        %v1947 = vunpack.c.h.b16 %v1938
        %v1948 = vunpack.c.l.b16 %v1939
        %v1949 = vunpack.c.h.b16 %v1939
        %v1950 = vunpack.c.l.b16 %v1940
        %v1951 = vunpack.c.h.b16 %v1940
        %v1952 = vunpack.c.l.b16 %v1941
        %v1953 = vunpack.c.h.b16 %v1941
        %v1954 = vpack.c.b16 %v1950, %v1946
        %v1955 = vpack.c.b16 %v1951, %v1947
        %v1956 = vpack.c.b16 %v1952, %v1948
        %v1957 = vpack.c.b16 %v1953, %v1949
        %1958 = vrot.lane.b32.xlu0 %v1954, 108
        %v1959 = vpop.permute.xlu0 %1958
        %1960 = vrot.lane.b32.xlu0 %v1955, 108
        %v1961 = vpop.permute.xlu0 %1960
        %1962 = vrot.lane.b32.xlu0 %v1956, 108
        %v1963 = vpop.permute.xlu0 %1962
        %1964 = vrot.lane.b32.xlu0 %v1957, 108
        %v1965 = vpop.permute.xlu0 %1964
        %vm1966 = vcmask 883712
        %v1967 = vsel %vm1966, %v1959, %v1961
        %v1968 = vsel %vm1966, %v1961, %v1963
        %v1969 = vsel %vm1966, %v1963, %v1965
        %1973 = vst [vmem:[#allocation2 + $0x450] sm:$0xff] %v1967
        %1974 = vst [vmem:[#allocation2 + $0x458] sm:$0xff] %v1968
        %1975 = vst [vmem:[#allocation2 + $0x460] sm:$0xff] %v1969
        %v1976 = vld [vmem:[%s181 + $0x4] sm:$0xff]
        %v1977 = vld [vmem:[%s181 + $0xc] sm:$0xff]
        %v1978 = vld [vmem:[%s181 + $0x18] sm:$0xff]
        %v1979 = vld [vmem:[%s181 + $0x20] sm:$0xff]
        %v1984 = vunpack.c.l.b16 %v1976
        %v1985 = vunpack.c.h.b16 %v1976
        %v1986 = vunpack.c.l.b16 %v1977
        %v1987 = vunpack.c.h.b16 %v1977
        %v1988 = vunpack.c.l.b16 %v1978
        %v1989 = vunpack.c.h.b16 %v1978
        %v1990 = vunpack.c.l.b16 %v1979
        %v1991 = vunpack.c.h.b16 %v1979
        %v1992 = vpack.c.b16 %v1988, %v1984
        %v1993 = vpack.c.b16 %v1989, %v1985
        %v1994 = vpack.c.b16 %v1990, %v1986
        %v1995 = vpack.c.b16 %v1991, %v1987
        %1996 = vrot.lane.b32.xlu0 %v1992, 107
        %v1997 = vpop.permute.xlu0 %1996
        %1998 = vrot.lane.b32.xlu0 %v1993, 107
        %v1999 = vpop.permute.xlu0 %1998
        %2000 = vrot.lane.b32.xlu0 %v1994, 107
        %v2001 = vpop.permute.xlu0 %2000
        %2002 = vrot.lane.b32.xlu0 %v1995, 107
        %v2003 = vpop.permute.xlu0 %2002
        %vm2004 = vcmask 875520
        %v2005 = vsel %vm2004, %v1997, %v1999
        %v2006 = vsel %vm2004, %v1999, %v2001
        %v2007 = vsel %vm2004, %v2001, %v2003
        %2011 = vst [vmem:[#allocation2 + $0x468] sm:$0xff] %v2005
        %2012 = vst [vmem:[#allocation2 + $0x470] sm:$0xff] %v2006
        %2013 = vst [vmem:[#allocation2 + $0x478] sm:$0xff] %v2007
        %v2014 = vld [vmem:[%s181 + $0x4] sm:$0xff]
        %v2015 = vld [vmem:[%s181 + $0xc] sm:$0xff]
        %v2016 = vld [vmem:[%s181 + $0x18] sm:$0xff]
        %v2017 = vld [vmem:[%s181 + $0x20] sm:$0xff]
        %v2022 = vunpack.c.l.b16 %v2014
        %v2023 = vunpack.c.h.b16 %v2014
        %v2024 = vunpack.c.l.b16 %v2015
        %v2025 = vunpack.c.h.b16 %v2015
        %v2026 = vunpack.c.l.b16 %v2016
        %v2027 = vunpack.c.h.b16 %v2016
        %v2028 = vunpack.c.l.b16 %v2017
        %v2029 = vunpack.c.h.b16 %v2017
        %v2030 = vpack.c.b16 %v2026, %v2022
        %v2031 = vpack.c.b16 %v2027, %v2023
        %v2032 = vpack.c.b16 %v2028, %v2024
        %v2033 = vpack.c.b16 %v2029, %v2025
        %2034 = vrot.lane.b32.xlu0 %v2030, 106
        %v2035 = vpop.permute.xlu0 %2034
        %2036 = vrot.lane.b32.xlu0 %v2031, 106
        %v2037 = vpop.permute.xlu0 %2036
        %2038 = vrot.lane.b32.xlu0 %v2032, 106
        %v2039 = vpop.permute.xlu0 %2038
        %2040 = vrot.lane.b32.xlu0 %v2033, 106
        %v2041 = vpop.permute.xlu0 %2040
        %vm2042 = vcmask 867328
        %v2043 = vsel %vm2042, %v2035, %v2037
        %v2044 = vsel %vm2042, %v2037, %v2039
        %v2045 = vsel %vm2042, %v2039, %v2041
        %2049 = vst [vmem:[#allocation2 + $0x480] sm:$0xff] %v2043
        %2050 = vst [vmem:[#allocation2 + $0x488] sm:$0xff] %v2044
        %2051 = vst [vmem:[#allocation2 + $0x490] sm:$0xff] %v2045
        %v2052 = vld [vmem:[#allocation3] sm:$0xff]
        %v2053 = vld [vmem:[#allocation3 + $0x8] sm:$0xff]
        %v2054 = vld [vmem:[#allocation3 + $0x10] sm:$0xff]
        %v2055 = vld [vmem:[#allocation3 + $0x18] sm:$0xf]
        %v2056 = vld [vmem:[#allocation3 + $0x1c] sm:$0xff]
        %v2057 = vld [vmem:[#allocation3 + $0x24] sm:$0xff]
        %v2058 = vld [vmem:[#allocation3 + $0x2c] sm:$0xff]
        %v2059 = vld [vmem:[#allocation3 + $0x34] sm:$0xf]
        %v2060 = vld [vmem:[#allocation3 + $0x38] sm:$0xff]
        %v2061 = vld [vmem:[#allocation3 + $0x40] sm:$0xff]
        %v2062 = vld [vmem:[#allocation3 + $0x48] sm:$0xff]
        %v2063 = vld [vmem:[#allocation3 + $0x50] sm:$0xf]
        %v2064 = vld [vmem:[#allocation3 + $0x54] sm:$0xff]
        %v2065 = vld [vmem:[#allocation3 + $0x5c] sm:$0xff]
        %v2066 = vld [vmem:[#allocation3 + $0x64] sm:$0xff]
        %v2067 = vld [vmem:[#allocation3 + $0x6c] sm:$0xf]
        %v2068 = vld [vmem:[#allocation3 + $0x70] sm:$0xff]
        %v2069 = vld [vmem:[#allocation3 + $0x78] sm:$0xff]
        %v2070 = vld [vmem:[#allocation3 + $0x80] sm:$0xff]
        %v2071 = vld [vmem:[#allocation3 + $0x88] sm:$0xf]
        %v2072 = vld [vmem:[#allocation3 + $0x8c] sm:$0xff]
        %v2073 = vld [vmem:[#allocation3 + $0x94] sm:$0xff]
        %v2074 = vld [vmem:[#allocation3 + $0x9c] sm:$0xff]
        %v2075 = vld [vmem:[#allocation3 + $0xa4] sm:$0xf]
        %v2076 = vld [vmem:[#allocation2] sm:$0xff]
        %v2077 = vld [vmem:[#allocation2 + $0x8] sm:$0xff]
        %v2078 = vld [vmem:[#allocation2 + $0x10] sm:$0xff]
        %v2079 = vld [vmem:[#allocation2 + $0x18] sm:$0xff]
        %v2080 = vld [vmem:[#allocation2 + $0x20] sm:$0xff]
        %v2081 = vld [vmem:[#allocation2 + $0x28] sm:$0xff]
        %v2082 = vld [vmem:[#allocation2 + $0x30] sm:$0xff]
        %v2083 = vld [vmem:[#allocation2 + $0x38] sm:$0xff]
        %v2084 = vld [vmem:[#allocation2 + $0x40] sm:$0xff]
        %v2085 = vld [vmem:[#allocation2 + $0x48] sm:$0xff]
        %v2086 = vld [vmem:[#allocation2 + $0x50] sm:$0xff]
        %v2087 = vld [vmem:[#allocation2 + $0x58] sm:$0xff]
        %v2088 = vld [vmem:[#allocation2 + $0x60] sm:$0xff]
        %v2089 = vld [vmem:[#allocation2 + $0x68] sm:$0xff]
        %v2090 = vld [vmem:[#allocation2 + $0x70] sm:$0xff]
        %v2091 = vld [vmem:[#allocation2 + $0x78] sm:$0xff]
        %v2092 = vld [vmem:[#allocation2 + $0x80] sm:$0xff]
        %v2093 = vld [vmem:[#allocation2 + $0x88] sm:$0xff]
        %v2094 = vld [vmem:[#allocation2 + $0x90] sm:$0xff]
        %v2095 = vld [vmem:[#allocation2 + $0x98] sm:$0xff]
        %v2096 = vld [vmem:[#allocation2 + $0xa0] sm:$0xff]
        %v2097 = vld [vmem:[#allocation2 + $0xa8] sm:$0xff]
        %v2098 = vld [vmem:[#allocation2 + $0xb0] sm:$0xff]
        %v2099 = vld [vmem:[#allocation2 + $0xb8] sm:$0xff]
        %v2100 = vld [vmem:[#allocation2 + $0xc0] sm:$0xff]
        %v2101 = vld [vmem:[#allocation2 + $0xc8] sm:$0xff]
        %v2102 = vld [vmem:[#allocation2 + $0xd0] sm:$0xff]
        %v2103 = vld [vmem:[#allocation2 + $0xd8] sm:$0xff]
        %v2104 = vld [vmem:[#allocation2 + $0xe0] sm:$0xff]
        %v2105 = vld [vmem:[#allocation2 + $0xe8] sm:$0xff]
        %v2106 = vld [vmem:[#allocation2 + $0xf0] sm:$0xff]
        %v2107 = vld [vmem:[#allocation2 + $0xf8] sm:$0xff]
        %v2108 = vld [vmem:[#allocation2 + $0x100] sm:$0xff]
        %v2109 = vld [vmem:[#allocation2 + $0x108] sm:$0xff]
        %v2110 = vld [vmem:[#allocation2 + $0x110] sm:$0xff]
        %v2111 = vld [vmem:[#allocation2 + $0x118] sm:$0xff]
        %v2112 = vld [vmem:[#allocation2 + $0x120] sm:$0xff]
        %v2113 = vld [vmem:[#allocation2 + $0x128] sm:$0xff]
        %v2114 = vld [vmem:[#allocation2 + $0x130] sm:$0xff]
        %v2115 = vld [vmem:[#allocation2 + $0x138] sm:$0xff]
        %v2116 = vld [vmem:[#allocation2 + $0x140] sm:$0xff]
        %v2117 = vld [vmem:[#allocation2 + $0x148] sm:$0xff]
        %v2118 = vld [vmem:[#allocation2 + $0x150] sm:$0xff]
        %v2119 = vld [vmem:[#allocation2 + $0x158] sm:$0xff]
        %v2120 = vld [vmem:[#allocation2 + $0x160] sm:$0xff]
        %v2121 = vld [vmem:[#allocation2 + $0x168] sm:$0xff]
        %v2122 = vld [vmem:[#allocation2 + $0x170] sm:$0xff]
        %v2123 = vld [vmem:[#allocation2 + $0x178] sm:$0xff]
        %v2124 = vld [vmem:[#allocation2 + $0x180] sm:$0xff]
        %v2125 = vld [vmem:[#allocation2 + $0x188] sm:$0xff]
        %v2126 = vld [vmem:[#allocation2 + $0x190] sm:$0xff]
        %v2127 = vld [vmem:[#allocation2 + $0x198] sm:$0xff]
        %v2128 = vld [vmem:[#allocation2 + $0x1a0] sm:$0xff]
        %v2129 = vld [vmem:[#allocation2 + $0x1a8] sm:$0xff]
        %v2130 = vld [vmem:[#allocation2 + $0x1b0] sm:$0xff]
        %v2131 = vld [vmem:[#allocation2 + $0x1b8] sm:$0xff]
        %v2132 = vld [vmem:[#allocation2 + $0x1c0] sm:$0xff]
        %v2133 = vld [vmem:[#allocation2 + $0x1c8] sm:$0xff]
        %v2134 = vld [vmem:[#allocation2 + $0x1d0] sm:$0xff]
        %v2135 = vld [vmem:[#allocation2 + $0x1d8] sm:$0xff]
        %v2136 = vld [vmem:[#allocation2 + $0x1e0] sm:$0xff]
        %v2137 = vld [vmem:[#allocation2 + $0x1e8] sm:$0xff]
        %v2138 = vld [vmem:[#allocation2 + $0x1f0] sm:$0xff]
        %v2139 = vld [vmem:[#allocation2 + $0x1f8] sm:$0xff]
        %v2140 = vld [vmem:[#allocation2 + $0x200] sm:$0xff]
        %v2141 = vld [vmem:[#allocation2 + $0x208] sm:$0xff]
        %v2142 = vld [vmem:[#allocation2 + $0x210] sm:$0xff]
        %v2143 = vld [vmem:[#allocation2 + $0x218] sm:$0xff]
        %v2144 = vld [vmem:[#allocation2 + $0x220] sm:$0xff]
        %v2145 = vld [vmem:[#allocation2 + $0x228] sm:$0xff]
        %v2146 = vld [vmem:[#allocation2 + $0x230] sm:$0xff]
        %v2147 = vld [vmem:[#allocation2 + $0x238] sm:$0xff]
        %v2148 = vld [vmem:[#allocation2 + $0x240] sm:$0xff]
        %v2149 = vld [vmem:[#allocation2 + $0x248] sm:$0xff]
        %v2150 = vld [vmem:[#allocation2 + $0x250] sm:$0xff]
        %v2151 = vld [vmem:[#allocation2 + $0x258] sm:$0xff]
        %v2152 = vld [vmem:[#allocation2 + $0x260] sm:$0xff]
        %v2153 = vld [vmem:[#allocation2 + $0x268] sm:$0xff]
        %v2154 = vld [vmem:[#allocation2 + $0x270] sm:$0xff]
        %v2155 = vld [vmem:[#allocation2 + $0x278] sm:$0xff]
        %v2156 = vld [vmem:[#allocation2 + $0x280] sm:$0xff]
        %v2157 = vld [vmem:[#allocation2 + $0x288] sm:$0xff]
        %v2158 = vld [vmem:[#allocation2 + $0x290] sm:$0xff]
        %v2159 = vld [vmem:[#allocation2 + $0x298] sm:$0xff]
        %v2160 = vld [vmem:[#allocation2 + $0x2a0] sm:$0xff]
        %v2161 = vld [vmem:[#allocation2 + $0x2a8] sm:$0xff]
        %v2162 = vld [vmem:[#allocation2 + $0x2b0] sm:$0xff]
        %v2163 = vld [vmem:[#allocation2 + $0x2b8] sm:$0xff]
        %v2164 = vld [vmem:[#allocation2 + $0x2c0] sm:$0xff]
        %v2165 = vld [vmem:[#allocation2 + $0x2c8] sm:$0xff]
        %v2166 = vld [vmem:[#allocation2 + $0x2d0] sm:$0xff]
        %v2167 = vld [vmem:[#allocation2 + $0x2d8] sm:$0xff]
        %v2168 = vld [vmem:[#allocation2 + $0x2e0] sm:$0xff]
        %v2169 = vld [vmem:[#allocation2 + $0x2e8] sm:$0xff]
        %v2170 = vld [vmem:[#allocation2 + $0x2f0] sm:$0xff]
        %v2171 = vld [vmem:[#allocation2 + $0x2f8] sm:$0xff]
        %v2172 = vld [vmem:[#allocation2 + $0x300] sm:$0xff]
        %v2173 = vld [vmem:[#allocation2 + $0x308] sm:$0xff]
        %v2174 = vld [vmem:[#allocation2 + $0x310] sm:$0xff]
        %v2175 = vld [vmem:[#allocation2 + $0x318] sm:$0xff]
        %v2176 = vld [vmem:[#allocation2 + $0x320] sm:$0xff]
        %v2177 = vld [vmem:[#allocation2 + $0x328] sm:$0xff]
        %v2178 = vld [vmem:[#allocation2 + $0x330] sm:$0xff]
        %v2179 = vld [vmem:[#allocation2 + $0x338] sm:$0xff]
        %v2180 = vld [vmem:[#allocation2 + $0x340] sm:$0xff]
        %v2181 = vld [vmem:[#allocation2 + $0x348] sm:$0xff]
        %v2182 = vld [vmem:[#allocation2 + $0x350] sm:$0xff]
        %v2183 = vld [vmem:[#allocation2 + $0x358] sm:$0xff]
        %v2184 = vld [vmem:[#allocation2 + $0x360] sm:$0xff]
        %v2185 = vld [vmem:[#allocation2 + $0x368] sm:$0xff]
        %v2186 = vld [vmem:[#allocation2 + $0x370] sm:$0xff]
        %v2187 = vld [vmem:[#allocation2 + $0x378] sm:$0xff]
        %v2188 = vld [vmem:[#allocation2 + $0x380] sm:$0xff]
        %v2189 = vld [vmem:[#allocation2 + $0x388] sm:$0xff]
        %v2190 = vld [vmem:[#allocation2 + $0x390] sm:$0xff]
        %v2191 = vld [vmem:[#allocation2 + $0x398] sm:$0xff]
        %v2192 = vld [vmem:[#allocation2 + $0x3a0] sm:$0xff]
        %v2193 = vld [vmem:[#allocation2 + $0x3a8] sm:$0xff]
        %v2194 = vld [vmem:[#allocation2 + $0x3b0] sm:$0xff]
        %v2195 = vld [vmem:[#allocation2 + $0x3b8] sm:$0xff]
        %v2196 = vld [vmem:[#allocation2 + $0x3c0] sm:$0xff]
        %v2197 = vld [vmem:[#allocation2 + $0x3c8] sm:$0xff]
        %v2198 = vld [vmem:[#allocation2 + $0x3d0] sm:$0xff]
        %v2199 = vld [vmem:[#allocation2 + $0x3d8] sm:$0xff]
        %v2200 = vld [vmem:[#allocation2 + $0x3e0] sm:$0xff]
        %v2201 = vld [vmem:[#allocation2 + $0x3e8] sm:$0xff]
        %v2202 = vld [vmem:[#allocation2 + $0x3f0] sm:$0xff]
        %v2203 = vld [vmem:[#allocation2 + $0x3f8] sm:$0xff]
        %v2204 = vld [vmem:[#allocation2 + $0x400] sm:$0xff]
        %v2205 = vld [vmem:[#allocation2 + $0x408] sm:$0xff]
        %v2206 = vld [vmem:[#allocation2 + $0x410] sm:$0xff]
        %v2207 = vld [vmem:[#allocation2 + $0x418] sm:$0xff]
        %v2208 = vld [vmem:[#allocation2 + $0x420] sm:$0xff]
        %v2209 = vld [vmem:[#allocation2 + $0x428] sm:$0xff]
        %v2210 = vld [vmem:[#allocation2 + $0x430] sm:$0xff]
        %v2211 = vld [vmem:[#allocation2 + $0x438] sm:$0xff]
        %v2212 = vld [vmem:[#allocation2 + $0x440] sm:$0xff]
        %v2213 = vld [vmem:[#allocation2 + $0x448] sm:$0xff]
        %v2214 = vld [vmem:[#allocation2 + $0x450] sm:$0xff]
        %v2215 = vld [vmem:[#allocation2 + $0x458] sm:$0xff]
        %v2216 = vld [vmem:[#allocation2 + $0x460] sm:$0xff]
        %v2217 = vld [vmem:[#allocation2 + $0x468] sm:$0xff]
        %v2218 = vld [vmem:[#allocation2 + $0x470] sm:$0xff]
        %v2219 = vld [vmem:[#allocation2 + $0x478] sm:$0xff]
        %v2220 = vld [vmem:[#allocation2 + $0x480] sm:$0xff]
        %v2221 = vld [vmem:[#allocation2 + $0x488] sm:$0xff]
        %v2222 = vld [vmem:[#allocation2 + $0x490] sm:$0xff]
        %v2223 = vld [vmem:[%s2] sm:$0xff]
        %v2224 = vld [vmem:[%s2 + $0x8] sm:$0xff]
        %v2225 = vld [vmem:[%s2 + $0x10] sm:$0xff]
        %v2226 = vld [vmem:[%s2 + $0x18] sm:$0xff]
        %v2227 = vld [vmem:[%s2 + $0x20] sm:$0xff]
        %v2228 = vld [vmem:[%s2 + $0x28] sm:$0xff]
        %2230 = vset.pattern.permute.xlu0 0
        %2231 = vperm.xlu0 %2230, %v2223
        %v2232 = vpop.permute.xlu0 %2231
        %2235 = vset.pattern.permute.xlu0 0
        %2236 = vperm.xlu0 %2235, %v2224
        %v2237 = vpop.permute.xlu0 %2236
        %2240 = vset.pattern.permute.xlu0 0
        %2241 = vperm.xlu0 %2240, %v2225
        %v2242 = vpop.permute.xlu0 %2241
        %2245 = vset.pattern.permute.xlu0 0
        %2246 = vperm.xlu0 %2245, %v2226
        %v2247 = vpop.permute.xlu0 %2246
        %2250 = vset.pattern.permute.xlu0 0
        %2251 = vperm.xlu0 %2250, %v2227
        %v2252 = vpop.permute.xlu0 %2251
        %2255 = vset.pattern.permute.xlu0 0
        %2256 = vperm.xlu0 %2255, %v2228
        %v2257 = vpop.permute.xlu0 %2256
        %v2283 = vunpack.c.l.b16 %v2052
        %v2284 = vunpack.c.h.b16 %v2052
        %v2285 = vunpack.c.l.b16 %v2053
        %v2286 = vunpack.c.h.b16 %v2053
        %v2287 = vunpack.c.l.b16 %v2054
        %v2288 = vunpack.c.h.b16 %v2054
        %v2289 = vunpack.c.l.b16 %v2055
        %v2290 = vunpack.c.l.b16 %v2056
        %v2291 = vunpack.c.h.b16 %v2056
        %v2292 = vunpack.c.l.b16 %v2057
        %v2293 = vunpack.c.h.b16 %v2057
        %v2294 = vunpack.c.l.b16 %v2058
        %v2295 = vunpack.c.h.b16 %v2058
        %v2296 = vunpack.c.l.b16 %v2059
        %v2297 = vunpack.c.l.b16 %v2060
        %v2298 = vunpack.c.h.b16 %v2060
        %v2299 = vunpack.c.l.b16 %v2061
        %v2300 = vunpack.c.h.b16 %v2061
        %v2301 = vunpack.c.l.b16 %v2062
        %v2302 = vunpack.c.h.b16 %v2062
        %v2303 = vunpack.c.l.b16 %v2063
        %v2304 = vunpack.c.l.b16 %v2064
        %v2305 = vunpack.c.h.b16 %v2064
        %v2306 = vunpack.c.l.b16 %v2065
        %v2307 = vunpack.c.h.b16 %v2065
        %v2308 = vunpack.c.l.b16 %v2066
        %v2309 = vunpack.c.h.b16 %v2066
        %v2310 = vunpack.c.l.b16 %v2067
        %v2311 = vunpack.c.l.b16 %v2068
        %v2312 = vunpack.c.h.b16 %v2068
        %v2313 = vunpack.c.l.b16 %v2069
        %v2314 = vunpack.c.h.b16 %v2069
        %v2315 = vunpack.c.l.b16 %v2070
        %v2316 = vunpack.c.h.b16 %v2070
        %v2317 = vunpack.c.l.b16 %v2071
        %v2318 = vunpack.c.l.b16 %v2072
        %v2319 = vunpack.c.h.b16 %v2072
        %v2320 = vunpack.c.l.b16 %v2073
        %v2321 = vunpack.c.h.b16 %v2073
        %v2322 = vunpack.c.l.b16 %v2074
        %v2323 = vunpack.c.h.b16 %v2074
        %v2324 = vunpack.c.l.b16 %v2075
        %v2325 = vpack.c.b16 %v2290, %v2283
        %v2326 = vpack.c.b16 %v2291, %v2284
        %v2327 = vpack.c.b16 %v2292, %v2285
        %v2328 = vpack.c.b16 %v2293, %v2286
        %v2329 = vpack.c.b16 %v2294, %v2287
        %v2330 = vpack.c.b16 %v2295, %v2288
        %v2331 = vpack.c.b16 %v2296, %v2289
        %v2332 = vpack.c.b16 %v2304, %v2297
        %v2333 = vpack.c.b16 %v2305, %v2298
        %v2334 = vpack.c.b16 %v2306, %v2299
        %v2335 = vpack.c.b16 %v2307, %v2300
        %v2336 = vpack.c.b16 %v2308, %v2301
        %v2337 = vpack.c.b16 %v2309, %v2302
        %v2338 = vpack.c.b16 %v2310, %v2303
        %v2339 = vpack.c.b16 %v2318, %v2311
        %v2340 = vpack.c.b16 %v2319, %v2312
        %v2341 = vpack.c.b16 %v2320, %v2313
        %v2342 = vpack.c.b16 %v2321, %v2314
        %v2343 = vpack.c.b16 %v2322, %v2315
        %v2344 = vpack.c.b16 %v2323, %v2316
        %v2345 = vpack.c.b16 %v2324, %v2317
        %vm2364 = vcmask 130048
        %v2366 = vsel %vm2364, %v2331, 0
        %v2369 = vsel %vm2364, %v2338, 0
        %v2372 = vsel %vm2364, %v2345, 0
        %2374 = vmatprep.subr.bf16.mxu0 %v2077
        %2375 = vmatpush1.bf16.msra.mxu0 %v2076
        %2376 = vmatprep.subr.bf16.mxu0 %v2080
        %2377 = vmatpush1.bf16.msra.mxu0 %v2079
        %2378 = vmatprep.subr.bf16.mxu0 %v2083
        %2379 = vmatpush1.bf16.msra.mxu0 %v2082
        %2380 = vmatprep.subr.bf16.mxu0 %v2086
        %2381 = vmatpush1.bf16.msra.mxu0 %v2085
        %2382 = vmatprep.subr.bf16.mxu0 %v2089
        %2383 = vmatpush1.bf16.msra.mxu0 %v2088
        %2384 = vmatprep.subr.bf16.mxu0 %v2092
        %2385 = vmatpush1.bf16.msra.mxu0 %v2091
        %2386 = vmatprep.subr.bf16.mxu0 %v2095
        %2387 = vmatpush1.bf16.msra.mxu0 %v2094
        %2388 = vmatprep.subr.bf16.mxu0 %v2098
        %2389 = vmatpush1.bf16.msra.mxu0 %v2097
        %2390 = vmatprep.subr.bf16.mxu0 %v2101
        %2391 = vmatpush1.bf16.msra.mxu0 %v2100
        %2392 = vmatprep.subr.bf16.mxu0 %v2104
        %2393 = vmatpush1.bf16.msra.mxu0 %v2103
        %2394 = vmatprep.subr.bf16.mxu0 %v2107
        %2395 = vmatpush1.bf16.msra.mxu0 %v2106
        %2396 = vmatprep.subr.bf16.mxu0 %v2110
        %2397 = vmatpush1.bf16.msra.mxu0 %v2109
        %2398 = vmatprep.subr.bf16.mxu0 %v2113
        %2399 = vmatpush1.bf16.msra.mxu0 %v2112
        %2400 = vmatprep.subr.bf16.mxu0 %v2116
        %2401 = vmatpush1.bf16.msra.mxu0 %v2115
        %2402 = vmatprep.subr.bf16.mxu0 %v2119
        %2403 = vmatpush1.bf16.msra.mxu0 %v2118
        %2404 = vmatprep.subr.bf16.mxu0 %v2122
        %2405 = vmatpush1.bf16.msra.mxu0 %v2121
        %2406 = vmatprep.mubr.bf16.mxu0 %v2326
        %2407 = vmatmul.mubr.bf16.gmra.mrb[0].mxu0 %v2325
        %v2408 = vpop.f32.mrb[0].mxu0
        %v2409 = vadd.f32 %v2232, %v2408
        %v2410 = vpop.f32.mrb[0].mxu0
        %v2411 = vadd.f32 %v2232, %v2410
        %v2412 = vpop.f32.mrb[0].mxu0
        %v2413 = vadd.f32 %v2237, %v2412
        %v2414 = vpop.f32.mrb[0].mxu0
        %v2415 = vadd.f32 %v2237, %v2414
        %2416 = vmatprep.mubr.bf16.mxu0 %v2333
        %2417 = vmatmul.mubr.bf16.gmra.mrb[0].mxu0 %v2332
        %v2418 = vpop.f32.mrb[0].mxu0
        %v2419 = vadd.f32 %v2242, %v2418
        %v2420 = vpop.f32.mrb[0].mxu0
        %v2421 = vadd.f32 %v2242, %v2420
        %v2422 = vpop.f32.mrb[0].mxu0
        %v2423 = vadd.f32 %v2247, %v2422
        %v2424 = vpop.f32.mrb[0].mxu0
        %v2425 = vadd.f32 %v2247, %v2424
        %2426 = vmatprep.mubr.bf16.mxu0 %v2340
        %2427 = vmatmul.mubr.bf16.gmra.mrb[0].mxu0 %v2339
        %v2428 = vpop.f32.mrb[0].mxu0
        %v2429 = vadd.f32 %v2252, %v2428
        %v2430 = vpop.f32.mrb[0].mxu0
        %v2431 = vadd.f32 %v2252, %v2430
        %v2432 = vpop.f32.mrb[0].mxu0
        %v2433 = vadd.f32 %v2257, %v2432
        %v2434 = vpop.f32.mrb[0].mxu0
        %v2435 = vadd.f32 %v2257, %v2434
        %2436 = vdwg.mxu0
        %2437 = vmatprep.subr.bf16.mxu0 %v2125
        %2438 = vmatpush1.bf16.msra.mxu0 %v2124
        %2439 = vmatprep.subr.bf16.mxu0 %v2128
        %2440 = vmatpush1.bf16.msra.mxu0 %v2127
        %2441 = vmatprep.subr.bf16.mxu0 %v2131
        %2442 = vmatpush1.bf16.msra.mxu0 %v2130
        %2443 = vmatprep.subr.bf16.mxu0 %v2134
        %2444 = vmatpush1.bf16.msra.mxu0 %v2133
        %2445 = vmatprep.subr.bf16.mxu0 %v2137
        %2446 = vmatpush1.bf16.msra.mxu0 %v2136
        %2447 = vmatprep.subr.bf16.mxu0 %v2140
        %2448 = vmatpush1.bf16.msra.mxu0 %v2139
        %2449 = vmatprep.subr.bf16.mxu0 %v2143
        %2450 = vmatpush1.bf16.msra.mxu0 %v2142
        %2451 = vmatprep.subr.bf16.mxu0 %v2146
        %2452 = vmatpush1.bf16.msra.mxu0 %v2145
        %2453 = vmatprep.subr.bf16.mxu0 %v2149
        %2454 = vmatpush1.bf16.msra.mxu0 %v2148
        %2455 = vmatprep.subr.bf16.mxu0 %v2152
        %2456 = vmatpush1.bf16.msra.mxu0 %v2151
        %2457 = vmatprep.subr.bf16.mxu0 %v2155
        %2458 = vmatpush1.bf16.msra.mxu0 %v2154
        %2459 = vmatprep.subr.bf16.mxu0 %v2158
        %2460 = vmatpush1.bf16.msra.mxu0 %v2157
        %2461 = vmatprep.subr.bf16.mxu0 %v2161
        %2462 = vmatpush1.bf16.msra.mxu0 %v2160
        %2463 = vmatprep.subr.bf16.mxu0 %v2164
        %2464 = vmatpush1.bf16.msra.mxu0 %v2163
        %2465 = vmatprep.subr.bf16.mxu0 %v2167
        %2466 = vmatpush1.bf16.msra.mxu0 %v2166
        %2467 = vmatprep.subr.bf16.mxu0 %v2170
        %2468 = vmatpush1.bf16.msra.mxu0 %v2169
        %2469 = vmatprep.mubr.bf16.mxu0 %v2328
        %2470 = vmatmul.mubr.bf16.gmra.mrb[0].mxu0 %v2327
        %v2471 = vpop.f32.mrb[0].mxu0
        %v2472 = vadd.f32 %v2409, %v2471
        %v2473 = vpop.f32.mrb[0].mxu0
        %v2474 = vadd.f32 %v2411, %v2473
        %v2475 = vpop.f32.mrb[0].mxu0
        %v2476 = vadd.f32 %v2413, %v2475
        %v2477 = vpop.f32.mrb[0].mxu0
        %v2478 = vadd.f32 %v2415, %v2477
        %2479 = vmatprep.mubr.bf16.mxu0 %v2335
        %2480 = vmatmul.mubr.bf16.gmra.mrb[0].mxu0 %v2334
        %v2481 = vpop.f32.mrb[0].mxu0
        %v2482 = vadd.f32 %v2419, %v2481
        %v2483 = vpop.f32.mrb[0].mxu0
        %v2484 = vadd.f32 %v2421, %v2483
        %v2485 = vpop.f32.mrb[0].mxu0
        %v2486 = vadd.f32 %v2423, %v2485
        %v2487 = vpop.f32.mrb[0].mxu0
        %v2488 = vadd.f32 %v2425, %v2487
        %2489 = vmatprep.mubr.bf16.mxu0 %v2342
        %2490 = vmatmul.mubr.bf16.gmra.mrb[0].mxu0 %v2341
        %v2491 = vpop.f32.mrb[0].mxu0
        %v2492 = vadd.f32 %v2429, %v2491
        %v2493 = vpop.f32.mrb[0].mxu0
        %v2494 = vadd.f32 %v2431, %v2493
        %v2495 = vpop.f32.mrb[0].mxu0
        %v2496 = vadd.f32 %v2433, %v2495
        %v2497 = vpop.f32.mrb[0].mxu0
        %v2498 = vadd.f32 %v2435, %v2497
        %2499 = vdwg.mxu0
        %2500 = vmatprep.subr.bf16.mxu0 %v2173
        %2501 = vmatpush1.bf16.msra.mxu0 %v2172
        %2502 = vmatprep.subr.bf16.mxu0 %v2176
        %2503 = vmatpush1.bf16.msra.mxu0 %v2175
        %2504 = vmatprep.subr.bf16.mxu0 %v2179
        %2505 = vmatpush1.bf16.msra.mxu0 %v2178
        %2506 = vmatprep.subr.bf16.mxu0 %v2182
        %2507 = vmatpush1.bf16.msra.mxu0 %v2181
        %2508 = vmatprep.subr.bf16.mxu0 %v2185
        %2509 = vmatpush1.bf16.msra.mxu0 %v2184
        %2510 = vmatprep.subr.bf16.mxu0 %v2188
        %2511 = vmatpush1.bf16.msra.mxu0 %v2187
        %2512 = vmatprep.subr.bf16.mxu0 %v2191
        %2513 = vmatpush1.bf16.msra.mxu0 %v2190
        %2514 = vmatprep.subr.bf16.mxu0 %v2194
        %2515 = vmatpush1.bf16.msra.mxu0 %v2193
        %2516 = vmatprep.subr.bf16.mxu0 %v2197
        %2517 = vmatpush1.bf16.msra.mxu0 %v2196
        %2518 = vmatprep.subr.bf16.mxu0 %v2200
        %2519 = vmatpush1.bf16.msra.mxu0 %v2199
        %2520 = vmatprep.subr.bf16.mxu0 %v2203
        %2521 = vmatpush1.bf16.msra.mxu0 %v2202
        %2522 = vmatprep.subr.bf16.mxu0 %v2206
        %2523 = vmatpush1.bf16.msra.mxu0 %v2205
        %2524 = vmatprep.subr.bf16.mxu0 %v2209
        %2525 = vmatpush1.bf16.msra.mxu0 %v2208
        %2526 = vmatprep.subr.bf16.mxu0 %v2212
        %2527 = vmatpush1.bf16.msra.mxu0 %v2211
        %2528 = vmatprep.subr.bf16.mxu0 %v2215
        %2529 = vmatpush1.bf16.msra.mxu0 %v2214
        %2530 = vmatprep.subr.bf16.mxu0 %v2218
        %2531 = vmatpush1.bf16.msra.mxu0 %v2217
        %2532 = vmatprep.mubr.bf16.mxu0 %v2330
        %2533 = vmatmul.mubr.bf16.gmra.mrb[0].mxu0 %v2329
        %v2534 = vpop.f32.mrb[0].mxu0
        %v2535 = vadd.f32 %v2472, %v2534
        %v2536 = vpop.f32.mrb[0].mxu0
        %v2537 = vadd.f32 %v2474, %v2536
        %v2538 = vpop.f32.mrb[0].mxu0
        %v2539 = vadd.f32 %v2476, %v2538
        %v2540 = vpop.f32.mrb[0].mxu0
        %v2541 = vadd.f32 %v2478, %v2540
        %2542 = vmatprep.mubr.bf16.mxu0 %v2337
        %2543 = vmatmul.mubr.bf16.gmra.mrb[0].mxu0 %v2336
        %v2544 = vpop.f32.mrb[0].mxu0
        %v2545 = vadd.f32 %v2482, %v2544
        %v2546 = vpop.f32.mrb[0].mxu0
        %v2547 = vadd.f32 %v2484, %v2546
        %v2548 = vpop.f32.mrb[0].mxu0
        %v2549 = vadd.f32 %v2486, %v2548
        %v2550 = vpop.f32.mrb[0].mxu0
        %v2551 = vadd.f32 %v2488, %v2550
        %2552 = vmatprep.mubr.bf16.mxu0 %v2344
        %2553 = vmatmul.mubr.bf16.gmra.mrb[0].mxu0 %v2343
        %v2554 = vpop.f32.mrb[0].mxu0
        %v2555 = vadd.f32 %v2492, %v2554
        %v2556 = vpop.f32.mrb[0].mxu0
        %v2557 = vadd.f32 %v2494, %v2556
        %v2558 = vpop.f32.mrb[0].mxu0
        %v2559 = vadd.f32 %v2496, %v2558
        %v2560 = vpop.f32.mrb[0].mxu0
        %v2561 = vadd.f32 %v2498, %v2560
        %2562 = vdwg.mxu0
        %2563 = vmatprep.subr.bf16.mxu0 %v2221
        %2564 = vmatpush1.bf16.msra.mxu0 %v2220
        %2565 = vmatprep.subr.bf16.mxu0 0
        %2566 = vmatpush1.bf16.msra.mxu0 0
        %2567 = vmatprep.subr.bf16.mxu0 0
        %2568 = vmatpush1.bf16.msra.mxu0 0
        %2569 = vmatprep.subr.bf16.mxu0 0
        %2570 = vmatpush1.bf16.msra.mxu0 0
        %2571 = vmatprep.subr.bf16.mxu0 0
        %2572 = vmatpush1.bf16.msra.mxu0 0
        %2573 = vmatprep.subr.bf16.mxu0 0
        %2574 = vmatpush1.bf16.msra.mxu0 0
        %2575 = vmatprep.subr.bf16.mxu0 0
        %2576 = vmatpush1.bf16.msra.mxu0 0
        %2577 = vmatprep.subr.bf16.mxu0 0
        %2578 = vmatpush1.bf16.msra.mxu0 0
        %2579 = vmatprep.subr.bf16.mxu0 0
        %2580 = vmatpush1.bf16.msra.mxu0 0
        %2581 = vmatprep.subr.bf16.mxu0 0
        %2582 = vmatpush1.bf16.msra.mxu0 0
        %2583 = vmatprep.subr.bf16.mxu0 0
        %2584 = vmatpush1.bf16.msra.mxu0 0
        %2585 = vmatprep.subr.bf16.mxu0 0
        %2586 = vmatpush1.bf16.msra.mxu0 0
        %2587 = vmatprep.subr.bf16.mxu0 0
        %2588 = vmatpush1.bf16.msra.mxu0 0
        %2589 = vmatprep.subr.bf16.mxu0 0
        %2590 = vmatpush1.bf16.msra.mxu0 0
        %2591 = vmatprep.subr.bf16.mxu0 0
        %2592 = vmatpush1.bf16.msra.mxu0 0
        %2593 = vmatprep.subr.bf16.mxu0 0
        %2594 = vmatpush1.bf16.msra.mxu0 0
        %2595 = vmatprep.mubr.bf16.mxu0 0
        %2596 = vmatmul.mubr.bf16.gmra.mrb[0].mxu0 %v2366
        %v2597 = vpop.f32.mrb[0].mxu0
        %v2598 = vadd.f32 %v2535, %v2597
        %v2599 = vpop.f32.mrb[0].mxu0
        %v2600 = vadd.f32 %v2537, %v2599
        %v2601 = vpop.f32.mrb[0].mxu0
        %v2602 = vadd.f32 %v2539, %v2601
        %v2603 = vpop.f32.mrb[0].mxu0
        %v2604 = vadd.f32 %v2541, %v2603
        %2605 = vmatprep.mubr.bf16.mxu0 0
        %2606 = vmatmul.mubr.bf16.gmra.mrb[0].mxu0 %v2369
        %v2607 = vpop.f32.mrb[0].mxu0
        %v2608 = vadd.f32 %v2545, %v2607
        %v2609 = vpop.f32.mrb[0].mxu0
        %v2610 = vadd.f32 %v2547, %v2609
        %v2611 = vpop.f32.mrb[0].mxu0
        %v2612 = vadd.f32 %v2549, %v2611
        %v2613 = vpop.f32.mrb[0].mxu0
        %v2614 = vadd.f32 %v2551, %v2613
        %2615 = vmatprep.mubr.bf16.mxu0 0
        %2616 = vmatmul.mubr.bf16.gmra.mrb[0].mxu0 %v2372
        %v2617 = vpop.f32.mrb[0].mxu0
        %v2618 = vadd.f32 %v2555, %v2617
        %v2619 = vpop.f32.mrb[0].mxu0
        %v2620 = vadd.f32 %v2557, %v2619
        %v2621 = vpop.f32.mrb[0].mxu0
        %v2622 = vadd.f32 %v2559, %v2621
        %v2623 = vpop.f32.mrb[0].mxu0
        %v2624 = vadd.f32 %v2561, %v2623
        %2625 = vdwg.mxu0
        %2626 = vmatprep.subr.bf16.mxu0 0
        %2627 = vmatpush1.bf16.msra.mxu0 %v2078
        %2628 = vmatprep.subr.bf16.mxu0 0
        %2629 = vmatpush1.bf16.msra.mxu0 %v2081
        %2630 = vmatprep.subr.bf16.mxu0 0
        %2631 = vmatpush1.bf16.msra.mxu0 %v2084
        %2632 = vmatprep.subr.bf16.mxu0 0
        %2633 = vmatpush1.bf16.msra.mxu0 %v2087
        %2634 = vmatprep.subr.bf16.mxu0 0
        %2635 = vmatpush1.bf16.msra.mxu0 %v2090
        %2636 = vmatprep.subr.bf16.mxu0 0
        %2637 = vmatpush1.bf16.msra.mxu0 %v2093
        %2638 = vmatprep.subr.bf16.mxu0 0
        %2639 = vmatpush1.bf16.msra.mxu0 %v2096
        %2640 = vmatprep.subr.bf16.mxu0 0
        %2641 = vmatpush1.bf16.msra.mxu0 %v2099
        %2642 = vmatprep.subr.bf16.mxu0 0
        %2643 = vmatpush1.bf16.msra.mxu0 %v2102
        %2644 = vmatprep.subr.bf16.mxu0 0
        %2645 = vmatpush1.bf16.msra.mxu0 %v2105
        %2646 = vmatprep.subr.bf16.mxu0 0
        %2647 = vmatpush1.bf16.msra.mxu0 %v2108
        %2648 = vmatprep.subr.bf16.mxu0 0
        %2649 = vmatpush1.bf16.msra.mxu0 %v2111
        %2650 = vmatprep.subr.bf16.mxu0 0
        %2651 = vmatpush1.bf16.msra.mxu0 %v2114
        %2652 = vmatprep.subr.bf16.mxu0 0
        %2653 = vmatpush1.bf16.msra.mxu0 %v2117
        %2654 = vmatprep.subr.bf16.mxu0 0
        %2655 = vmatpush1.bf16.msra.mxu0 %v2120
        %2656 = vmatprep.subr.bf16.mxu0 0
        %2657 = vmatpush1.bf16.msra.mxu0 %v2123
        %2658 = vmatprep.mubr.bf16.mxu0 %v2326
        %2659 = vmatmul.mubr.bf16.gmra.mrb[0].mxu0 %v2325
        %v2660 = vpop.f32.mrb[0].mxu0
        %v2661 = vadd.f32 %v2232, %v2660
        %v2662 = vpop.f32.mrb[0].mxu0
        %v2663 = vpop.f32.mrb[0].mxu0
        %v2664 = vadd.f32 %v2237, %v2663
        %v2665 = vpop.f32.mrb[0].mxu0
        %2666 = vmatprep.mubr.bf16.mxu0 %v2333
        %2667 = vmatmul.mubr.bf16.gmra.mrb[0].mxu0 %v2332
        %v2668 = vpop.f32.mrb[0].mxu0
        %v2669 = vadd.f32 %v2242, %v2668
        %v2670 = vpop.f32.mrb[0].mxu0
        %v2671 = vpop.f32.mrb[0].mxu0
        %v2672 = vadd.f32 %v2247, %v2671
        %v2673 = vpop.f32.mrb[0].mxu0
        %2674 = vmatprep.mubr.bf16.mxu0 %v2340
        %2675 = vmatmul.mubr.bf16.gmra.mrb[0].mxu0 %v2339
        %v2676 = vpop.f32.mrb[0].mxu0
        %v2677 = vadd.f32 %v2252, %v2676
        %v2678 = vpop.f32.mrb[0].mxu0
        %v2679 = vpop.f32.mrb[0].mxu0
        %v2680 = vadd.f32 %v2257, %v2679
        %v2681 = vpop.f32.mrb[0].mxu0
        %2682 = vdwg.mxu0
        %2683 = vmatprep.subr.bf16.mxu0 0
        %2684 = vmatpush1.bf16.msra.mxu0 %v2126
        %2685 = vmatprep.subr.bf16.mxu0 0
        %2686 = vmatpush1.bf16.msra.mxu0 %v2129
        %2687 = vmatprep.subr.bf16.mxu0 0
        %2688 = vmatpush1.bf16.msra.mxu0 %v2132
        %2689 = vmatprep.subr.bf16.mxu0 0
        %2690 = vmatpush1.bf16.msra.mxu0 %v2135
        %2691 = vmatprep.subr.bf16.mxu0 0
        %2692 = vmatpush1.bf16.msra.mxu0 %v2138
        %2693 = vmatprep.subr.bf16.mxu0 0
        %2694 = vmatpush1.bf16.msra.mxu0 %v2141
        %2695 = vmatprep.subr.bf16.mxu0 0
        %2696 = vmatpush1.bf16.msra.mxu0 %v2144
        %2697 = vmatprep.subr.bf16.mxu0 0
        %2698 = vmatpush1.bf16.msra.mxu0 %v2147
        %2699 = vmatprep.subr.bf16.mxu0 0
        %2700 = vmatpush1.bf16.msra.mxu0 %v2150
        %2701 = vmatprep.subr.bf16.mxu0 0
        %2702 = vmatpush1.bf16.msra.mxu0 %v2153
        %2703 = vmatprep.subr.bf16.mxu0 0
        %2704 = vmatpush1.bf16.msra.mxu0 %v2156
        %2705 = vmatprep.subr.bf16.mxu0 0
        %2706 = vmatpush1.bf16.msra.mxu0 %v2159
        %2707 = vmatprep.subr.bf16.mxu0 0
        %2708 = vmatpush1.bf16.msra.mxu0 %v2162
        %2709 = vmatprep.subr.bf16.mxu0 0
        %2710 = vmatpush1.bf16.msra.mxu0 %v2165
        %2711 = vmatprep.subr.bf16.mxu0 0
        %2712 = vmatpush1.bf16.msra.mxu0 %v2168
        %2713 = vmatprep.subr.bf16.mxu0 0
        %2714 = vmatpush1.bf16.msra.mxu0 %v2171
        %2715 = vmatprep.mubr.bf16.mxu0 %v2328
        %2716 = vmatmul.mubr.bf16.gmra.mrb[0].mxu0 %v2327
        %v2717 = vpop.f32.mrb[0].mxu0
        %v2718 = vadd.f32 %v2661, %v2717
        %v2719 = vpop.f32.mrb[0].mxu0
        %v2720 = vpop.f32.mrb[0].mxu0
        %v2721 = vadd.f32 %v2664, %v2720
        %v2722 = vpop.f32.mrb[0].mxu0
        %2723 = vmatprep.mubr.bf16.mxu0 %v2335
        %2724 = vmatmul.mubr.bf16.gmra.mrb[0].mxu0 %v2334
        %v2725 = vpop.f32.mrb[0].mxu0
        %v2726 = vadd.f32 %v2669, %v2725
        %v2727 = vpop.f32.mrb[0].mxu0
        %v2728 = vpop.f32.mrb[0].mxu0
        %v2729 = vadd.f32 %v2672, %v2728
        %v2730 = vpop.f32.mrb[0].mxu0
        %2731 = vmatprep.mubr.bf16.mxu0 %v2342
        %2732 = vmatmul.mubr.bf16.gmra.mrb[0].mxu0 %v2341
        %v2733 = vpop.f32.mrb[0].mxu0
        %v2734 = vadd.f32 %v2677, %v2733
        %v2735 = vpop.f32.mrb[0].mxu0
        %v2736 = vpop.f32.mrb[0].mxu0
        %v2737 = vadd.f32 %v2680, %v2736
        %v2738 = vpop.f32.mrb[0].mxu0
        %2739 = vdwg.mxu0
        %2740 = vmatprep.subr.bf16.mxu0 0
        %2741 = vmatpush1.bf16.msra.mxu0 %v2174
        %2742 = vmatprep.subr.bf16.mxu0 0
        %2743 = vmatpush1.bf16.msra.mxu0 %v2177
        %2744 = vmatprep.subr.bf16.mxu0 0
        %2745 = vmatpush1.bf16.msra.mxu0 %v2180
        %2746 = vmatprep.subr.bf16.mxu0 0
        %2747 = vmatpush1.bf16.msra.mxu0 %v2183
        %2748 = vmatprep.subr.bf16.mxu0 0
        %2749 = vmatpush1.bf16.msra.mxu0 %v2186
        %2750 = vmatprep.subr.bf16.mxu0 0
        %2751 = vmatpush1.bf16.msra.mxu0 %v2189
        %2752 = vmatprep.subr.bf16.mxu0 0
        %2753 = vmatpush1.bf16.msra.mxu0 %v2192
        %2754 = vmatprep.subr.bf16.mxu0 0
        %2755 = vmatpush1.bf16.msra.mxu0 %v2195
        %2756 = vmatprep.subr.bf16.mxu0 0
        %2757 = vmatpush1.bf16.msra.mxu0 %v2198
        %2758 = vmatprep.subr.bf16.mxu0 0
        %2759 = vmatpush1.bf16.msra.mxu0 %v2201
        %2760 = vmatprep.subr.bf16.mxu0 0
        %2761 = vmatpush1.bf16.msra.mxu0 %v2204
        %2762 = vmatprep.subr.bf16.mxu0 0
        %2763 = vmatpush1.bf16.msra.mxu0 %v2207
        %2764 = vmatprep.subr.bf16.mxu0 0
        %2765 = vmatpush1.bf16.msra.mxu0 %v2210
        %2766 = vmatprep.subr.bf16.mxu0 0
        %2767 = vmatpush1.bf16.msra.mxu0 %v2213
        %2768 = vmatprep.subr.bf16.mxu0 0
        %2769 = vmatpush1.bf16.msra.mxu0 %v2216
        %2770 = vmatprep.subr.bf16.mxu0 0
        %2771 = vmatpush1.bf16.msra.mxu0 %v2219
        %2772 = vmatprep.mubr.bf16.mxu0 %v2330
        %2773 = vmatmul.mubr.bf16.gmra.mrb[0].mxu0 %v2329
        %v2774 = vpop.f32.mrb[0].mxu0
        %v2775 = vadd.f32 %v2718, %v2774
        %v2776 = vpop.f32.mrb[0].mxu0
        %v2777 = vpop.f32.mrb[0].mxu0
        %v2778 = vadd.f32 %v2721, %v2777
        %v2779 = vpop.f32.mrb[0].mxu0
        %2780 = vmatprep.mubr.bf16.mxu0 %v2337
        %2781 = vmatmul.mubr.bf16.gmra.mrb[0].mxu0 %v2336
        %v2782 = vpop.f32.mrb[0].mxu0
        %v2783 = vadd.f32 %v2726, %v2782
        %v2784 = vpop.f32.mrb[0].mxu0
        %v2785 = vpop.f32.mrb[0].mxu0
        %v2786 = vadd.f32 %v2729, %v2785
        %v2787 = vpop.f32.mrb[0].mxu0
        %2788 = vmatprep.mubr.bf16.mxu0 %v2344
        %2789 = vmatmul.mubr.bf16.gmra.mrb[0].mxu0 %v2343
        %v2790 = vpop.f32.mrb[0].mxu0
        %v2791 = vadd.f32 %v2734, %v2790
        %v2792 = vpop.f32.mrb[0].mxu0
        %v2793 = vpop.f32.mrb[0].mxu0
        %v2794 = vadd.f32 %v2737, %v2793
        %v2795 = vpop.f32.mrb[0].mxu0
        %2796 = vdwg.mxu0
        %2797 = vmatprep.subr.bf16.mxu0 0
        %2798 = vmatpush1.bf16.msra.mxu0 %v2222
        %2799 = vmatprep.subr.bf16.mxu0 0
        %2800 = vmatpush1.bf16.msra.mxu0 0
        %2801 = vmatprep.subr.bf16.mxu0 0
        %2802 = vmatpush1.bf16.msra.mxu0 0
        %2803 = vmatprep.subr.bf16.mxu0 0
        %2804 = vmatpush1.bf16.msra.mxu0 0
        %2805 = vmatprep.subr.bf16.mxu0 0
        %2806 = vmatpush1.bf16.msra.mxu0 0
        %2807 = vmatprep.subr.bf16.mxu0 0
        %2808 = vmatpush1.bf16.msra.mxu0 0
        %2809 = vmatprep.subr.bf16.mxu0 0
        %2810 = vmatpush1.bf16.msra.mxu0 0
        %2811 = vmatprep.subr.bf16.mxu0 0
        %2812 = vmatpush1.bf16.msra.mxu0 0
        %2813 = vmatprep.subr.bf16.mxu0 0
        %2814 = vmatpush1.bf16.msra.mxu0 0
        %2815 = vmatprep.subr.bf16.mxu0 0
        %2816 = vmatpush1.bf16.msra.mxu0 0
        %2817 = vmatprep.subr.bf16.mxu0 0
        %2818 = vmatpush1.bf16.msra.mxu0 0
        %2819 = vmatprep.subr.bf16.mxu0 0
        %2820 = vmatpush1.bf16.msra.mxu0 0
        %2821 = vmatprep.subr.bf16.mxu0 0
        %2822 = vmatpush1.bf16.msra.mxu0 0
        %2823 = vmatprep.subr.bf16.mxu0 0
        %2824 = vmatpush1.bf16.msra.mxu0 0
        %2825 = vmatprep.subr.bf16.mxu0 0
        %2826 = vmatpush1.bf16.msra.mxu0 0
        %2827 = vmatprep.subr.bf16.mxu0 0
        %2828 = vmatpush1.bf16.msra.mxu0 0
        %2829 = vmatprep.mubr.bf16.mxu0 0
        %2830 = vmatmul.mubr.bf16.gmra.mrb[0].mxu0 %v2366
        %v2831 = vpop.f32.mrb[0].mxu0
        %v2832 = vadd.f32 %v2775, %v2831
        %v2833 = vpop.f32.mrb[0].mxu0
        %v2834 = vpop.f32.mrb[0].mxu0
        %v2835 = vadd.f32 %v2778, %v2834
        %v2836 = vpop.f32.mrb[0].mxu0
        %2837 = vmatprep.mubr.bf16.mxu0 0
        %2838 = vmatmul.mubr.bf16.gmra.mrb[0].mxu0 %v2369
        %v2839 = vpop.f32.mrb[0].mxu0
        %v2840 = vadd.f32 %v2783, %v2839
        %v2841 = vpop.f32.mrb[0].mxu0
        %v2842 = vpop.f32.mrb[0].mxu0
        %v2843 = vadd.f32 %v2786, %v2842
        %v2844 = vpop.f32.mrb[0].mxu0
        %2845 = vmatprep.mubr.bf16.mxu0 0
        %2846 = vmatmul.mubr.bf16.gmra.mrb[0].mxu0 %v2372
        %v2847 = vpop.f32.mrb[0].mxu0
        %v2848 = vadd.f32 %v2791, %v2847
        %v2849 = vpop.f32.mrb[0].mxu0
        %v2850 = vpop.f32.mrb[0].mxu0
        %v2851 = vadd.f32 %v2794, %v2850
        %v2852 = vpop.f32.mrb[0].mxu0
        %2853 = vdwg.mxu0
        %v2854 = vpack.c.bf16 %v2602, %v2598
        %v2855 = vpack.c.bf16 %v2604, %v2600
        %v2856 = vpack.c.bf16 %v2835, %v2832
        %v2857 = vpack.c.bf16 %v2612, %v2608
        %v2858 = vpack.c.bf16 %v2614, %v2610
        %v2859 = vpack.c.bf16 %v2843, %v2840
        %v2860 = vpack.c.bf16 %v2622, %v2618
        %v2861 = vpack.c.bf16 %v2624, %v2620
        %v2862 = vpack.c.bf16 %v2851, %v2848
        %v2872 = vunpack.c.l.b16 %v2854
        %v2873 = vunpack.c.l.b16 %v2855
        %v2874 = vunpack.c.l.b16 %v2856
        %v2875 = vunpack.c.h.b16 %v2854
        %v2876 = vunpack.c.h.b16 %v2855
        %v2877 = vunpack.c.h.b16 %v2856
        %v2878 = vunpack.c.l.b16 %v2857
        %v2879 = vunpack.c.l.b16 %v2858
        %v2880 = vunpack.c.l.b16 %v2859
        %v2881 = vunpack.c.h.b16 %v2857
        %v2882 = vunpack.c.h.b16 %v2858
        %v2883 = vunpack.c.h.b16 %v2859
        %v2884 = vunpack.c.l.b16 %v2860
        %v2885 = vunpack.c.l.b16 %v2861
        %v2886 = vunpack.c.l.b16 %v2862
        %v2887 = vunpack.c.h.b16 %v2860
        %v2888 = vunpack.c.h.b16 %v2861
        %v2889 = vunpack.c.h.b16 %v2862
        %v2890 = vpack.c.b16 %v2873, %v2872
        %v2891 = vpack.c.b16 %v2874, %v2874
        %v2892 = vpack.c.b16 %v2876, %v2875
        %v2893 = vpack.c.b16 %v2877, %v2877
        %v2894 = vpack.c.b16 %v2879, %v2878
        %v2895 = vpack.c.b16 %v2880, %v2880
        %v2896 = vpack.c.b16 %v2882, %v2881
        %v2897 = vpack.c.b16 %v2883, %v2883
        %v2898 = vpack.c.b16 %v2885, %v2884
        %v2899 = vpack.c.b16 %v2886, %v2886
        %v2900 = vpack.c.b16 %v2888, %v2887
        %v2901 = vpack.c.b16 %v2889, %v2889
        %2914 = vst [vmem:[%s203] sm:$0xff] %v2890
        %2915 = vst [vmem:[%s203 + $0x8] sm:$0xf] %v2891
        %2916 = vst [vmem:[%s203 + $0xc] sm:$0xff] %v2892
        %2917 = vst [vmem:[%s203 + $0x14] sm:$0xf] %v2893
        %2918 = vst [vmem:[%s203 + $0x18] sm:$0xff] %v2894
        %2919 = vst [vmem:[%s203 + $0x20] sm:$0xf] %v2895
        %2920 = vst [vmem:[%s203 + $0x24] sm:$0xff] %v2896
        %2921 = vst [vmem:[%s203 + $0x2c] sm:$0xf] %v2897
        %2922 = vst [vmem:[%s203 + $0x30] sm:$0xff] %v2898
        %2923 = vst [vmem:[%s203 + $0x38] sm:$0xf] %v2899
        %2924 = vst [vmem:[%s203 + $0x3c] sm:$0xff] %v2900
        %2925 = vst [vmem:[%s203 + $0x44] sm:$0xf] %v2901
        %s2926 = sand.u32 %s97, 1
        %s2927 = scalar_lea.sflag [#allocation5], %s2926
        %s2928 = sand.u32 %s97, 1
        %s2929 = smul.addr %s2928, 72
        %s2930 = scalar_lea.vmem [#allocation8], %s2929
        // Predicated region
        $region41: #{tpu_custom_call.1} parent=31 // pred_check
          %p2931 = pneg %p107
        $region42: #{tpu_custom_call.1} parent=31 // pred_check_branch
          %2933 = sbr.rel (%p2931) target = $region44
        $region43: #{tpu_custom_call.1} parent=31 // pred_region
          %s2935 = ssub.s32 1152, 1152
          %2936 = vsyncadd %s2927, %s2935
          %s2937 = smul.addr %s21, 18
          %s2938 = smul.addr %s2937, 64
          %s2939 = scalar_lea.hbm %s3, %s2938
          %s2940 = sshll.u32 %s2930, 4
          %s2941 = int_to_ptr.vmem [resolvable:$true] %s2940
          %2946 = dma.vmem_to_hbm [thread:$0]  %s2941, 1152, %s2939, %s2927, 192, 192, 12
        $region44: #{tpu_custom_call.1} parent=31 // pred_fallthru
          _
      $region32: #{tpu_custom_call.1} parent=5 // pred_fallthru
        _
      %p2947 = scmp.le.s32.totalorder 2, %s16
      // Predicated region
      $region45: #{tpu_custom_call.1} parent=5 // pred_check
        %p2948 = pneg %p2947
      $region46: #{tpu_custom_call.1} parent=5 // pred_check_branch
        %2950 = sbr.rel (%p2948) target = $region48
      $region47: #{tpu_custom_call.1} parent=5 // pred_region
        %s2951 = ssub.s32 %s16, 2
        // Predicated region
        $region49: #{tpu_custom_call.1} parent=47 // pred_check
          %p2952 = pneg %p113
        $region50: #{tpu_custom_call.1} parent=47 // pred_check_branch
          %2954 = sbr.rel (%p2952) target = $region52
        $region51: #{tpu_custom_call.1} parent=47 // pred_region
          %s2955 = sand.u32 %s98, 1
          %s2956 = scalar_lea.sflag [#allocation5], %s2955
          %s2957 = sand.u32 %s98, 1
          %s2958 = smul.addr %s2957, 72
          %s2959 = scalar_lea.vmem [#allocation8], %s2958
          %2960 = dma.done %s2956, 1152
        $region52: #{tpu_custom_call.1} parent=47 // pred_fallthru
          _
      $region48: #{tpu_custom_call.1} parent=5 // pred_fallthru
        _
    $region6: #{tpu_custom_call.1} parent=1 // loop_footer
      %s20 = sadd.s32 1, %s16
    $region7: #{tpu_custom_call.1} parent=1 // loop_footer_branch
      %15 = sbr.rel target = $region3
    $region8: #{tpu_custom_call.1} parent=1 // loop_exit
      _
    %2961 = vsyncpa [#allocation4], 1
    %s2962 = scalar_lea.sflag [#allocation4], 1
    %2963 = vsyncpa %s2962, 1
    %2964 = vsyncpa [#allocation7], 1
    %s2965 = scalar_lea.sflag [#allocation7], 1
    %2966 = vsyncpa %s2965, 1
    %2967 = vsyncpa [#allocation5], 1
    %s2968 = scalar_lea.sflag [#allocation5], 1
    %2969 = vsyncpa %s2968, 1

</llo_original>
